<compile_context>
chip_gen: v6e
topology: v6e:2x2x1
jax: 0.10.0
libtpu: 0.0.40
codegen_flags: <defaults>
</compile_context>

<pallas_src>
import numpy as np
import jax
import jax.numpy as jnp
from jax import lax
from jax.experimental import pallas as pl
from jax.experimental.pallas import tpu as pltpu

# ---- problem sizes (small, consistent with the module) ----
N, C, H, W = 2, 8, 16, 16
HW = H * W
H2, W2 = 2 * H, 2 * W
HW2 = H2 * W2
MASK_ROWS = 16            # 9 taps, padded to a full sublane tile


# --------------------------- Pallas kernel ---------------------------------
def _build_ffb_kernel(nb):
    """Builds the kernel for `nb` batch elements stacked along the lane axis."""
    L = nb * HW          # lane extent of one activation block

    def kernel(df_ref, x1_ref, mup_ref, mask_ref,
               r1c1w_ref, r1c1b_ref, r1c2w_ref, r1c2b_ref,
               attw_ref, attb_ref,
               r2c1w_ref, r2c1b_ref, r2c2w_ref, r2c2b_ref,
               outw_ref, outb_ref,
               out_ref):
        df = df_ref[...]          # (C, L)
        x1 = x1_ref[...]          # (C, L)
        masks = mask_ref[...]     # (16, L) {0,1} f32 boundary masks (rows 0..8)

        def conv3x3(x, w_ref, b_ref):
            # 3x3 'SAME' conv as ONE matmul: stack 9 lane-rolled + masked taps
            # into (9C, L) and hit it with the fused (C, 9C) weight.
            taps = []
            for t in range(9):
                di, dj = t // 3 - 1, t % 3 - 1
                s = di * W + dj
                if s == 0:
                    taps.append(x)
                else:
                    shifted = pltpu.roll(x, shift=(-s) % L, axis=1)
                    taps.append(shifted * masks[t:t + 1, :])
            xstack = jnp.concatenate(taps, axis=0)            # (9C, L)
            return jnp.dot(w_ref[...], xstack,
                           preferred_element_type=jnp.float32) + b_ref[...]

        def rcu(x, c1w, c1b, c2w, c2b):
            # ResidualConvUnit (layer_norm=False, activation=ReLU)
            out = jnp.maximum(x, 0.0)
            out = conv3x3(out, c1w, c1b)
            out = jnp.maximum(out, 0.0)
            out = conv3x3(out, c2w, c2b)
            return out + x

        # res = skip_add(df, xs[1])            (scale == 1 path)
        res = df + x1

        # att = softmax(en_atten(resConfUnit1(xs[1])), dim=channel)
        r1 = rcu(x1, r1c1w_ref, r1c1b_ref, r1c2w_ref, r1c2b_ref)
        logits = jnp.dot(attw_ref[...], r1,
                         preferred_element_type=jnp.float32) + attb_ref[...]
        m = jnp.max(logits, axis=0, keepdims=True)
        e = jnp.exp(logits - m)
        att = e * pl.reciprocal(jnp.sum(e, axis=0, keepdims=True), approx=True)

        # output = resConfUnit2(res * att) + res
        out = res * att
        r2 = rcu(out, r2c1w_ref, r2c1b_ref, r2c2w_ref, r2c2b_ref)
        fused = r2 + res                                       # (C, L)

        # out_conv (1x1) commutes with the linear bilinear upsample: apply the
        # channel mix once on the small (C, L) slab, then upsample per image
        # with one MXU matmul against the precomputed kron matrix, add bias,
        # and write a lane-dense (C, HW2) slab.
        mixed = jnp.dot(outw_ref[...], fused,
                        preferred_element_type=jnp.float32)    # (C, L)
        mup = mup_ref[...]                                     # (HW, HW2)
        outb = outb_ref[...]                                   # (C, 1)
        for b in range(nb):
            chunk = mixed[:, b * HW:(b + 1) * HW]              # (C, HW)
            up = jnp.dot(chunk, mup,
                         preferred_element_type=jnp.float32) + outb
            out_ref[:, b * HW2:(b + 1) * HW2] = up             # lane-dense store

    return kernel


# ------------------------------ wrapper -------------------------------------
def feature_fusion_block(df_nhwc, x1_nhwc, params, mupT, masks, nb):
    """df/x1: (N, H, W, C). Returns (N, H2, W2, C)."""
    grid_n = N // nb
    L_in, L_out = nb * HW, nb * HW2

    # NHWC -> channels-on-sublanes, batch*spatial-on-lanes: (C, N*HW)
    def to_cl(x):
        return jnp.transpose(x.reshape(N, HW, C), (2, 0, 1)).reshape(C, N * HW)

    df_f, x1_f = to_cl(df_nhwc), to_cl(x1_nhwc)

    # conv3x3 weights (9, Cin, Cout) -> fused (Cout, 9*Cin); biases -> (C, 1);
    # 1x1 weights (Cin, Cout) -> (Cout, Cin) so y = W @ x.
    def wstack(w):
        return jnp.transpose(w, (2, 0, 1)).reshape(C, 9 * C)

    def cvec(b):
        return b.reshape(C, 1)

    args = (df_f, x1_f, mupT, masks,
            wstack(params["r1c1w"]), cvec(params["r1c1b"]),
            wstack(params["r1c2w"]), cvec(params["r1c2b"]),
            params["attw"].T, cvec(params["attb"]),
            wstack(params["r2c1w"]), cvec(params["r2c1b"]),
            wstack(params["r2c2w"]), cvec(params["r2c2b"]),
            params["outw"].T, cvec(params["outb"]))

    batched = lambda i: (0, i)      # step through the lane-stacked batch
    const2 = lambda i: (0, 0)       # weights / masks / upsample matrix: fetched once

    in_specs = [
        pl.BlockSpec((C, L_in), batched),          # df
        pl.BlockSpec((C, L_in), batched),          # x1
        pl.BlockSpec((HW, HW2), const2),           # upsample matrix (kron)^T
        pl.BlockSpec((MASK_ROWS, L_in), const2),   # precomputed boundary masks
        pl.BlockSpec((C, 9 * C), const2), pl.BlockSpec((C, 1), const2),  # rcu1.conv1
        pl.BlockSpec((C, 9 * C), const2), pl.BlockSpec((C, 1), const2),  # rcu1.conv2
        pl.BlockSpec((C, C), const2),     pl.BlockSpec((C, 1), const2),  # en_atten
        pl.BlockSpec((C, 9 * C), const2), pl.BlockSpec((C, 1), const2),  # rcu2.conv1
        pl.BlockSpec((C, 9 * C), const2), pl.BlockSpec((C, 1), const2),  # rcu2.conv2
        pl.BlockSpec((C, C), const2),     pl.BlockSpec((C, 1), const2),  # out_conv
    ]
    out_spec = pl.BlockSpec((C, L_out), batched)

    fn = pl.pallas_call(
        _build_ffb_kernel(nb),
        out_shape=jax.ShapeDtypeStruct((C, N * HW2), jnp.float32),
        grid_spec=pltpu.PrefetchScalarGridSpec(
            num_scalar_prefetch=0,
            grid=(grid_n,),
            in_specs=in_specs,
            out_specs=out_spec),
        compiler_params=pltpu.CompilerParams(
            dimension_semantics=("parallel",)),
    )
    out_cl = fn(*args)                                        # (C, N*HW2)
    return jnp.transpose(out_cl.reshape(C, N, H2, W2), (1, 2, 3, 0))


def pick_batch_per_step():
    """v7x has 2 TensorCores: keep grid=(N,) parallel (one image per core).
    Single-TC chips (v5e/v6e): fuse the batch into one grid step."""
    try:
        kind = jax.devices()[0].device_kind.lower()
    except Exception:
        return N
    if "v7" in kind or "7x" in kind:
        return 1
    return N


# --------------------- glue: masks, upsample matrices, params ----------------
def build_boundary_masks(nb):
    """{0,1} f32 masks for the 9 conv taps, laid out (16, nb*HW) lane-wise."""
    L = nb * HW
    q = np.arange(L) % HW
    row, col = q // W, q % W
    m = np.zeros((MASK_ROWS, L), dtype=np.float32)
    for t in range(9):
        di, dj = t // 3 - 1, t % 3 - 1
        valid = ((row + di >= 0) & (row + di < H) &
                 (col + dj >= 0) & (col + dj < W))
        m[t] = valid.astype(np.float32)
    return jnp.asarray(m)


def interp_matrix_align_corners(n_in, n_out):
    o = np.arange(n_out, dtype=np.float64)
    src = o * (n_in - 1) / (n_out - 1) if n_out > 1 else np.zeros_like(o)
    i0 = np.clip(np.floor(src).astype(np.int64), 0, max(n_in - 2, 0))
    frac = src - i0
    A = np.zeros((n_out, n_in), dtype=np.float32)
    A[np.arange(n_out), i0] += (1.0 - frac)
    A[np.arange(n_out), np.minimum(i0 + 1, n_in - 1)] += frac
    return jnp.asarray(A)


def make_params(key):
    ks = jax.random.split(key, 12)

    def w(k, shape, scale=0.1):
        return jax.random.normal(k, shape, jnp.float32) * scale
    # conv3x3 weights stored as (tap, Cin, Cout); 1x1 weights as (Cin, Cout)
    return {
        "r1c1w": w(ks[0], (9, C, C)), "r1c1b": w(ks[1], (1, C)),
        "r1c2w": w(ks[2], (9, C, C)), "r1c2b": w(ks[3], (1, C)),
        "attw":  w(ks[4], (C, C)),    "attb":  w(ks[5], (1, C)),
        "r2c1w": w(ks[6], (9, C, C)), "r2c1b": w(ks[7], (1, C)),
        "r2c2w": w(ks[8], (9, C, C)), "r2c2b": w(ks[9], (1, C)),
        "outw":  w(ks[10], (C, C)),   "outb":  w(ks[11], (1, C)),
    }


# --------------------------- pure-JAX reference ------------------------------
def reference(df, x1, p, A_h, A_w):
    def conv3x3_ref(x, wt, b):
        w_hwio = wt.reshape(3, 3, C, C)
        y = lax.conv_general_dilated(x, w_hwio, (1, 1), 'SAME',
                                     dimension_numbers=('NHWC', 'HWIO', 'NHWC'))
        return y + b.reshape(1, 1, 1, C)

    def rcu_ref(x, c1w, c1b, c2w, c2b):
        out = jax.nn.relu(x)
        out = conv3x3_ref(out, c1w, c1b)
        out = jax.nn.relu(out)
        out = conv3x3_ref(out, c2w, c2b)
        return out + x

    res = df + x1
    r1 = rcu_ref(x1, p["r1c1w"], p["r1c1b"], p["r1c2w"], p["r1c2b"])
    logits = jnp.einsum('nhwi,io->nhwo', r1, p["attw"]) + p["attb"].reshape(1, 1, 1, C)
    att = jax.nn.softmax(logits, axis=-1)
    out = res * att
    r2 = rcu_ref(out, p["r2c1w"], p["r2c1b"], p["r2c2w"], p["r2c2b"])
    fused = r2 + res
    up = jnp.einsum('oh,nhwc->nowc', A_h, fused)
    up = jnp.einsum('pw,nowc->nopc', A_w, up)
    return jnp.einsum('nopc,cd->nopd', up, p["outw"]) + p["outb"].reshape(1, 1, 1, C)


# --------------------------------- main --------------------------------------
if __name__ == "__main__":
    key = jax.random.PRNGKey(0)
    k_df, k_x1, k_p = jax.random.split(key, 3)

    # NHWC inputs corresponding to an NCHW (2, 8, 16, 16) PyTorch tensor
    df = jax.random.normal(k_df, (N, H, W, C), jnp.float32)
    x1 = jax.random.normal(k_x1, (N, H, W, C), jnp.float32)
    params = make_params(k_p)

    A_h = interp_matrix_align_corners(H, H2)
    A_w = interp_matrix_align_corners(W, W2)
    M_upT = jnp.kron(A_h, A_w).T                               # (H*W, H2*W2)

    nb = pick_batch_per_step()
    masks = build_boundary_masks(nb)

    out = feature_fusion_block(df, x1, params, M_upT, masks, nb)
    out = jax.block_until_ready(out)

    ref = jax.block_until_ready(reference(df, x1, params, A_h, A_w))
    assert out.shape == (N, H2, W2, C)
    np.testing.assert_allclose(np.asarray(out), np.asarray(ref),
                               rtol=2e-3, atol=2e-3)
    print("KERNEL_OK")
</pallas_src>

<mosaic_0001>
module attributes {stable_mosaic.version = 11 : i64} {
  func.func @kernel(%arg0: i32, %arg1: memref<8x512xf32, #tpu.memory_space<vmem>>, %arg2: memref<8x512xf32, #tpu.memory_space<vmem>>, %arg3: memref<256x1024xf32, #tpu.memory_space<vmem>>, %arg4: memref<16x512xf32, #tpu.memory_space<vmem>>, %arg5: memref<8x72xf32, #tpu.memory_space<vmem>>, %arg6: memref<8x1xf32, #tpu.memory_space<vmem>>, %arg7: memref<8x72xf32, #tpu.memory_space<vmem>>, %arg8: memref<8x1xf32, #tpu.memory_space<vmem>>, %arg9: memref<8x8xf32, #tpu.memory_space<vmem>>, %arg10: memref<8x1xf32, #tpu.memory_space<vmem>>, %arg11: memref<8x72xf32, #tpu.memory_space<vmem>>, %arg12: memref<8x1xf32, #tpu.memory_space<vmem>>, %arg13: memref<8x72xf32, #tpu.memory_space<vmem>>, %arg14: memref<8x1xf32, #tpu.memory_space<vmem>>, %arg15: memref<8x8xf32, #tpu.memory_space<vmem>>, %arg16: memref<8x1xf32, #tpu.memory_space<vmem>>, %arg17: memref<8x2048xf32, #tpu.memory_space<vmem>>) attributes {dimension_semantics = [#tpu.dimension_semantics<parallel>], iteration_bounds = array<i64: 1>, scalar_prefetch = 0 : i64, scratch_operands = 0 : i64, tpu.core_type = #tpu.core_type<tc>, window_params = [{transform_indices = @transform_0, window_bounds = array<i64: 8, 512>}, {transform_indices = @transform_1, window_bounds = array<i64: 8, 512>}, {pipeline_mode = #tpu.pipeline_mode<synchronous>, transform_indices = @transform_2, window_bounds = array<i64: 256, 1024>}, {pipeline_mode = #tpu.pipeline_mode<synchronous>, transform_indices = @transform_3, window_bounds = array<i64: 16, 512>}, {pipeline_mode = #tpu.pipeline_mode<synchronous>, transform_indices = @transform_4, window_bounds = array<i64: 8, 72>}, {pipeline_mode = #tpu.pipeline_mode<synchronous>, transform_indices = @transform_5, window_bounds = array<i64: 8, 1>}, {pipeline_mode = #tpu.pipeline_mode<synchronous>, transform_indices = @transform_6, window_bounds = array<i64: 8, 72>}, {pipeline_mode = #tpu.pipeline_mode<synchronous>, transform_indices = @transform_7, window_bounds = array<i64: 8, 1>}, {pipeline_mode = #tpu.pipeline_mode<synchronous>, transform_indices = @transform_8, window_bounds = array<i64: 8, 8>}, {pipeline_mode = #tpu.pipeline_mode<synchronous>, transform_indices = @transform_9, window_bounds = array<i64: 8, 1>}, {pipeline_mode = #tpu.pipeline_mode<synchronous>, transform_indices = @transform_10, window_bounds = array<i64: 8, 72>}, {pipeline_mode = #tpu.pipeline_mode<synchronous>, transform_indices = @transform_11, window_bounds = array<i64: 8, 1>}, {pipeline_mode = #tpu.pipeline_mode<synchronous>, transform_indices = @transform_12, window_bounds = array<i64: 8, 72>}, {pipeline_mode = #tpu.pipeline_mode<synchronous>, transform_indices = @transform_13, window_bounds = array<i64: 8, 1>}, {pipeline_mode = #tpu.pipeline_mode<synchronous>, transform_indices = @transform_14, window_bounds = array<i64: 8, 8>}, {pipeline_mode = #tpu.pipeline_mode<synchronous>, transform_indices = @transform_15, window_bounds = array<i64: 8, 1>}, {transform_indices = @transform_16, window_bounds = array<i64: 8, 2048>}]} {
    %c0 = arith.constant 0 : index
    %c0_0 = arith.constant 0 : index
    %0 = vector.load %arg1[%c0, %c0_0] : memref<8x512xf32, #tpu.memory_space<vmem>>, vector<8x512xf32>
    %c0_1 = arith.constant 0 : index
    %c0_2 = arith.constant 0 : index
    %1 = vector.load %arg2[%c0_1, %c0_2] : memref<8x512xf32, #tpu.memory_space<vmem>>, vector<8x512xf32>
    %c0_3 = arith.constant 0 : index
    %c0_4 = arith.constant 0 : index
    %2 = vector.load %arg4[%c0_3, %c0_4] : memref<16x512xf32, #tpu.memory_space<vmem>>, vector<16x512xf32>
    %3 = arith.addf %0, %1 : vector<8x512xf32>
    %cst = arith.constant 0.000000e+00 : f32
    %4 = vector.broadcast %cst : f32 to vector<8x512xf32>
    %5 = arith.maximumf %1, %4 : vector<8x512xf32>
    %c17_i32 = arith.constant 17 : i32
    %6 = tpu.dynamic_rotate %5 by %c17_i32 dim 1 : vector<8x512xf32>, i32 -> vector<8x512xf32>
    %7 = vector.extract_strided_slice %2 {offsets = [0, 0], sizes = [1, 512], strides = [1, 1]} : vector<16x512xf32> to vector<1x512xf32>
    %8 = vector.broadcast %7 : vector<1x512xf32> to vector<8x512xf32>
    %9 = arith.mulf %6, %8 : vector<8x512xf32>
    %c16_i32 = arith.constant 16 : i32
    %10 = tpu.dynamic_rotate %5 by %c16_i32 dim 1 : vector<8x512xf32>, i32 -> vector<8x512xf32>
    %11 = vector.extract_strided_slice %2 {offsets = [1, 0], sizes = [1, 512], strides = [1, 1]} : vector<16x512xf32> to vector<1x512xf32>
    %12 = vector.broadcast %11 : vector<1x512xf32> to vector<8x512xf32>
    %13 = arith.mulf %10, %12 : vector<8x512xf32>
    %c15_i32 = arith.constant 15 : i32
    %14 = tpu.dynamic_rotate %5 by %c15_i32 dim 1 : vector<8x512xf32>, i32 -> vector<8x512xf32>
    %15 = vector.extract_strided_slice %2 {offsets = [2, 0], sizes = [1, 512], strides = [1, 1]} : vector<16x512xf32> to vector<1x512xf32>
    %16 = vector.broadcast %15 : vector<1x512xf32> to vector<8x512xf32>
    %17 = arith.mulf %14, %16 : vector<8x512xf32>
    %c1_i32 = arith.constant 1 : i32
    %18 = tpu.dynamic_rotate %5 by %c1_i32 dim 1 : vector<8x512xf32>, i32 -> vector<8x512xf32>
    %19 = vector.extract_strided_slice %2 {offsets = [3, 0], sizes = [1, 512], strides = [1, 1]} : vector<16x512xf32> to vector<1x512xf32>
    %20 = vector.broadcast %19 : vector<1x512xf32> to vector<8x512xf32>
    %21 = arith.mulf %18, %20 : vector<8x512xf32>
    %c511_i32 = arith.constant 511 : i32
    %22 = tpu.dynamic_rotate %5 by %c511_i32 dim 1 : vector<8x512xf32>, i32 -> vector<8x512xf32>
    %23 = vector.extract_strided_slice %2 {offsets = [5, 0], sizes = [1, 512], strides = [1, 1]} : vector<16x512xf32> to vector<1x512xf32>
    %24 = vector.broadcast %23 : vector<1x512xf32> to vector<8x512xf32>
    %25 = arith.mulf %22, %24 : vector<8x512xf32>
    %c497_i32 = arith.constant 497 : i32
    %26 = tpu.dynamic_rotate %5 by %c497_i32 dim 1 : vector<8x512xf32>, i32 -> vector<8x512xf32>
    %27 = vector.extract_strided_slice %2 {offsets = [6, 0], sizes = [1, 512], strides = [1, 1]} : vector<16x512xf32> to vector<1x512xf32>
    %28 = vector.broadcast %27 : vector<1x512xf32> to vector<8x512xf32>
    %29 = arith.mulf %26, %28 : vector<8x512xf32>
    %c496_i32 = arith.constant 496 : i32
    %30 = tpu.dynamic_rotate %5 by %c496_i32 dim 1 : vector<8x512xf32>, i32 -> vector<8x512xf32>
    %31 = vector.extract_strided_slice %2 {offsets = [7, 0], sizes = [1, 512], strides = [1, 1]} : vector<16x512xf32> to vector<1x512xf32>
    %32 = vector.broadcast %31 : vector<1x512xf32> to vector<8x512xf32>
    %33 = arith.mulf %30, %32 : vector<8x512xf32>
    %c495_i32 = arith.constant 495 : i32
    %34 = tpu.dynamic_rotate %5 by %c495_i32 dim 1 : vector<8x512xf32>, i32 -> vector<8x512xf32>
    %35 = vector.extract_strided_slice %2 {offsets = [8, 0], sizes = [1, 512], strides = [1, 1]} : vector<16x512xf32> to vector<1x512xf32>
    %36 = vector.broadcast %35 : vector<1x512xf32> to vector<8x512xf32>
    %37 = arith.mulf %34, %36 : vector<8x512xf32>
    %38 = tpu.concatenate %9, %13, %17, %21, %5, %25, %29, %33, %37 in 0 : vector<8x512xf32>, vector<8x512xf32>, vector<8x512xf32>, vector<8x512xf32>, vector<8x512xf32>, vector<8x512xf32>, vector<8x512xf32>, vector<8x512xf32>, vector<8x512xf32> -> vector<72x512xf32>
    %c0_5 = arith.constant 0 : index
    %c0_6 = arith.constant 0 : index
    %39 = vector.load %arg5[%c0_5, %c0_6] : memref<8x72xf32, #tpu.memory_space<vmem>>, vector<8x72xf32>
    %cst_7 = arith.constant dense<0.000000e+00> : vector<8x512xf32>
    %40 = tpu.matmul %39, %38, %cst_7 {dimension_numbers = #tpu.dot_dimension_numbers<[1], [0], [0], [1], [0, 0, 1, 1], [], []>} : vector<8x72xf32>, vector<72x512xf32>, vector<8x512xf32> -> vector<8x512xf32>
    %c0_8 = arith.constant 0 : index
    %c0_9 = arith.constant 0 : index
    %41 = vector.load %arg6[%c0_8, %c0_9] : memref<8x1xf32, #tpu.memory_space<vmem>>, vector<8x1xf32>
    %42 = vector.broadcast %41 : vector<8x1xf32> to vector<8x512xf32>
    %43 = arith.addf %40, %42 : vector<8x512xf32>
    %cst_10 = arith.constant 0.000000e+00 : f32
    %44 = vector.broadcast %cst_10 : f32 to vector<8x512xf32>
    %45 = arith.maximumf %43, %44 : vector<8x512xf32>
    %c17_i32_11 = arith.constant 17 : i32
    %46 = tpu.dynamic_rotate %45 by %c17_i32_11 dim 1 : vector<8x512xf32>, i32 -> vector<8x512xf32>
    %47 = vector.extract_strided_slice %2 {offsets = [0, 0], sizes = [1, 512], strides = [1, 1]} : vector<16x512xf32> to vector<1x512xf32>
    %48 = vector.broadcast %47 : vector<1x512xf32> to vector<8x512xf32>
    %49 = arith.mulf %46, %48 : vector<8x512xf32>
    %c16_i32_12 = arith.constant 16 : i32
    %50 = tpu.dynamic_rotate %45 by %c16_i32_12 dim 1 : vector<8x512xf32>, i32 -> vector<8x512xf32>
    %51 = vector.extract_strided_slice %2 {offsets = [1, 0], sizes = [1, 512], strides = [1, 1]} : vector<16x512xf32> to vector<1x512xf32>
    %52 = vector.broadcast %51 : vector<1x512xf32> to vector<8x512xf32>
    %53 = arith.mulf %50, %52 : vector<8x512xf32>
    %c15_i32_13 = arith.constant 15 : i32
    %54 = tpu.dynamic_rotate %45 by %c15_i32_13 dim 1 : vector<8x512xf32>, i32 -> vector<8x512xf32>
    %55 = vector.extract_strided_slice %2 {offsets = [2, 0], sizes = [1, 512], strides = [1, 1]} : vector<16x512xf32> to vector<1x512xf32>
    %56 = vector.broadcast %55 : vector<1x512xf32> to vector<8x512xf32>
    %57 = arith.mulf %54, %56 : vector<8x512xf32>
    %c1_i32_14 = arith.constant 1 : i32
    %58 = tpu.dynamic_rotate %45 by %c1_i32_14 dim 1 : vector<8x512xf32>, i32 -> vector<8x512xf32>
    %59 = vector.extract_strided_slice %2 {offsets = [3, 0], sizes = [1, 512], strides = [1, 1]} : vector<16x512xf32> to vector<1x512xf32>
    %60 = vector.broadcast %59 : vector<1x512xf32> to vector<8x512xf32>
    %61 = arith.mulf %58, %60 : vector<8x512xf32>
    %c511_i32_15 = arith.constant 511 : i32
    %62 = tpu.dynamic_rotate %45 by %c511_i32_15 dim 1 : vector<8x512xf32>, i32 -> vector<8x512xf32>
    %63 = vector.extract_strided_slice %2 {offsets = [5, 0], sizes = [1, 512], strides = [1, 1]} : vector<16x512xf32> to vector<1x512xf32>
    %64 = vector.broadcast %63 : vector<1x512xf32> to vector<8x512xf32>
    %65 = arith.mulf %62, %64 : vector<8x512xf32>
    %c497_i32_16 = arith.constant 497 : i32
    %66 = tpu.dynamic_rotate %45 by %c497_i32_16 dim 1 : vector<8x512xf32>, i32 -> vector<8x512xf32>
    %67 = vector.extract_strided_slice %2 {offsets = [6, 0], sizes = [1, 512], strides = [1, 1]} : vector<16x512xf32> to vector<1x512xf32>
    %68 = vector.broadcast %67 : vector<1x512xf32> to vector<8x512xf32>
    %69 = arith.mulf %66, %68 : vector<8x512xf32>
    %c496_i32_17 = arith.constant 496 : i32
    %70 = tpu.dynamic_rotate %45 by %c496_i32_17 dim 1 : vector<8x512xf32>, i32 -> vector<8x512xf32>
    %71 = vector.extract_strided_slice %2 {offsets = [7, 0], sizes = [1, 512], strides = [1, 1]} : vector<16x512xf32> to vector<1x512xf32>
    %72 = vector.broadcast %71 : vector<1x512xf32> to vector<8x512xf32>
    %73 = arith.mulf %70, %72 : vector<8x512xf32>
    %c495_i32_18 = arith.constant 495 : i32
    %74 = tpu.dynamic_rotate %45 by %c495_i32_18 dim 1 : vector<8x512xf32>, i32 -> vector<8x512xf32>
    %75 = vector.extract_strided_slice %2 {offsets = [8, 0], sizes = [1, 512], strides = [1, 1]} : vector<16x512xf32> to vector<1x512xf32>
    %76 = vector.broadcast %75 : vector<1x512xf32> to vector<8x512xf32>
    %77 = arith.mulf %74, %76 : vector<8x512xf32>
    %78 = tpu.concatenate %49, %53, %57, %61, %45, %65, %69, %73, %77 in 0 : vector<8x512xf32>, vector<8x512xf32>, vector<8x512xf32>, vector<8x512xf32>, vector<8x512xf32>, vector<8x512xf32>, vector<8x512xf32>, vector<8x512xf32>, vector<8x512xf32> -> vector<72x512xf32>
    %c0_19 = arith.constant 0 : index
    %c0_20 = arith.constant 0 : index
    %79 = vector.load %arg7[%c0_19, %c0_20] : memref<8x72xf32, #tpu.memory_space<vmem>>, vector<8x72xf32>
    %cst_21 = arith.constant dense<0.000000e+00> : vector<8x512xf32>
    %80 = tpu.matmul %79, %78, %cst_21 {dimension_numbers = #tpu.dot_dimension_numbers<[1], [0], [0], [1], [0, 0, 1, 1], [], []>} : vector<8x72xf32>, vector<72x512xf32>, vector<8x512xf32> -> vector<8x512xf32>
    %c0_22 = arith.constant 0 : index
    %c0_23 = arith.constant 0 : index
    %81 = vector.load %arg8[%c0_22, %c0_23] : memref<8x1xf32, #tpu.memory_space<vmem>>, vector<8x1xf32>
    %82 = vector.broadcast %81 : vector<8x1xf32> to vector<8x512xf32>
    %83 = arith.addf %80, %82 : vector<8x512xf32>
    %84 = arith.addf %83, %1 : vector<8x512xf32>
    %c0_24 = arith.constant 0 : index
    %c0_25 = arith.constant 0 : index
    %85 = vector.load %arg9[%c0_24, %c0_25] : memref<8x8xf32, #tpu.memory_space<vmem>>, vector<8x8xf32>
    %cst_26 = arith.constant dense<0.000000e+00> : vector<8x512xf32>
    %86 = tpu.matmul %85, %84, %cst_26 {dimension_numbers = #tpu.dot_dimension_numbers<[1], [0], [0], [1], [0, 0, 1, 1], [], []>} : vector<8x8xf32>, vector<8x512xf32>, vector<8x512xf32> -> vector<8x512xf32>
    %c0_27 = arith.constant 0 : index
    %c0_28 = arith.constant 0 : index
    %87 = vector.load %arg10[%c0_27, %c0_28] : memref<8x1xf32, #tpu.memory_space<vmem>>, vector<8x1xf32>
    %88 = vector.broadcast %87 : vector<8x1xf32> to vector<8x512xf32>
    %89 = arith.addf %86, %88 : vector<8x512xf32>
    %cst_29 = arith.constant dense<0xFF800000> : vector<512xf32>
    %90 = vector.multi_reduction <maximumf>, %89, %cst_29 [0] : vector<8x512xf32> to vector<512xf32>
    %91 = vector.shape_cast %90 : vector<512xf32> to vector<1x512xf32>
    %92 = vector.broadcast %91 : vector<1x512xf32> to vector<8x512xf32>
    %93 = arith.subf %89, %92 : vector<8x512xf32>
    %94 = math.exp %93 : vector<8x512xf32>
    %cst_30 = arith.constant dense<0.000000e+00> : vector<512xf32>
    %95 = vector.multi_reduction <add>, %94, %cst_30 [0] : vector<8x512xf32> to vector<512xf32>
    %96 = vector.shape_cast %95 : vector<512xf32> to vector<1x512xf32>
    %97 = tpu.reciprocal %96 {approx = true} : vector<1x512xf32> -> vector<1x512xf32>
    %98 = vector.broadcast %97 : vector<1x512xf32> to vector<8x512xf32>
    %99 = arith.mulf %94, %98 : vector<8x512xf32>
    %100 = arith.mulf %3, %99 : vector<8x512xf32>
    %cst_31 = arith.constant 0.000000e+00 : f32
    %101 = vector.broadcast %cst_31 : f32 to vector<8x512xf32>
    %102 = arith.maximumf %100, %101 : vector<8x512xf32>
    %c17_i32_32 = arith.constant 17 : i32
    %103 = tpu.dynamic_rotate %102 by %c17_i32_32 dim 1 : vector<8x512xf32>, i32 -> vector<8x512xf32>
    %104 = vector.extract_strided_slice %2 {offsets = [0, 0], sizes = [1, 512], strides = [1, 1]} : vector<16x512xf32> to vector<1x512xf32>
    %105 = vector.broadcast %104 : vector<1x512xf32> to vector<8x512xf32>
    %106 = arith.mulf %103, %105 : vector<8x512xf32>
    %c16_i32_33 = arith.constant 16 : i32
    %107 = tpu.dynamic_rotate %102 by %c16_i32_33 dim 1 : vector<8x512xf32>, i32 -> vector<8x512xf32>
    %108 = vector.extract_strided_slice %2 {offsets = [1, 0], sizes = [1, 512], strides = [1, 1]} : vector<16x512xf32> to vector<1x512xf32>
    %109 = vector.broadcast %108 : vector<1x512xf32> to vector<8x512xf32>
    %110 = arith.mulf %107, %109 : vector<8x512xf32>
    %c15_i32_34 = arith.constant 15 : i32
    %111 = tpu.dynamic_rotate %102 by %c15_i32_34 dim 1 : vector<8x512xf32>, i32 -> vector<8x512xf32>
    %112 = vector.extract_strided_slice %2 {offsets = [2, 0], sizes = [1, 512], strides = [1, 1]} : vector<16x512xf32> to vector<1x512xf32>
    %113 = vector.broadcast %112 : vector<1x512xf32> to vector<8x512xf32>
    %114 = arith.mulf %111, %113 : vector<8x512xf32>
    %c1_i32_35 = arith.constant 1 : i32
    %115 = tpu.dynamic_rotate %102 by %c1_i32_35 dim 1 : vector<8x512xf32>, i32 -> vector<8x512xf32>
    %116 = vector.extract_strided_slice %2 {offsets = [3, 0], sizes = [1, 512], strides = [1, 1]} : vector<16x512xf32> to vector<1x512xf32>
    %117 = vector.broadcast %116 : vector<1x512xf32> to vector<8x512xf32>
    %118 = arith.mulf %115, %117 : vector<8x512xf32>
    %c511_i32_36 = arith.constant 511 : i32
    %119 = tpu.dynamic_rotate %102 by %c511_i32_36 dim 1 : vector<8x512xf32>, i32 -> vector<8x512xf32>
    %120 = vector.extract_strided_slice %2 {offsets = [5, 0], sizes = [1, 512], strides = [1, 1]} : vector<16x512xf32> to vector<1x512xf32>
    %121 = vector.broadcast %120 : vector<1x512xf32> to vector<8x512xf32>
    %122 = arith.mulf %119, %121 : vector<8x512xf32>
    %c497_i32_37 = arith.constant 497 : i32
    %123 = tpu.dynamic_rotate %102 by %c497_i32_37 dim 1 : vector<8x512xf32>, i32 -> vector<8x512xf32>
    %124 = vector.extract_strided_slice %2 {offsets = [6, 0], sizes = [1, 512], strides = [1, 1]} : vector<16x512xf32> to vector<1x512xf32>
    %125 = vector.broadcast %124 : vector<1x512xf32> to vector<8x512xf32>
    %126 = arith.mulf %123, %125 : vector<8x512xf32>
    %c496_i32_38 = arith.constant 496 : i32
    %127 = tpu.dynamic_rotate %102 by %c496_i32_38 dim 1 : vector<8x512xf32>, i32 -> vector<8x512xf32>
    %128 = vector.extract_strided_slice %2 {offsets = [7, 0], sizes = [1, 512], strides = [1, 1]} : vector<16x512xf32> to vector<1x512xf32>
    %129 = vector.broadcast %128 : vector<1x512xf32> to vector<8x512xf32>
    %130 = arith.mulf %127, %129 : vector<8x512xf32>
    %c495_i32_39 = arith.constant 495 : i32
    %131 = tpu.dynamic_rotate %102 by %c495_i32_39 dim 1 : vector<8x512xf32>, i32 -> vector<8x512xf32>
    %132 = vector.extract_strided_slice %2 {offsets = [8, 0], sizes = [1, 512], strides = [1, 1]} : vector<16x512xf32> to vector<1x512xf32>
    %133 = vector.broadcast %132 : vector<1x512xf32> to vector<8x512xf32>
    %134 = arith.mulf %131, %133 : vector<8x512xf32>
    %135 = tpu.concatenate %106, %110, %114, %118, %102, %122, %126, %130, %134 in 0 : vector<8x512xf32>, vector<8x512xf32>, vector<8x512xf32>, vector<8x512xf32>, vector<8x512xf32>, vector<8x512xf32>, vector<8x512xf32>, vector<8x512xf32>, vector<8x512xf32> -> vector<72x512xf32>
    %c0_40 = arith.constant 0 : index
    %c0_41 = arith.constant 0 : index
    %136 = vector.load %arg11[%c0_40, %c0_41] : memref<8x72xf32, #tpu.memory_space<vmem>>, vector<8x72xf32>
    %cst_42 = arith.constant dense<0.000000e+00> : vector<8x512xf32>
    %137 = tpu.matmul %136, %135, %cst_42 {dimension_numbers = #tpu.dot_dimension_numbers<[1], [0], [0], [1], [0, 0, 1, 1], [], []>} : vector<8x72xf32>, vector<72x512xf32>, vector<8x512xf32> -> vector<8x512xf32>
    %c0_43 = arith.constant 0 : index
    %c0_44 = arith.constant 0 : index
    %138 = vector.load %arg12[%c0_43, %c0_44] : memref<8x1xf32, #tpu.memory_space<vmem>>, vector<8x1xf32>
    %139 = vector.broadcast %138 : vector<8x1xf32> to vector<8x512xf32>
    %140 = arith.addf %137, %139 : vector<8x512xf32>
    %cst_45 = arith.constant 0.000000e+00 : f32
    %141 = vector.broadcast %cst_45 : f32 to vector<8x512xf32>
    %142 = arith.maximumf %140, %141 : vector<8x512xf32>
    %c17_i32_46 = arith.constant 17 : i32
    %143 = tpu.dynamic_rotate %142 by %c17_i32_46 dim 1 : vector<8x512xf32>, i32 -> vector<8x512xf32>
    %144 = vector.extract_strided_slice %2 {offsets = [0, 0], sizes = [1, 512], strides = [1, 1]} : vector<16x512xf32> to vector<1x512xf32>
    %145 = vector.broadcast %144 : vector<1x512xf32> to vector<8x512xf32>
    %146 = arith.mulf %143, %145 : vector<8x512xf32>
    %c16_i32_47 = arith.constant 16 : i32
    %147 = tpu.dynamic_rotate %142 by %c16_i32_47 dim 1 : vector<8x512xf32>, i32 -> vector<8x512xf32>
    %148 = vector.extract_strided_slice %2 {offsets = [1, 0], sizes = [1, 512], strides = [1, 1]} : vector<16x512xf32> to vector<1x512xf32>
    %149 = vector.broadcast %148 : vector<1x512xf32> to vector<8x512xf32>
    %150 = arith.mulf %147, %149 : vector<8x512xf32>
    %c15_i32_48 = arith.constant 15 : i32
    %151 = tpu.dynamic_rotate %142 by %c15_i32_48 dim 1 : vector<8x512xf32>, i32 -> vector<8x512xf32>
    %152 = vector.extract_strided_slice %2 {offsets = [2, 0], sizes = [1, 512], strides = [1, 1]} : vector<16x512xf32> to vector<1x512xf32>
    %153 = vector.broadcast %152 : vector<1x512xf32> to vector<8x512xf32>
    %154 = arith.mulf %151, %153 : vector<8x512xf32>
    %c1_i32_49 = arith.constant 1 : i32
    %155 = tpu.dynamic_rotate %142 by %c1_i32_49 dim 1 : vector<8x512xf32>, i32 -> vector<8x512xf32>
    %156 = vector.extract_strided_slice %2 {offsets = [3, 0], sizes = [1, 512], strides = [1, 1]} : vector<16x512xf32> to vector<1x512xf32>
    %157 = vector.broadcast %156 : vector<1x512xf32> to vector<8x512xf32>
    %158 = arith.mulf %155, %157 : vector<8x512xf32>
    %c511_i32_50 = arith.constant 511 : i32
    %159 = tpu.dynamic_rotate %142 by %c511_i32_50 dim 1 : vector<8x512xf32>, i32 -> vector<8x512xf32>
    %160 = vector.extract_strided_slice %2 {offsets = [5, 0], sizes = [1, 512], strides = [1, 1]} : vector<16x512xf32> to vector<1x512xf32>
    %161 = vector.broadcast %160 : vector<1x512xf32> to vector<8x512xf32>
    %162 = arith.mulf %159, %161 : vector<8x512xf32>
    %c497_i32_51 = arith.constant 497 : i32
    %163 = tpu.dynamic_rotate %142 by %c497_i32_51 dim 1 : vector<8x512xf32>, i32 -> vector<8x512xf32>
    %164 = vector.extract_strided_slice %2 {offsets = [6, 0], sizes = [1, 512], strides = [1, 1]} : vector<16x512xf32> to vector<1x512xf32>
    %165 = vector.broadcast %164 : vector<1x512xf32> to vector<8x512xf32>
    %166 = arith.mulf %163, %165 : vector<8x512xf32>
    %c496_i32_52 = arith.constant 496 : i32
    %167 = tpu.dynamic_rotate %142 by %c496_i32_52 dim 1 : vector<8x512xf32>, i32 -> vector<8x512xf32>
    %168 = vector.extract_strided_slice %2 {offsets = [7, 0], sizes = [1, 512], strides = [1, 1]} : vector<16x512xf32> to vector<1x512xf32>
    %169 = vector.broadcast %168 : vector<1x512xf32> to vector<8x512xf32>
    %170 = arith.mulf %167, %169 : vector<8x512xf32>
    %c495_i32_53 = arith.constant 495 : i32
    %171 = tpu.dynamic_rotate %142 by %c495_i32_53 dim 1 : vector<8x512xf32>, i32 -> vector<8x512xf32>
    %172 = vector.extract_strided_slice %2 {offsets = [8, 0], sizes = [1, 512], strides = [1, 1]} : vector<16x512xf32> to vector<1x512xf32>
    %173 = vector.broadcast %172 : vector<1x512xf32> to vector<8x512xf32>
    %174 = arith.mulf %171, %173 : vector<8x512xf32>
    %175 = tpu.concatenate %146, %150, %154, %158, %142, %162, %166, %170, %174 in 0 : vector<8x512xf32>, vector<8x512xf32>, vector<8x512xf32>, vector<8x512xf32>, vector<8x512xf32>, vector<8x512xf32>, vector<8x512xf32>, vector<8x512xf32>, vector<8x512xf32> -> vector<72x512xf32>
    %c0_54 = arith.constant 0 : index
    %c0_55 = arith.constant 0 : index
    %176 = vector.load %arg13[%c0_54, %c0_55] : memref<8x72xf32, #tpu.memory_space<vmem>>, vector<8x72xf32>
    %cst_56 = arith.constant dense<0.000000e+00> : vector<8x512xf32>
    %177 = tpu.matmul %176, %175, %cst_56 {dimension_numbers = #tpu.dot_dimension_numbers<[1], [0], [0], [1], [0, 0, 1, 1], [], []>} : vector<8x72xf32>, vector<72x512xf32>, vector<8x512xf32> -> vector<8x512xf32>
    %c0_57 = arith.constant 0 : index
    %c0_58 = arith.constant 0 : index
    %178 = vector.load %arg14[%c0_57, %c0_58] : memref<8x1xf32, #tpu.memory_space<vmem>>, vector<8x1xf32>
    %179 = vector.broadcast %178 : vector<8x1xf32> to vector<8x512xf32>
    %180 = arith.addf %177, %179 : vector<8x512xf32>
    %181 = arith.addf %180, %100 : vector<8x512xf32>
    %182 = arith.addf %181, %3 : vector<8x512xf32>
    %c0_59 = arith.constant 0 : index
    %c0_60 = arith.constant 0 : index
    %183 = vector.load %arg15[%c0_59, %c0_60] : memref<8x8xf32, #tpu.memory_space<vmem>>, vector<8x8xf32>
    %cst_61 = arith.constant dense<0.000000e+00> : vector<8x512xf32>
    %184 = tpu.matmul %183, %182, %cst_61 {dimension_numbers = #tpu.dot_dimension_numbers<[1], [0], [0], [1], [0, 0, 1, 1], [], []>} : vector<8x8xf32>, vector<8x512xf32>, vector<8x512xf32> -> vector<8x512xf32>
    %c0_62 = arith.constant 0 : index
    %c0_63 = arith.constant 0 : index
    %185 = vector.load %arg3[%c0_62, %c0_63] : memref<256x1024xf32, #tpu.memory_space<vmem>>, vector<256x1024xf32>
    %c0_64 = arith.constant 0 : index
    %c0_65 = arith.constant 0 : index
    %186 = vector.load %arg16[%c0_64, %c0_65] : memref<8x1xf32, #tpu.memory_space<vmem>>, vector<8x1xf32>
    %187 = vector.extract_strided_slice %184 {offsets = [0, 0], sizes = [8, 256], strides = [1, 1]} : vector<8x512xf32> to vector<8x256xf32>
    %cst_66 = arith.constant dense<0.000000e+00> : vector<8x1024xf32>
    %188 = tpu.matmul %187, %185, %cst_66 {dimension_numbers = #tpu.dot_dimension_numbers<[1], [0], [0], [1], [0, 0, 1, 1], [], []>} : vector<8x256xf32>, vector<256x1024xf32>, vector<8x1024xf32> -> vector<8x1024xf32>
    %189 = vector.broadcast %186 : vector<8x1xf32> to vector<8x1024xf32>
    %190 = arith.addf %188, %189 : vector<8x1024xf32>
    %c0_67 = arith.constant 0 : index
    %c0_68 = arith.constant 0 : index
    %191 = vector.load %arg17[%c0_67, %c0_68] : memref<8x2048xf32, #tpu.memory_space<vmem>>, vector<8x1024xf32>
    tpu.vector_store %arg17[%c0_67, %c0_68], %190 {strides = array<i32>} : memref<8x2048xf32, #tpu.memory_space<vmem>>, vector<8x1024xf32>,
    %192 = vector.extract_strided_slice %184 {offsets = [0, 256], sizes = [8, 256], strides = [1, 1]} : vector<8x512xf32> to vector<8x256xf32>
    %cst_69 = arith.constant dense<0.000000e+00> : vector<8x1024xf32>
    %193 = tpu.matmul %192, %185, %cst_69 {dimension_numbers = #tpu.dot_dimension_numbers<[1], [0], [0], [1], [0, 0, 1, 1], [], []>} : vector<8x256xf32>, vector<256x1024xf32>, vector<8x1024xf32> -> vector<8x1024xf32>
    %194 = vector.broadcast %186 : vector<8x1xf32> to vector<8x1024xf32>
    %195 = arith.addf %193, %194 : vector<8x1024xf32>
    %c0_70 = arith.constant 0 : index
    %c1024 = arith.constant 1024 : index
    %196 = vector.load %arg17[%c0_70, %c1024] : memref<8x2048xf32, #tpu.memory_space<vmem>>, vector<8x1024xf32>
    tpu.vector_store %arg17[%c0_70, %c1024], %195 {strides = array<i32>} : memref<8x2048xf32, #tpu.memory_space<vmem>>, vector<8x1024xf32>,
    return
  }
  func.func @transform_0(%arg0: i32) -> (i32, i32) {
    %c0_i32 = arith.constant 0 : i32
    %c0_i32_0 = arith.constant 0 : i32
    return %c0_i32, %arg0 : i32, i32
  }
  func.func @transform_1(%arg0: i32) -> (i32, i32) {
    %c0_i32 = arith.constant 0 : i32
    %c0_i32_0 = arith.constant 0 : i32
    return %c0_i32, %arg0 : i32, i32
  }
  func.func @transform_2(%arg0: i32) -> (i32, i32) {
    %c0_i32 = arith.constant 0 : i32
    %c0_i32_0 = arith.constant 0 : i32
    %c0_i32_1 = arith.constant 0 : i32
    return %c0_i32, %c0_i32_0 : i32, i32
  }
  func.func @transform_3(%arg0: i32) -> (i32, i32) {
    %c0_i32 = arith.constant 0 : i32
    %c0_i32_0 = arith.constant 0 : i32
    %c0_i32_1 = arith.constant 0 : i32
    return %c0_i32, %c0_i32_0 : i32, i32
  }
  func.func @transform_4(%arg0: i32) -> (i32, i32) {
    %c0_i32 = arith.constant 0 : i32
    %c0_i32_0 = arith.constant 0 : i32
    %c0_i32_1 = arith.constant 0 : i32
    return %c0_i32, %c0_i32_0 : i32, i32
  }
  func.func @transform_5(%arg0: i32) -> (i32, i32) {
    %c0_i32 = arith.constant 0 : i32
    %c0_i32_0 = arith.constant 0 : i32
    %c0_i32_1 = arith.constant 0 : i32
    return %c0_i32, %c0_i32_0 : i32, i32
  }
  func.func @transform_6(%arg0: i32) -> (i32, i32) {
    %c0_i32 = arith.constant 0 : i32
    %c0_i32_0 = arith.constant 0 : i32
    %c0_i32_1 = arith.constant 0 : i32
    return %c0_i32, %c0_i32_0 : i32, i32
  }
  func.func @transform_7(%arg0: i32) -> (i32, i32) {
    %c0_i32 = arith.constant 0 : i32
    %c0_i32_0 = arith.constant 0 : i32
    %c0_i32_1 = arith.constant 0 : i32
    return %c0_i32, %c0_i32_0 : i32, i32
  }
  func.func @transform_8(%arg0: i32) -> (i32, i32) {
    %c0_i32 = arith.constant 0 : i32
    %c0_i32_0 = arith.constant 0 : i32
    %c0_i32_1 = arith.constant 0 : i32
    return %c0_i32, %c0_i32_0 : i32, i32
  }
  func.func @transform_9(%arg0: i32) -> (i32, i32) {
    %c0_i32 = arith.constant 0 : i32
    %c0_i32_0 = arith.constant 0 : i32
    %c0_i32_1 = arith.constant 0 : i32
    return %c0_i32, %c0_i32_0 : i32, i32
  }
  func.func @transform_10(%arg0: i32) -> (i32, i32) {
    %c0_i32 = arith.constant 0 : i32
    %c0_i32_0 = arith.constant 0 : i32
    %c0_i32_1 = arith.constant 0 : i32
    return %c0_i32, %c0_i32_0 : i32, i32
  }
  func.func @transform_11(%arg0: i32) -> (i32, i32) {
    %c0_i32 = arith.constant 0 : i32
    %c0_i32_0 = arith.constant 0 : i32
    %c0_i32_1 = arith.constant 0 : i32
    return %c0_i32, %c0_i32_0 : i32, i32
  }
  func.func @transform_12(%arg0: i32) -> (i32, i32) {
    %c0_i32 = arith.constant 0 : i32
    %c0_i32_0 = arith.constant 0 : i32
    %c0_i32_1 = arith.constant 0 : i32
    return %c0_i32, %c0_i32_0 : i32, i32
  }
  func.func @transform_13(%arg0: i32) -> (i32, i32) {
    %c0_i32 = arith.constant 0 : i32
    %c0_i32_0 = arith.constant 0 : i32
    %c0_i32_1 = arith.constant 0 : i32
    return %c0_i32, %c0_i32_0 : i32, i32
  }
  func.func @transform_14(%arg0: i32) -> (i32, i32) {
    %c0_i32 = arith.constant 0 : i32
    %c0_i32_0 = arith.constant 0 : i32
    %c0_i32_1 = arith.constant 0 : i32
    return %c0_i32, %c0_i32_0 : i32, i32
  }
  func.func @transform_15(%arg0: i32) -> (i32, i32) {
    %c0_i32 = arith.constant 0 : i32
    %c0_i32_0 = arith.constant 0 : i32
    %c0_i32_1 = arith.constant 0 : i32
    return %c0_i32, %c0_i32_0 : i32, i32
  }
  func.func @transform_16(%arg0: i32) -> (i32, i32) {
    %c0_i32 = arith.constant 0 : i32
    %c0_i32_0 = arith.constant 0 : i32
    return %c0_i32, %arg0 : i32, i32
  }
}

</mosaic_0001>

<llo_original>
// kernel: tpu_custom_call.1
$region0: #{tpu_custom_call.1}
  #allocation0 [shape = 'u32[]', space=smem, size = 0x4, offset = 0x4, fixed_abs, tag = 'smem constant byte address 0x4 - core index']
  #allocation1 [shape = 'u32[144,128]{1,0:T(1,128)}', space=vmem, size = 0x12000, scoped, tag = 'internal scratch']
  %s0 = inlined_call_operand.vmem [shape: f32[8,512], index: 0, kind: input, shape index: {}]
  %s1 = inlined_call_operand.hbm [shape: f32[8,512], index: 1, kind: input, shape index: {}]
  %s2 = inlined_call_operand.hbm [shape: f32[256,1024], index: 2, kind: input, shape index: {}]
  %s3 = inlined_call_operand.hbm [shape: f32[16,512], index: 3, kind: input, shape index: {}]
  %s4 = inlined_call_operand.vmem [shape: f32[8,72], index: 4, kind: input, shape index: {}]
  %s5 = inlined_call_operand.vmem [shape: f32[8,1], index: 5, kind: input, shape index: {}]
  %s6 = inlined_call_operand.vmem [shape: f32[8,72], index: 6, kind: input, shape index: {}]
  %s7 = inlined_call_operand.vmem [shape: f32[8,1], index: 7, kind: input, shape index: {}]
  %s8 = inlined_call_operand.vmem [shape: f32[8,8], index: 8, kind: input, shape index: {}]
  %s9 = inlined_call_operand.vmem [shape: f32[8,1], index: 9, kind: input, shape index: {}]
  %s10 = inlined_call_operand.vmem [shape: f32[8,72], index: 10, kind: input, shape index: {}]
  %s11 = inlined_call_operand.vmem [shape: f32[8,1], index: 11, kind: input, shape index: {}]
  %s12 = inlined_call_operand.vmem [shape: f32[8,72], index: 12, kind: input, shape index: {}]
  %s13 = inlined_call_operand.vmem [shape: f32[8,1], index: 13, kind: input, shape index: {}]
  %s14 = inlined_call_operand.hbm [shape: f32[8,8], index: 14, kind: input, shape index: {}]
  %s15 = inlined_call_operand.vmem [shape: f32[8,1], index: 15, kind: input, shape index: {}]
  %s16 = inlined_call_operand.hbm [shape: f32[8,2048], index: 16, kind: output, shape index: {}]
  %s17 = sld [smem:[#allocation0]]
  $region90: #{tpu_custom_call.1} parent=0
    _
  %s19 = ssub.s32 1, %s17
  %s20 = scalar_select 0, %s19, %s17
  $region1: #{tpu_custom_call.1} parent=0
    #allocation2 [shape = 'u8[16384]{0}', space=vmem, size = 0x4000, scoped, tag = 'input window, operand 1, single buffered']
    #allocation3 [shape = 's32[1]{0}', space=sflag, size = 0x4, scoped, tag = 'scoped memory for tpu_custom_call.1']
    #allocation4 [shape = 's32[1]{0}', space=sflag, size = 0x4, scoped, tag = 'scoped memory for tpu_custom_call.1']
    #allocation5 [shape = 'u8[1048576]{0}', space=vmem, size = 0x100000, scoped, tag = 'input window, operand 2, single buffered']
    #allocation6 [shape = 's32[1]{0}', space=sflag, size = 0x4, scoped, tag = 'scoped memory for tpu_custom_call.1']
    #allocation7 [shape = 'u8[32768]{0}', space=vmem, size = 0x8000, scoped, tag = 'input window, operand 3, single buffered']
    #allocation8 [shape = 'u8[4096]{0}', space=vmem, size = 0x1000, scoped, tag = 'input window, operand 14, single buffered']
    #allocation9 [shape = 's32[1]{0}', space=sflag, size = 0x4, scoped, tag = 'scoped memory for tpu_custom_call.1']
    #allocation10 [shape = 'u8[65536]{0}', space=vmem, size = 0x10000, scoped, tag = 'output window, operand 0, single buffered']
    %21 = vsyncpa [#allocation3], 0
    %22 = vsyncpa [#allocation6], 0
    %23 = vsyncpa [#allocation9], 0
    %24 = vsyncpa [#allocation4], 0
    // Predicated region
    $region2: #{tpu_custom_call.1} parent=1 // pred_check
      _
    $region3: #{tpu_custom_call.1} parent=1 // pred_check_branch
      %26 = sbr.rel (0) target = $region5
    $region4: #{tpu_custom_call.1} parent=1 // pred_region
      _
    $region5: #{tpu_custom_call.1} parent=1 // pred_fallthru
      _
    // Predicated region
    $region6: #{tpu_custom_call.1} parent=1 // pred_check
      _
    $region7: #{tpu_custom_call.1} parent=1 // pred_check_branch
      %28 = sbr.rel (0) target = $region9
    $region8: #{tpu_custom_call.1} parent=1 // pred_region
      %s30 = ssub.s32 512, 512
      %31 = vsyncadd [#allocation3], %s30
      %s33 = sshll.u32 [#allocation2], 4
      %s34 = int_to_ptr.vmem [resolvable:$true] %s33
      %36 = dma.hbm_to_vmem [thread:$0]  %s1, 512, %s34, [#allocation3]
    $region9: #{tpu_custom_call.1} parent=1 // pred_fallthru
      _
    // Predicated region
    $region10: #{tpu_custom_call.1} parent=1 // pred_check
      _
    $region11: #{tpu_custom_call.1} parent=1 // pred_check_branch
      %38 = sbr.rel (0) target = $region13
    $region12: #{tpu_custom_call.1} parent=1 // pred_region
      %s40 = ssub.s32 32768, 32768
      %41 = vsyncadd [#allocation6], %s40
      %s42 = sshll.u32 [#allocation5], 4
      %s43 = int_to_ptr.vmem [resolvable:$true] %s42
      %48 = dma.hbm_to_vmem [thread:$0]  %s2, 32768, %s43, [#allocation6], 1024, 1024, 64
    $region13: #{tpu_custom_call.1} parent=1 // pred_fallthru
      _
    // Predicated region
    $region14: #{tpu_custom_call.1} parent=1 // pred_check
      _
    $region15: #{tpu_custom_call.1} parent=1 // pred_check_branch
      %50 = sbr.rel (0) target = $region17
    $region16: #{tpu_custom_call.1} parent=1 // pred_region
      %s52 = ssub.s32 1024, 1024
      %53 = vsyncadd [#allocation6], %s52
      %s54 = sshll.u32 [#allocation7], 4
      %s55 = int_to_ptr.vmem [resolvable:$true] %s54
      %60 = dma.hbm_to_vmem [thread:$0]  %s3, 1024, %s55, [#allocation6], 512, 512, 32
    $region17: #{tpu_custom_call.1} parent=1 // pred_fallthru
      _
    // Predicated region
    $region18: #{tpu_custom_call.1} parent=1 // pred_check
      _
    $region19: #{tpu_custom_call.1} parent=1 // pred_check_branch
      %62 = sbr.rel (0) target = $region21
    $region20: #{tpu_custom_call.1} parent=1 // pred_region
      _
    $region21: #{tpu_custom_call.1} parent=1 // pred_fallthru
      _
    // Predicated region
    $region22: #{tpu_custom_call.1} parent=1 // pred_check
      _
    $region23: #{tpu_custom_call.1} parent=1 // pred_check_branch
      %64 = sbr.rel (0) target = $region25
    $region24: #{tpu_custom_call.1} parent=1 // pred_region
      _
    $region25: #{tpu_custom_call.1} parent=1 // pred_fallthru
      _
    // Predicated region
    $region26: #{tpu_custom_call.1} parent=1 // pred_check
      _
    $region27: #{tpu_custom_call.1} parent=1 // pred_check_branch
      %66 = sbr.rel (0) target = $region29
    $region28: #{tpu_custom_call.1} parent=1 // pred_region
      _
    $region29: #{tpu_custom_call.1} parent=1 // pred_fallthru
      _
    // Predicated region
    $region30: #{tpu_custom_call.1} parent=1 // pred_check
      _
    $region31: #{tpu_custom_call.1} parent=1 // pred_check_branch
      %68 = sbr.rel (0) target = $region33
    $region32: #{tpu_custom_call.1} parent=1 // pred_region
      _
    $region33: #{tpu_custom_call.1} parent=1 // pred_fallthru
      _
    // Predicated region
    $region34: #{tpu_custom_call.1} parent=1 // pred_check
      _
    $region35: #{tpu_custom_call.1} parent=1 // pred_check_branch
      %70 = sbr.rel (0) target = $region37
    $region36: #{tpu_custom_call.1} parent=1 // pred_region
      _
    $region37: #{tpu_custom_call.1} parent=1 // pred_fallthru
      _
    // Predicated region
    $region38: #{tpu_custom_call.1} parent=1 // pred_check
      _
    $region39: #{tpu_custom_call.1} parent=1 // pred_check_branch
      %72 = sbr.rel (0) target = $region41
    $region40: #{tpu_custom_call.1} parent=1 // pred_region
      _
    $region41: #{tpu_custom_call.1} parent=1 // pred_fallthru
      _
    // Predicated region
    $region42: #{tpu_custom_call.1} parent=1 // pred_check
      _
    $region43: #{tpu_custom_call.1} parent=1 // pred_check_branch
      %74 = sbr.rel (0) target = $region45
    $region44: #{tpu_custom_call.1} parent=1 // pred_region
      _
    $region45: #{tpu_custom_call.1} parent=1 // pred_fallthru
      _
    // Predicated region
    $region46: #{tpu_custom_call.1} parent=1 // pred_check
      _
    $region47: #{tpu_custom_call.1} parent=1 // pred_check_branch
      %76 = sbr.rel (0) target = $region49
    $region48: #{tpu_custom_call.1} parent=1 // pred_region
      _
    $region49: #{tpu_custom_call.1} parent=1 // pred_fallthru
      _
    // Predicated region
    $region50: #{tpu_custom_call.1} parent=1 // pred_check
      _
    $region51: #{tpu_custom_call.1} parent=1 // pred_check_branch
      %78 = sbr.rel (0) target = $region53
    $region52: #{tpu_custom_call.1} parent=1 // pred_region
      _
    $region53: #{tpu_custom_call.1} parent=1 // pred_fallthru
      _
    // Predicated region
    $region54: #{tpu_custom_call.1} parent=1 // pred_check
      _
    $region55: #{tpu_custom_call.1} parent=1 // pred_check_branch
      %80 = sbr.rel (0) target = $region57
    $region56: #{tpu_custom_call.1} parent=1 // pred_region
      _
    $region57: #{tpu_custom_call.1} parent=1 // pred_fallthru
      _
    // Predicated region
    $region58: #{tpu_custom_call.1} parent=1 // pred_check
      _
    $region59: #{tpu_custom_call.1} parent=1 // pred_check_branch
      %82 = sbr.rel (0) target = $region61
    $region60: #{tpu_custom_call.1} parent=1 // pred_region
      %s84 = ssub.s32 128, 128
      %85 = vsyncadd [#allocation9], %s84
      %s87 = sshll.u32 [#allocation8], 4
      %s88 = int_to_ptr.vmem [resolvable:$true] %s87
      %90 = dma.hbm_to_vmem [thread:$0]  %s14, 128, %s88, [#allocation9]
    $region61: #{tpu_custom_call.1} parent=1 // pred_fallthru
      _
    // Predicated region
    $region62: #{tpu_custom_call.1} parent=1 // pred_check
      _
    $region63: #{tpu_custom_call.1} parent=1 // pred_check_branch
      %92 = sbr.rel (0) target = $region65
    $region64: #{tpu_custom_call.1} parent=1 // pred_region
      _
    $region65: #{tpu_custom_call.1} parent=1 // pred_fallthru
      _
    // Predicated region
    $region66: #{tpu_custom_call.1} parent=1 // pred_check
      _
    $region67: #{tpu_custom_call.1} parent=1 // pred_check_branch
      %94 = sbr.rel (0) target = $region69
    $region68: #{tpu_custom_call.1} parent=1 // pred_region
      %95 = dma.done [#allocation3], 512
    $region69: #{tpu_custom_call.1} parent=1 // pred_fallthru
      _
    // Predicated region
    $region70: #{tpu_custom_call.1} parent=1 // pred_check
      _
    $region71: #{tpu_custom_call.1} parent=1 // pred_check_branch
      %97 = sbr.rel (0) target = $region73
    $region72: #{tpu_custom_call.1} parent=1 // pred_region
      %98 = dma.done [#allocation6], 32768
    $region73: #{tpu_custom_call.1} parent=1 // pred_fallthru
      _
    // Predicated region
    $region74: #{tpu_custom_call.1} parent=1 // pred_check
      _
    $region75: #{tpu_custom_call.1} parent=1 // pred_check_branch
      %100 = sbr.rel (0) target = $region77
    $region76: #{tpu_custom_call.1} parent=1 // pred_region
      %101 = dma.done [#allocation6], 1024
    $region77: #{tpu_custom_call.1} parent=1 // pred_fallthru
      _
    // Predicated region
    $region78: #{tpu_custom_call.1} parent=1 // pred_check
      _
    $region79: #{tpu_custom_call.1} parent=1 // pred_check_branch
      %103 = sbr.rel (0) target = $region81
    $region80: #{tpu_custom_call.1} parent=1 // pred_region
      %104 = dma.done [#allocation9], 128
    $region81: #{tpu_custom_call.1} parent=1 // pred_fallthru
      _
    %v105 = vld [vmem:[%s0] sm:$0xff]
    %v106 = vld [vmem:[%s0 + $0x8] sm:$0xff]
    %v107 = vld [vmem:[%s0 + $0x10] sm:$0xff]
    %v108 = vld [vmem:[%s0 + $0x18] sm:$0xff]
    %v109 = vld [vmem:[#allocation2] sm:$0xff]
    %v110 = vld [vmem:[#allocation2 + $0x8] sm:$0xff]
    %v111 = vld [vmem:[#allocation2 + $0x10] sm:$0xff]
    %v112 = vld [vmem:[#allocation2 + $0x18] sm:$0xff]
    %v113 = vld [vmem:[#allocation7] sm:$0xff]
    %v114 = vld [vmem:[#allocation7 + $0x8] sm:$0xff]
    %v115 = vld [vmem:[#allocation7 + $0x10] sm:$0xff]
    %v116 = vld [vmem:[#allocation7 + $0x18] sm:$0xff]
    %v117 = vld [vmem:[#allocation7 + $0x20] sm:$0xff]
    %v118 = vld [vmem:[#allocation7 + $0x28] sm:$0xff]
    %v119 = vld [vmem:[#allocation7 + $0x30] sm:$0xff]
    %v120 = vld [vmem:[#allocation7 + $0x38] sm:$0xff]
    %v121 = vadd.f32 %v105, %v109
    %v122 = vadd.f32 %v106, %v110
    %v123 = vadd.f32 %v107, %v111
    %v124 = vadd.f32 %v108, %v112
    %v125 = vmax.f32 %v109, 0.0
    %v126 = vmax.f32 %v110, 0.0
    %v127 = vmax.f32 %v111, 0.0
    %v128 = vmax.f32 %v112, 0.0
    %129 = vrot.lane.b32.xlu0 %v125, 17
    %v130 = vpop.permute.xlu0 %129
    %131 = vrot.lane.b32.xlu0 %v126, 17
    %v132 = vpop.permute.xlu0 %131
    %133 = vrot.lane.b32.xlu0 %v127, 17
    %v134 = vpop.permute.xlu0 %133
    %135 = vrot.lane.b32.xlu0 %v128, 17
    %v136 = vpop.permute.xlu0 %135
    %v137 = vlaneseq
    %v138 = vand.u32 %v137, 127
    %vm139 = vcmp.lt.s32.totalorder %v138, 17
    %v140 = vsel %vm139, %v134, %v136
    %v141 = vsel %vm139, %v132, %v134
    %v142 = vsel %vm139, %v130, %v132
    %v143 = vsel %vm139, %v136, %v130
    %v144 = vlaneseq
    %v145 = vshrl.u32 %v144, 7
    %v146 = vsub.s32 0, %v145
    %v147 = vrot.slane %v113, %v146
    %v148 = vlaneseq
    %v149 = vshrl.u32 %v148, 7
    %v150 = vsub.s32 0, %v149
    %v151 = vrot.slane %v114, %v150
    %v152 = vlaneseq
    %v153 = vshrl.u32 %v152, 7
    %v154 = vsub.s32 0, %v153
    %v155 = vrot.slane %v115, %v154
    %v156 = vlaneseq
    %v157 = vshrl.u32 %v156, 7
    %v158 = vsub.s32 0, %v157
    %v159 = vrot.slane %v116, %v158
    %v160 = vmul.f32 %v143, %v147
    %v161 = vmul.f32 %v142, %v151
    %v162 = vmul.f32 %v141, %v155
    %v163 = vmul.f32 %v140, %v159
    %164 = vrot.lane.b32.xlu0 %v125, 16
    %v165 = vpop.permute.xlu0 %164
    %166 = vrot.lane.b32.xlu0 %v126, 16
    %v167 = vpop.permute.xlu0 %166
    %168 = vrot.lane.b32.xlu0 %v127, 16
    %v169 = vpop.permute.xlu0 %168
    %170 = vrot.lane.b32.xlu0 %v128, 16
    %v171 = vpop.permute.xlu0 %170
    %vm172 = vcmp.lt.s32.totalorder %v138, 16
    %v173 = vsel %vm172, %v169, %v171
    %v174 = vsel %vm172, %v167, %v169
    %v175 = vsel %vm172, %v165, %v167
    %v176 = vsel %vm172, %v171, %v165
    %v177 = vlaneseq
    %v178 = vshrl.u32 %v177, 7
    %v179 = vsub.s32 1, %v178
    %v180 = vrot.slane %v113, %v179
    %v181 = vlaneseq
    %v182 = vshrl.u32 %v181, 7
    %v183 = vsub.s32 1, %v182
    %v184 = vrot.slane %v114, %v183
    %v185 = vlaneseq
    %v186 = vshrl.u32 %v185, 7
    %v187 = vsub.s32 1, %v186
    %v188 = vrot.slane %v115, %v187
    %v189 = vlaneseq
    %v190 = vshrl.u32 %v189, 7
    %v191 = vsub.s32 1, %v190
    %v192 = vrot.slane %v116, %v191
    %v193 = vmul.f32 %v176, %v180
    %v194 = vmul.f32 %v175, %v184
    %v195 = vmul.f32 %v174, %v188
    %v196 = vmul.f32 %v173, %v192
    %197 = vrot.lane.b32.xlu0 %v125, 15
    %v198 = vpop.permute.xlu0 %197
    %199 = vrot.lane.b32.xlu0 %v126, 15
    %v200 = vpop.permute.xlu0 %199
    %201 = vrot.lane.b32.xlu0 %v127, 15
    %v202 = vpop.permute.xlu0 %201
    %203 = vrot.lane.b32.xlu0 %v128, 15
    %v204 = vpop.permute.xlu0 %203
    %vm205 = vcmp.lt.s32.totalorder %v138, 15
    %v206 = vsel %vm205, %v202, %v204
    %v207 = vsel %vm205, %v200, %v202
    %v208 = vsel %vm205, %v198, %v200
    %v209 = vsel %vm205, %v204, %v198
    %v210 = vlaneseq
    %v211 = vshrl.u32 %v210, 7
    %v212 = vsub.s32 2, %v211
    %v213 = vrot.slane %v113, %v212
    %v214 = vlaneseq
    %v215 = vshrl.u32 %v214, 7
    %v216 = vsub.s32 2, %v215
    %v217 = vrot.slane %v114, %v216
    %v218 = vlaneseq
    %v219 = vshrl.u32 %v218, 7
    %v220 = vsub.s32 2, %v219
    %v221 = vrot.slane %v115, %v220
    %v222 = vlaneseq
    %v223 = vshrl.u32 %v222, 7
    %v224 = vsub.s32 2, %v223
    %v225 = vrot.slane %v116, %v224
    %v226 = vmul.f32 %v209, %v213
    %v227 = vmul.f32 %v208, %v217
    %v228 = vmul.f32 %v207, %v221
    %v229 = vmul.f32 %v206, %v225
    %230 = vrot.lane.b32.xlu0 %v125, 1
    %v231 = vpop.permute.xlu0 %230
    %232 = vrot.lane.b32.xlu0 %v126, 1
    %v233 = vpop.permute.xlu0 %232
    %234 = vrot.lane.b32.xlu0 %v127, 1
    %v235 = vpop.permute.xlu0 %234
    %236 = vrot.lane.b32.xlu0 %v128, 1
    %v237 = vpop.permute.xlu0 %236
    %vm238 = vcmp.lt.s32.totalorder %v138, 1
    %v239 = vsel %vm238, %v235, %v237
    %v240 = vsel %vm238, %v233, %v235
    %v241 = vsel %vm238, %v231, %v233
    %v242 = vsel %vm238, %v237, %v231
    %v243 = vlaneseq
    %v244 = vshrl.u32 %v243, 7
    %v245 = vsub.s32 3, %v244
    %v246 = vrot.slane %v113, %v245
    %v247 = vlaneseq
    %v248 = vshrl.u32 %v247, 7
    %v249 = vsub.s32 3, %v248
    %v250 = vrot.slane %v114, %v249
    %v251 = vlaneseq
    %v252 = vshrl.u32 %v251, 7
    %v253 = vsub.s32 3, %v252
    %v254 = vrot.slane %v115, %v253
    %v255 = vlaneseq
    %v256 = vshrl.u32 %v255, 7
    %v257 = vsub.s32 3, %v256
    %v258 = vrot.slane %v116, %v257
    %v259 = vmul.f32 %v242, %v246
    %v260 = vmul.f32 %v241, %v250
    %v261 = vmul.f32 %v240, %v254
    %v262 = vmul.f32 %v239, %v258
    %263 = vrot.lane.b32.xlu0 %v125, 127
    %v264 = vpop.permute.xlu0 %263
    %265 = vrot.lane.b32.xlu0 %v126, 127
    %v266 = vpop.permute.xlu0 %265
    %267 = vrot.lane.b32.xlu0 %v127, 127
    %v268 = vpop.permute.xlu0 %267
    %269 = vrot.lane.b32.xlu0 %v128, 127
    %v270 = vpop.permute.xlu0 %269
    %vm271 = vcmp.lt.s32.totalorder %v138, 127
    %v272 = vsel %vm271, %v268, %v270
    %v273 = vsel %vm271, %v266, %v268
    %v274 = vsel %vm271, %v264, %v266
    %v275 = vsel %vm271, %v270, %v264
    %v276 = vlaneseq
    %v277 = vshrl.u32 %v276, 7
    %v278 = vsub.s32 5, %v277
    %v279 = vrot.slane %v113, %v278
    %v280 = vlaneseq
    %v281 = vshrl.u32 %v280, 7
    %v282 = vsub.s32 5, %v281
    %v283 = vrot.slane %v114, %v282
    %v284 = vlaneseq
    %v285 = vshrl.u32 %v284, 7
    %v286 = vsub.s32 5, %v285
    %v287 = vrot.slane %v115, %v286
    %v288 = vlaneseq
    %v289 = vshrl.u32 %v288, 7
    %v290 = vsub.s32 5, %v289
    %v291 = vrot.slane %v116, %v290
    %v292 = vmul.f32 %v274, %v279
    %v293 = vmul.f32 %v273, %v283
    %v294 = vmul.f32 %v272, %v287
    %v295 = vmul.f32 %v275, %v291
    %296 = vrot.lane.b32.xlu0 %v125, 113
    %v297 = vpop.permute.xlu0 %296
    %298 = vrot.lane.b32.xlu0 %v126, 113
    %v299 = vpop.permute.xlu0 %298
    %300 = vrot.lane.b32.xlu0 %v127, 113
    %v301 = vpop.permute.xlu0 %300
    %302 = vrot.lane.b32.xlu0 %v128, 113
    %v303 = vpop.permute.xlu0 %302
    %vm304 = vcmp.lt.s32.totalorder %v138, 113
    %v305 = vsel %vm304, %v301, %v303
    %v306 = vsel %vm304, %v299, %v301
    %v307 = vsel %vm304, %v297, %v299
    %v308 = vsel %vm304, %v303, %v297
    %v309 = vlaneseq
    %v310 = vshrl.u32 %v309, 7
    %v311 = vsub.s32 6, %v310
    %v312 = vrot.slane %v113, %v311
    %v313 = vlaneseq
    %v314 = vshrl.u32 %v313, 7
    %v315 = vsub.s32 6, %v314
    %v316 = vrot.slane %v114, %v315
    %v317 = vlaneseq
    %v318 = vshrl.u32 %v317, 7
    %v319 = vsub.s32 6, %v318
    %v320 = vrot.slane %v115, %v319
    %v321 = vlaneseq
    %v322 = vshrl.u32 %v321, 7
    %v323 = vsub.s32 6, %v322
    %v324 = vrot.slane %v116, %v323
    %v325 = vmul.f32 %v307, %v312
    %v326 = vmul.f32 %v306, %v316
    %v327 = vmul.f32 %v305, %v320
    %v328 = vmul.f32 %v308, %v324
    %329 = vrot.lane.b32.xlu0 %v125, 112
    %v330 = vpop.permute.xlu0 %329
    %331 = vrot.lane.b32.xlu0 %v126, 112
    %v332 = vpop.permute.xlu0 %331
    %333 = vrot.lane.b32.xlu0 %v127, 112
    %v334 = vpop.permute.xlu0 %333
    %335 = vrot.lane.b32.xlu0 %v128, 112
    %v336 = vpop.permute.xlu0 %335
    %vm337 = vcmp.lt.s32.totalorder %v138, 112
    %v338 = vsel %vm337, %v334, %v336
    %v339 = vsel %vm337, %v332, %v334
    %v340 = vsel %vm337, %v330, %v332
    %v341 = vsel %vm337, %v336, %v330
    %v342 = vlaneseq
    %v343 = vshrl.u32 %v342, 7
    %v344 = vsub.s32 7, %v343
    %v345 = vrot.slane %v113, %v344
    %v346 = vlaneseq
    %v347 = vshrl.u32 %v346, 7
    %v348 = vsub.s32 7, %v347
    %v349 = vrot.slane %v114, %v348
    %v350 = vlaneseq
    %v351 = vshrl.u32 %v350, 7
    %v352 = vsub.s32 7, %v351
    %v353 = vrot.slane %v115, %v352
    %v354 = vlaneseq
    %v355 = vshrl.u32 %v354, 7
    %v356 = vsub.s32 7, %v355
    %v357 = vrot.slane %v116, %v356
    %v358 = vmul.f32 %v340, %v345
    %v359 = vmul.f32 %v339, %v349
    %v360 = vmul.f32 %v338, %v353
    %v361 = vmul.f32 %v341, %v357
    %362 = vrot.lane.b32.xlu0 %v125, 111
    %v363 = vpop.permute.xlu0 %362
    %364 = vrot.lane.b32.xlu0 %v126, 111
    %v365 = vpop.permute.xlu0 %364
    %366 = vrot.lane.b32.xlu0 %v127, 111
    %v367 = vpop.permute.xlu0 %366
    %368 = vrot.lane.b32.xlu0 %v128, 111
    %v369 = vpop.permute.xlu0 %368
    %vm370 = vcmp.lt.s32.totalorder %v138, 111
    %v371 = vsel %vm370, %v367, %v369
    %v372 = vsel %vm370, %v365, %v367
    %v373 = vsel %vm370, %v363, %v365
    %v374 = vsel %vm370, %v369, %v363
    %v375 = vlaneseq
    %v376 = vshrl.u32 %v375, 7
    %v377 = vsub.s32 0, %v376
    %v378 = vrot.slane %v117, %v377
    %v379 = vlaneseq
    %v380 = vshrl.u32 %v379, 7
    %v381 = vsub.s32 0, %v380
    %v382 = vrot.slane %v118, %v381
    %v383 = vlaneseq
    %v384 = vshrl.u32 %v383, 7
    %v385 = vsub.s32 0, %v384
    %v386 = vrot.slane %v119, %v385
    %v387 = vlaneseq
    %v388 = vshrl.u32 %v387, 7
    %v389 = vsub.s32 0, %v388
    %v390 = vrot.slane %v120, %v389
    %v391 = vmul.f32 %v373, %v378
    %v392 = vmul.f32 %v372, %v382
    %v393 = vmul.f32 %v371, %v386
    %v394 = vmul.f32 %v374, %v390
    %v395 = vld [vmem:[%s4] sm:$0xff]
    %v396 = vld [vmem:[%s5] sm:$0xff]
    %398 = vset.pattern.permute.xlu0 0
    %399 = vperm.xlu0 %398, %v396
    %v400 = vpop.permute.xlu0 %399
    %vm402 = vcmask 588800
    %v404 = vsel %vm402, %v395, 0
    %406 = vmatprep.subr.mxu0 0.0
    %407 = vmatpush1.msra.mxu0 0.0
    %408 = vmatprep.subr.mxu0 0.0
    %409 = vmatpush1.msra.mxu0 0.0
    %410 = vmatprep.subr.mxu0 0.0
    %411 = vmatpush1.msra.mxu0 0.0
    %412 = vmatprep.subr.mxu0 0.0
    %413 = vmatpush1.msra.mxu0 0.0
    %414 = vmatprep.subr.mxu0 0.0
    %415 = vmatpush1.msra.mxu0 0.0
    %416 = vmatprep.subr.mxu0 0.0
    %417 = vmatpush1.msra.mxu0 0.0
    %418 = vmatprep.subr.mxu0 0.0
    %419 = vmatpush1.msra.mxu0 0.0
    %420 = vmatprep.subr.mxu0 %v392
    %421 = vmatpush1.msra.mxu0 %v391
    %422 = vmatprep.subr.mxu0 %v359
    %423 = vmatpush1.msra.mxu0 %v358
    %424 = vmatprep.subr.mxu0 %v326
    %425 = vmatpush1.msra.mxu0 %v325
    %426 = vmatprep.subr.mxu0 %v293
    %427 = vmatpush1.msra.mxu0 %v292
    %428 = vmatprep.subr.mxu0 %v126
    %429 = vmatpush1.msra.mxu0 %v125
    %430 = vmatprep.subr.mxu0 %v260
    %431 = vmatpush1.msra.mxu0 %v259
    %432 = vmatprep.subr.mxu0 %v227
    %433 = vmatpush1.msra.mxu0 %v226
    %434 = vmatprep.subr.mxu0 %v194
    %435 = vmatpush1.msra.mxu0 %v193
    %436 = vmatprep.subr.mxu0 %v161
    %437 = vmatpush1.msra.mxu0 %v160
    %438 = vmatprep.subr.mxu0 0.0
    %439 = vmatpush2.msra.mxu0 0.0
    %440 = vmatprep.subr.mxu0 0.0
    %441 = vmatpush2.msra.mxu0 0.0
    %442 = vmatprep.subr.mxu0 0.0
    %443 = vmatpush2.msra.mxu0 0.0
    %444 = vmatprep.subr.mxu0 0.0
    %445 = vmatpush2.msra.mxu0 0.0
    %446 = vmatprep.subr.mxu0 0.0
    %447 = vmatpush2.msra.mxu0 0.0
    %448 = vmatprep.subr.mxu0 0.0
    %449 = vmatpush2.msra.mxu0 0.0
    %450 = vmatprep.subr.mxu0 0.0
    %451 = vmatpush2.msra.mxu0 0.0
    %452 = vmatprep.subr.mxu0 0.0
    %453 = vmatpush2.msra.mxu0 0.0
    %454 = vmatprep.subr.mxu0 0.0
    %455 = vmatpush2.msra.mxu0 0.0
    %456 = vmatprep.subr.mxu0 0.0
    %457 = vmatpush2.msra.mxu0 0.0
    %458 = vmatprep.subr.mxu0 0.0
    %459 = vmatpush2.msra.mxu0 0.0
    %460 = vmatprep.subr.mxu0 0.0
    %461 = vmatpush2.msra.mxu0 0.0
    %462 = vmatprep.subr.mxu0 0.0
    %463 = vmatpush2.msra.mxu0 0.0
    %464 = vmatprep.subr.mxu0 0.0
    %465 = vmatpush2.msra.mxu0 0.0
    %466 = vmatprep.subr.mxu0 0.0
    %467 = vmatpush2.msra.mxu0 0.0
    %468 = vmatprep.subr.mxu0 0.0
    %469 = vmatpush2.msra.mxu0 0.0
    %470 = vmatprep.mubr.f32.mxu0 0.0
    %471 = vmatmul.mubr.f32.gmra.mxu0 %v404
    %v472 = vpop.f32.mrf.mxu0
    %v473 = vadd.f32 %v400, %v472
    %v474 = vpop.f32.mrf.mxu0
    %v475 = vadd.f32 %v400, %v474
    %476 = vdwg.mxu0
    %477 = vmatprep.subr.mxu0 0.0
    %478 = vmatpush1.msra.mxu0 0.0
    %479 = vmatprep.subr.mxu0 0.0
    %480 = vmatpush1.msra.mxu0 0.0
    %481 = vmatprep.subr.mxu0 0.0
    %482 = vmatpush1.msra.mxu0 0.0
    %483 = vmatprep.subr.mxu0 0.0
    %484 = vmatpush1.msra.mxu0 0.0
    %485 = vmatprep.subr.mxu0 0.0
    %486 = vmatpush1.msra.mxu0 0.0
    %487 = vmatprep.subr.mxu0 0.0
    %488 = vmatpush1.msra.mxu0 0.0
    %489 = vmatprep.subr.mxu0 0.0
    %490 = vmatpush1.msra.mxu0 0.0
    %491 = vmatprep.subr.mxu0 %v394
    %492 = vmatpush1.msra.mxu0 %v393
    %493 = vmatprep.subr.mxu0 %v361
    %494 = vmatpush1.msra.mxu0 %v360
    %495 = vmatprep.subr.mxu0 %v328
    %496 = vmatpush1.msra.mxu0 %v327
    %497 = vmatprep.subr.mxu0 %v295
    %498 = vmatpush1.msra.mxu0 %v294
    %499 = vmatprep.subr.mxu0 %v128
    %500 = vmatpush1.msra.mxu0 %v127
    %501 = vmatprep.subr.mxu0 %v262
    %502 = vmatpush1.msra.mxu0 %v261
    %503 = vmatprep.subr.mxu0 %v229
    %504 = vmatpush1.msra.mxu0 %v228
    %505 = vmatprep.subr.mxu0 %v196
    %506 = vmatpush1.msra.mxu0 %v195
    %507 = vmatprep.subr.mxu0 %v163
    %508 = vmatpush1.msra.mxu0 %v162
    %509 = vmatprep.subr.mxu0 0.0
    %510 = vmatpush2.msra.mxu0 0.0
    %511 = vmatprep.subr.mxu0 0.0
    %512 = vmatpush2.msra.mxu0 0.0
    %513 = vmatprep.subr.mxu0 0.0
    %514 = vmatpush2.msra.mxu0 0.0
    %515 = vmatprep.subr.mxu0 0.0
    %516 = vmatpush2.msra.mxu0 0.0
    %517 = vmatprep.subr.mxu0 0.0
    %518 = vmatpush2.msra.mxu0 0.0
    %519 = vmatprep.subr.mxu0 0.0
    %520 = vmatpush2.msra.mxu0 0.0
    %521 = vmatprep.subr.mxu0 0.0
    %522 = vmatpush2.msra.mxu0 0.0
    %523 = vmatprep.subr.mxu0 0.0
    %524 = vmatpush2.msra.mxu0 0.0
    %525 = vmatprep.subr.mxu0 0.0
    %526 = vmatpush2.msra.mxu0 0.0
    %527 = vmatprep.subr.mxu0 0.0
    %528 = vmatpush2.msra.mxu0 0.0
    %529 = vmatprep.subr.mxu0 0.0
    %530 = vmatpush2.msra.mxu0 0.0
    %531 = vmatprep.subr.mxu0 0.0
    %532 = vmatpush2.msra.mxu0 0.0
    %533 = vmatprep.subr.mxu0 0.0
    %534 = vmatpush2.msra.mxu0 0.0
    %535 = vmatprep.subr.mxu0 0.0
    %536 = vmatpush2.msra.mxu0 0.0
    %537 = vmatprep.subr.mxu0 0.0
    %538 = vmatpush2.msra.mxu0 0.0
    %539 = vmatprep.subr.mxu0 0.0
    %540 = vmatpush2.msra.mxu0 0.0
    %541 = vmatprep.mubr.f32.mxu0 0.0
    %542 = vmatmul.mubr.f32.gmra.mxu0 %v404
    %v543 = vpop.f32.mrf.mxu0
    %v544 = vadd.f32 %v400, %v543
    %v545 = vpop.f32.mrf.mxu0
    %v546 = vadd.f32 %v400, %v545
    %547 = vdwg.mxu0
    %v548 = vmax.f32 %v473, 0.0
    %v549 = vmax.f32 %v475, 0.0
    %v550 = vmax.f32 %v544, 0.0
    %v551 = vmax.f32 %v546, 0.0
    %552 = vrot.lane.b32.xlu0 %v548, 17
    %v553 = vpop.permute.xlu0 %552
    %554 = vrot.lane.b32.xlu0 %v549, 17
    %v555 = vpop.permute.xlu0 %554
    %556 = vrot.lane.b32.xlu0 %v550, 17
    %v557 = vpop.permute.xlu0 %556
    %558 = vrot.lane.b32.xlu0 %v551, 17
    %v559 = vpop.permute.xlu0 %558
    %v560 = vsel %vm139, %v557, %v559
    %v561 = vsel %vm139, %v555, %v557
    %v562 = vsel %vm139, %v553, %v555
    %v563 = vsel %vm139, %v559, %v553
    %v564 = vmul.f32 %v563, %v147
    %v565 = vmul.f32 %v562, %v151
    %v566 = vmul.f32 %v561, %v155
    %v567 = vmul.f32 %v560, %v159
    %568 = vrot.lane.b32.xlu0 %v548, 16
    %v569 = vpop.permute.xlu0 %568
    %570 = vrot.lane.b32.xlu0 %v549, 16
    %v571 = vpop.permute.xlu0 %570
    %572 = vrot.lane.b32.xlu0 %v550, 16
    %v573 = vpop.permute.xlu0 %572
    %574 = vrot.lane.b32.xlu0 %v551, 16
    %v575 = vpop.permute.xlu0 %574
    %v576 = vsel %vm172, %v573, %v575
    %v577 = vsel %vm172, %v571, %v573
    %v578 = vsel %vm172, %v569, %v571
    %v579 = vsel %vm172, %v575, %v569
    %v580 = vmul.f32 %v579, %v180
    %v581 = vmul.f32 %v578, %v184
    %v582 = vmul.f32 %v577, %v188
    %v583 = vmul.f32 %v576, %v192
    %584 = vrot.lane.b32.xlu0 %v548, 15
    %v585 = vpop.permute.xlu0 %584
    %586 = vrot.lane.b32.xlu0 %v549, 15
    %v587 = vpop.permute.xlu0 %586
    %588 = vrot.lane.b32.xlu0 %v550, 15
    %v589 = vpop.permute.xlu0 %588
    %590 = vrot.lane.b32.xlu0 %v551, 15
    %v591 = vpop.permute.xlu0 %590
    %v592 = vsel %vm205, %v589, %v591
    %v593 = vsel %vm205, %v587, %v589
    %v594 = vsel %vm205, %v585, %v587
    %v595 = vsel %vm205, %v591, %v585
    %v596 = vmul.f32 %v595, %v213
    %v597 = vmul.f32 %v594, %v217
    %v598 = vmul.f32 %v593, %v221
    %v599 = vmul.f32 %v592, %v225
    %600 = vrot.lane.b32.xlu0 %v548, 1
    %v601 = vpop.permute.xlu0 %600
    %602 = vrot.lane.b32.xlu0 %v549, 1
    %v603 = vpop.permute.xlu0 %602
    %604 = vrot.lane.b32.xlu0 %v550, 1
    %v605 = vpop.permute.xlu0 %604
    %606 = vrot.lane.b32.xlu0 %v551, 1
    %v607 = vpop.permute.xlu0 %606
    %v608 = vsel %vm238, %v605, %v607
    %v609 = vsel %vm238, %v603, %v605
    %v610 = vsel %vm238, %v601, %v603
    %v611 = vsel %vm238, %v607, %v601
    %v612 = vmul.f32 %v611, %v246
    %v613 = vmul.f32 %v610, %v250
    %v614 = vmul.f32 %v609, %v254
    %v615 = vmul.f32 %v608, %v258
    %616 = vrot.lane.b32.xlu0 %v548, 127
    %v617 = vpop.permute.xlu0 %616
    %618 = vrot.lane.b32.xlu0 %v549, 127
    %v619 = vpop.permute.xlu0 %618
    %620 = vrot.lane.b32.xlu0 %v550, 127
    %v621 = vpop.permute.xlu0 %620
    %622 = vrot.lane.b32.xlu0 %v551, 127
    %v623 = vpop.permute.xlu0 %622
    %v624 = vsel %vm271, %v621, %v623
    %v625 = vsel %vm271, %v619, %v621
    %v626 = vsel %vm271, %v617, %v619
    %v627 = vsel %vm271, %v623, %v617
    %v628 = vmul.f32 %v626, %v279
    %v629 = vmul.f32 %v625, %v283
    %v630 = vmul.f32 %v624, %v287
    %v631 = vmul.f32 %v627, %v291
    %632 = vrot.lane.b32.xlu0 %v548, 113
    %v633 = vpop.permute.xlu0 %632
    %634 = vrot.lane.b32.xlu0 %v549, 113
    %v635 = vpop.permute.xlu0 %634
    %636 = vrot.lane.b32.xlu0 %v550, 113
    %v637 = vpop.permute.xlu0 %636
    %638 = vrot.lane.b32.xlu0 %v551, 113
    %v639 = vpop.permute.xlu0 %638
    %v640 = vsel %vm304, %v637, %v639
    %v641 = vsel %vm304, %v635, %v637
    %v642 = vsel %vm304, %v633, %v635
    %v643 = vsel %vm304, %v639, %v633
    %v644 = vmul.f32 %v642, %v312
    %v645 = vmul.f32 %v641, %v316
    %v646 = vmul.f32 %v640, %v320
    %v647 = vmul.f32 %v643, %v324
    %648 = vrot.lane.b32.xlu0 %v548, 112
    %v649 = vpop.permute.xlu0 %648
    %650 = vrot.lane.b32.xlu0 %v549, 112
    %v651 = vpop.permute.xlu0 %650
    %652 = vrot.lane.b32.xlu0 %v550, 112
    %v653 = vpop.permute.xlu0 %652
    %654 = vrot.lane.b32.xlu0 %v551, 112
    %v655 = vpop.permute.xlu0 %654
    %v656 = vsel %vm337, %v653, %v655
    %v657 = vsel %vm337, %v651, %v653
    %v658 = vsel %vm337, %v649, %v651
    %v659 = vsel %vm337, %v655, %v649
    %v660 = vmul.f32 %v658, %v345
    %v661 = vmul.f32 %v657, %v349
    %v662 = vmul.f32 %v656, %v353
    %v663 = vmul.f32 %v659, %v357
    %664 = vrot.lane.b32.xlu0 %v548, 111
    %v665 = vpop.permute.xlu0 %664
    %666 = vrot.lane.b32.xlu0 %v549, 111
    %v667 = vpop.permute.xlu0 %666
    %668 = vrot.lane.b32.xlu0 %v550, 111
    %v669 = vpop.permute.xlu0 %668
    %670 = vrot.lane.b32.xlu0 %v551, 111
    %v671 = vpop.permute.xlu0 %670
    %v672 = vsel %vm370, %v669, %v671
    %v673 = vsel %vm370, %v667, %v669
    %v674 = vsel %vm370, %v665, %v667
    %v675 = vsel %vm370, %v671, %v665
    %v676 = vmul.f32 %v674, %v378
    %v677 = vmul.f32 %v673, %v382
    %v678 = vmul.f32 %v672, %v386
    %v679 = vmul.f32 %v675, %v390
    %v680 = vld [vmem:[%s6] sm:$0xff]
    %v681 = vld [vmem:[%s7] sm:$0xff]
    %683 = vset.pattern.permute.xlu0 0
    %684 = vperm.xlu0 %683, %v681
    %v685 = vpop.permute.xlu0 %684
    %v688 = vsel %vm402, %v680, 0
    %690 = vmatprep.subr.mxu0 0.0
    %691 = vmatpush1.msra.mxu0 0.0
    %692 = vmatprep.subr.mxu0 0.0
    %693 = vmatpush1.msra.mxu0 0.0
    %694 = vmatprep.subr.mxu0 0.0
    %695 = vmatpush1.msra.mxu0 0.0
    %696 = vmatprep.subr.mxu0 0.0
    %697 = vmatpush1.msra.mxu0 0.0
    %698 = vmatprep.subr.mxu0 0.0
    %699 = vmatpush1.msra.mxu0 0.0
    %700 = vmatprep.subr.mxu0 0.0
    %701 = vmatpush1.msra.mxu0 0.0
    %702 = vmatprep.subr.mxu0 0.0
    %703 = vmatpush1.msra.mxu0 0.0
    %704 = vmatprep.subr.mxu0 %v677
    %705 = vmatpush1.msra.mxu0 %v676
    %706 = vmatprep.subr.mxu0 %v661
    %707 = vmatpush1.msra.mxu0 %v660
    %708 = vmatprep.subr.mxu0 %v645
    %709 = vmatpush1.msra.mxu0 %v644
    %710 = vmatprep.subr.mxu0 %v629
    %711 = vmatpush1.msra.mxu0 %v628
    %712 = vmatprep.subr.mxu0 %v549
    %713 = vmatpush1.msra.mxu0 %v548
    %714 = vmatprep.subr.mxu0 %v613
    %715 = vmatpush1.msra.mxu0 %v612
    %716 = vmatprep.subr.mxu0 %v597
    %717 = vmatpush1.msra.mxu0 %v596
    %718 = vmatprep.subr.mxu0 %v581
    %719 = vmatpush1.msra.mxu0 %v580
    %720 = vmatprep.subr.mxu0 %v565
    %721 = vmatpush1.msra.mxu0 %v564
    %722 = vmatprep.subr.mxu0 0.0
    %723 = vmatpush2.msra.mxu0 0.0
    %724 = vmatprep.subr.mxu0 0.0
    %725 = vmatpush2.msra.mxu0 0.0
    %726 = vmatprep.subr.mxu0 0.0
    %727 = vmatpush2.msra.mxu0 0.0
    %728 = vmatprep.subr.mxu0 0.0
    %729 = vmatpush2.msra.mxu0 0.0
    %730 = vmatprep.subr.mxu0 0.0
    %731 = vmatpush2.msra.mxu0 0.0
    %732 = vmatprep.subr.mxu0 0.0
    %733 = vmatpush2.msra.mxu0 0.0
    %734 = vmatprep.subr.mxu0 0.0
    %735 = vmatpush2.msra.mxu0 0.0
    %736 = vmatprep.subr.mxu0 0.0
    %737 = vmatpush2.msra.mxu0 0.0
    %738 = vmatprep.subr.mxu0 0.0
    %739 = vmatpush2.msra.mxu0 0.0
    %740 = vmatprep.subr.mxu0 0.0
    %741 = vmatpush2.msra.mxu0 0.0
    %742 = vmatprep.subr.mxu0 0.0
    %743 = vmatpush2.msra.mxu0 0.0
    %744 = vmatprep.subr.mxu0 0.0
    %745 = vmatpush2.msra.mxu0 0.0
    %746 = vmatprep.subr.mxu0 0.0
    %747 = vmatpush2.msra.mxu0 0.0
    %748 = vmatprep.subr.mxu0 0.0
    %749 = vmatpush2.msra.mxu0 0.0
    %750 = vmatprep.subr.mxu0 0.0
    %751 = vmatpush2.msra.mxu0 0.0
    %752 = vmatprep.subr.mxu0 0.0
    %753 = vmatpush2.msra.mxu0 0.0
    %754 = vmatprep.mubr.f32.mxu0 0.0
    %755 = vmatmul.mubr.f32.gmra.mxu0 %v688
    %v756 = vpop.f32.mrf.mxu0
    %v757 = vadd.f32 %v685, %v756
    %v758 = vpop.f32.mrf.mxu0
    %v759 = vadd.f32 %v685, %v758
    %760 = vdwg.mxu0
    %761 = vmatprep.subr.mxu0 0.0
    %762 = vmatpush1.msra.mxu0 0.0
    %763 = vmatprep.subr.mxu0 0.0
    %764 = vmatpush1.msra.mxu0 0.0
    %765 = vmatprep.subr.mxu0 0.0
    %766 = vmatpush1.msra.mxu0 0.0
    %767 = vmatprep.subr.mxu0 0.0
    %768 = vmatpush1.msra.mxu0 0.0
    %769 = vmatprep.subr.mxu0 0.0
    %770 = vmatpush1.msra.mxu0 0.0
    %771 = vmatprep.subr.mxu0 0.0
    %772 = vmatpush1.msra.mxu0 0.0
    %773 = vmatprep.subr.mxu0 0.0
    %774 = vmatpush1.msra.mxu0 0.0
    %775 = vmatprep.subr.mxu0 %v679
    %776 = vmatpush1.msra.mxu0 %v678
    %777 = vmatprep.subr.mxu0 %v663
    %778 = vmatpush1.msra.mxu0 %v662
    %779 = vmatprep.subr.mxu0 %v647
    %780 = vmatpush1.msra.mxu0 %v646
    %781 = vmatprep.subr.mxu0 %v631
    %782 = vmatpush1.msra.mxu0 %v630
    %783 = vmatprep.subr.mxu0 %v551
    %784 = vmatpush1.msra.mxu0 %v550
    %785 = vmatprep.subr.mxu0 %v615
    %786 = vmatpush1.msra.mxu0 %v614
    %787 = vmatprep.subr.mxu0 %v599
    %788 = vmatpush1.msra.mxu0 %v598
    %789 = vmatprep.subr.mxu0 %v583
    %790 = vmatpush1.msra.mxu0 %v582
    %791 = vmatprep.subr.mxu0 %v567
    %792 = vmatpush1.msra.mxu0 %v566
    %793 = vmatprep.subr.mxu0 0.0
    %794 = vmatpush2.msra.mxu0 0.0
    %795 = vmatprep.subr.mxu0 0.0
    %796 = vmatpush2.msra.mxu0 0.0
    %797 = vmatprep.subr.mxu0 0.0
    %798 = vmatpush2.msra.mxu0 0.0
    %799 = vmatprep.subr.mxu0 0.0
    %800 = vmatpush2.msra.mxu0 0.0
    %801 = vmatprep.subr.mxu0 0.0
    %802 = vmatpush2.msra.mxu0 0.0
    %803 = vmatprep.subr.mxu0 0.0
    %804 = vmatpush2.msra.mxu0 0.0
    %805 = vmatprep.subr.mxu0 0.0
    %806 = vmatpush2.msra.mxu0 0.0
    %807 = vmatprep.subr.mxu0 0.0
    %808 = vmatpush2.msra.mxu0 0.0
    %809 = vmatprep.subr.mxu0 0.0
    %810 = vmatpush2.msra.mxu0 0.0
    %811 = vmatprep.subr.mxu0 0.0
    %812 = vmatpush2.msra.mxu0 0.0
    %813 = vmatprep.subr.mxu0 0.0
    %814 = vmatpush2.msra.mxu0 0.0
    %815 = vmatprep.subr.mxu0 0.0
    %816 = vmatpush2.msra.mxu0 0.0
    %817 = vmatprep.subr.mxu0 0.0
    %818 = vmatpush2.msra.mxu0 0.0
    %819 = vmatprep.subr.mxu0 0.0
    %820 = vmatpush2.msra.mxu0 0.0
    %821 = vmatprep.subr.mxu0 0.0
    %822 = vmatpush2.msra.mxu0 0.0
    %823 = vmatprep.subr.mxu0 0.0
    %824 = vmatpush2.msra.mxu0 0.0
    %825 = vmatprep.mubr.f32.mxu0 0.0
    %826 = vmatmul.mubr.f32.gmra.mxu0 %v688
    %v827 = vpop.f32.mrf.mxu0
    %v828 = vadd.f32 %v685, %v827
    %v829 = vpop.f32.mrf.mxu0
    %v830 = vadd.f32 %v685, %v829
    %831 = vdwg.mxu0
    %v832 = vadd.f32 %v757, %v109
    %v833 = vadd.f32 %v759, %v110
    %v834 = vadd.f32 %v828, %v111
    %v835 = vadd.f32 %v830, %v112
    %v836 = vld [vmem:[%s8] sm:$0xff]
    %v837 = vld [vmem:[%s9] sm:$0xff]
    %839 = vset.pattern.permute.xlu0 0
    %840 = vperm.xlu0 %839, %v837
    %v841 = vpop.permute.xlu0 %840
    %vm843 = vcmask 64512
    %v845 = vsel %vm843, %v836, 0
    %847 = vmatprep.subr.mxu0 0.0
    %848 = vmatpush1.msra.mxu0 0.0
    %849 = vmatprep.subr.mxu0 0.0
    %850 = vmatpush1.msra.mxu0 0.0
    %851 = vmatprep.subr.mxu0 0.0
    %852 = vmatpush1.msra.mxu0 0.0
    %853 = vmatprep.subr.mxu0 0.0
    %854 = vmatpush1.msra.mxu0 0.0
    %855 = vmatprep.subr.mxu0 0.0
    %856 = vmatpush1.msra.mxu0 0.0
    %857 = vmatprep.subr.mxu0 0.0
    %858 = vmatpush1.msra.mxu0 0.0
    %859 = vmatprep.subr.mxu0 0.0
    %860 = vmatpush1.msra.mxu0 0.0
    %861 = vmatprep.subr.mxu0 0.0
    %862 = vmatpush1.msra.mxu0 0.0
    %863 = vmatprep.subr.mxu0 0.0
    %864 = vmatpush1.msra.mxu0 0.0
    %865 = vmatprep.subr.mxu0 0.0
    %866 = vmatpush1.msra.mxu0 0.0
    %867 = vmatprep.subr.mxu0 0.0
    %868 = vmatpush1.msra.mxu0 0.0
    %869 = vmatprep.subr.mxu0 0.0
    %870 = vmatpush1.msra.mxu0 0.0
    %871 = vmatprep.subr.mxu0 0.0
    %872 = vmatpush1.msra.mxu0 0.0
    %873 = vmatprep.subr.mxu0 0.0
    %874 = vmatpush1.msra.mxu0 0.0
    %875 = vmatprep.subr.mxu0 0.0
    %876 = vmatpush1.msra.mxu0 0.0
    %877 = vmatprep.subr.mxu0 %v833
    %878 = vmatpush1.msra.mxu0 %v832
    %879 = vmatprep.subr.mxu0 0.0
    %880 = vmatpush2.msra.mxu0 0.0
    %881 = vmatprep.subr.mxu0 0.0
    %882 = vmatpush2.msra.mxu0 0.0
    %883 = vmatprep.subr.mxu0 0.0
    %884 = vmatpush2.msra.mxu0 0.0
    %885 = vmatprep.subr.mxu0 0.0
    %886 = vmatpush2.msra.mxu0 0.0
    %887 = vmatprep.subr.mxu0 0.0
    %888 = vmatpush2.msra.mxu0 0.0
    %889 = vmatprep.subr.mxu0 0.0
    %890 = vmatpush2.msra.mxu0 0.0
    %891 = vmatprep.subr.mxu0 0.0
    %892 = vmatpush2.msra.mxu0 0.0
    %893 = vmatprep.subr.mxu0 0.0
    %894 = vmatpush2.msra.mxu0 0.0
    %895 = vmatprep.subr.mxu0 0.0
    %896 = vmatpush2.msra.mxu0 0.0
    %897 = vmatprep.subr.mxu0 0.0
    %898 = vmatpush2.msra.mxu0 0.0
    %899 = vmatprep.subr.mxu0 0.0
    %900 = vmatpush2.msra.mxu0 0.0
    %901 = vmatprep.subr.mxu0 0.0
    %902 = vmatpush2.msra.mxu0 0.0
    %903 = vmatprep.subr.mxu0 0.0
    %904 = vmatpush2.msra.mxu0 0.0
    %905 = vmatprep.subr.mxu0 0.0
    %906 = vmatpush2.msra.mxu0 0.0
    %907 = vmatprep.subr.mxu0 0.0
    %908 = vmatpush2.msra.mxu0 0.0
    %909 = vmatprep.subr.mxu0 0.0
    %910 = vmatpush2.msra.mxu0 0.0
    %911 = vmatprep.mubr.f32.mxu0 0.0
    %912 = vmatmul.mubr.f32.gmra.mxu0 %v845
    %v913 = vpop.f32.mrf.mxu0
    %v914 = vadd.f32 %v841, %v913
    %v915 = vpop.f32.mrf.mxu0
    %v916 = vadd.f32 %v841, %v915
    %917 = vdwg.mxu0
    %918 = vmatprep.subr.mxu0 0.0
    %919 = vmatpush1.msra.mxu0 0.0
    %920 = vmatprep.subr.mxu0 0.0
    %921 = vmatpush1.msra.mxu0 0.0
    %922 = vmatprep.subr.mxu0 0.0
    %923 = vmatpush1.msra.mxu0 0.0
    %924 = vmatprep.subr.mxu0 0.0
    %925 = vmatpush1.msra.mxu0 0.0
    %926 = vmatprep.subr.mxu0 0.0
    %927 = vmatpush1.msra.mxu0 0.0
    %928 = vmatprep.subr.mxu0 0.0
    %929 = vmatpush1.msra.mxu0 0.0
    %930 = vmatprep.subr.mxu0 0.0
    %931 = vmatpush1.msra.mxu0 0.0
    %932 = vmatprep.subr.mxu0 0.0
    %933 = vmatpush1.msra.mxu0 0.0
    %934 = vmatprep.subr.mxu0 0.0
    %935 = vmatpush1.msra.mxu0 0.0
    %936 = vmatprep.subr.mxu0 0.0
    %937 = vmatpush1.msra.mxu0 0.0
    %938 = vmatprep.subr.mxu0 0.0
    %939 = vmatpush1.msra.mxu0 0.0
    %940 = vmatprep.subr.mxu0 0.0
    %941 = vmatpush1.msra.mxu0 0.0
    %942 = vmatprep.subr.mxu0 0.0
    %943 = vmatpush1.msra.mxu0 0.0
    %944 = vmatprep.subr.mxu0 0.0
    %945 = vmatpush1.msra.mxu0 0.0
    %946 = vmatprep.subr.mxu0 0.0
    %947 = vmatpush1.msra.mxu0 0.0
    %948 = vmatprep.subr.mxu0 %v835
    %949 = vmatpush1.msra.mxu0 %v834
    %950 = vmatprep.subr.mxu0 0.0
    %951 = vmatpush2.msra.mxu0 0.0
    %952 = vmatprep.subr.mxu0 0.0
    %953 = vmatpush2.msra.mxu0 0.0
    %954 = vmatprep.subr.mxu0 0.0
    %955 = vmatpush2.msra.mxu0 0.0
    %956 = vmatprep.subr.mxu0 0.0
    %957 = vmatpush2.msra.mxu0 0.0
    %958 = vmatprep.subr.mxu0 0.0
    %959 = vmatpush2.msra.mxu0 0.0
    %960 = vmatprep.subr.mxu0 0.0
    %961 = vmatpush2.msra.mxu0 0.0
    %962 = vmatprep.subr.mxu0 0.0
    %963 = vmatpush2.msra.mxu0 0.0
    %964 = vmatprep.subr.mxu0 0.0
    %965 = vmatpush2.msra.mxu0 0.0
    %966 = vmatprep.subr.mxu0 0.0
    %967 = vmatpush2.msra.mxu0 0.0
    %968 = vmatprep.subr.mxu0 0.0
    %969 = vmatpush2.msra.mxu0 0.0
    %970 = vmatprep.subr.mxu0 0.0
    %971 = vmatpush2.msra.mxu0 0.0
    %972 = vmatprep.subr.mxu0 0.0
    %973 = vmatpush2.msra.mxu0 0.0
    %974 = vmatprep.subr.mxu0 0.0
    %975 = vmatpush2.msra.mxu0 0.0
    %976 = vmatprep.subr.mxu0 0.0
    %977 = vmatpush2.msra.mxu0 0.0
    %978 = vmatprep.subr.mxu0 0.0
    %979 = vmatpush2.msra.mxu0 0.0
    %980 = vmatprep.subr.mxu0 0.0
    %981 = vmatpush2.msra.mxu0 0.0
    %982 = vmatprep.mubr.f32.mxu0 0.0
    %983 = vmatmul.mubr.f32.gmra.mxu0 %v845
    %v984 = vpop.f32.mrf.mxu0
    %v985 = vadd.f32 %v841, %v984
    %v986 = vpop.f32.mrf.mxu0
    %v987 = vadd.f32 %v841, %v986
    %988 = vdwg.mxu0
    %v989 = vrot.slane %v914, 4
    %v990 = vmax.f32 %v914, %v989
    %v991 = vrot.slane %v990, 2
    %v992 = vmax.f32 %v990, %v991
    %v993 = vrot.slane %v992, 1
    %v994 = vmax.f32 %v992, %v993
    %v995 = vrot.slane %v916, 4
    %v996 = vmax.f32 %v916, %v995
    %v997 = vrot.slane %v996, 2
    %v998 = vmax.f32 %v996, %v997
    %v999 = vrot.slane %v998, 1
    %v1000 = vmax.f32 %v998, %v999
    %v1001 = vrot.slane %v985, 4
    %v1002 = vmax.f32 %v985, %v1001
    %v1003 = vrot.slane %v1002, 2
    %v1004 = vmax.f32 %v1002, %v1003
    %v1005 = vrot.slane %v1004, 1
    %v1006 = vmax.f32 %v1004, %v1005
    %v1007 = vrot.slane %v987, 4
    %v1008 = vmax.f32 %v987, %v1007
    %v1009 = vrot.slane %v1008, 2
    %v1010 = vmax.f32 %v1008, %v1009
    %v1011 = vrot.slane %v1010, 1
    %v1012 = vmax.f32 %v1010, %v1011
    %v1013 = vsub.f32 %v914, %v994
    %v1014 = vsub.f32 %v916, %v1000
    %v1015 = vsub.f32 %v985, %v1006
    %v1016 = vsub.f32 %v987, %v1012
    %v1017 = vmul.f32 %v1013, 1.442695
    %v1018 = vpow.pop %v1017
    %v1019 = vmul.f32 %v1014, 1.442695
    %v1020 = vpow.pop %v1019
    %v1021 = vmul.f32 %v1015, 1.442695
    %v1022 = vpow.pop %v1021
    %v1023 = vmul.f32 %v1016, 1.442695
    %v1024 = vpow.pop %v1023
    %v1025 = vrot.slane %v1018, 4
    %v1026 = vadd.f32 %v1018, %v1025
    %v1027 = vrot.slane %v1026, 2
    %v1028 = vadd.f32 %v1026, %v1027
    %v1029 = vrot.slane %v1028, 1
    %v1030 = vadd.f32 %v1028, %v1029
    %v1031 = vrot.slane %v1020, 4
    %v1032 = vadd.f32 %v1020, %v1031
    %v1033 = vrot.slane %v1032, 2
    %v1034 = vadd.f32 %v1032, %v1033
    %v1035 = vrot.slane %v1034, 1
    %v1036 = vadd.f32 %v1034, %v1035
    %v1037 = vrot.slane %v1022, 4
    %v1038 = vadd.f32 %v1022, %v1037
    %v1039 = vrot.slane %v1038, 2
    %v1040 = vadd.f32 %v1038, %v1039
    %v1041 = vrot.slane %v1040, 1
    %v1042 = vadd.f32 %v1040, %v1041
    %v1043 = vrot.slane %v1024, 4
    %v1044 = vadd.f32 %v1024, %v1043
    %v1045 = vrot.slane %v1044, 2
    %v1046 = vadd.f32 %v1044, %v1045
    %v1047 = vrot.slane %v1046, 1
    %v1048 = vadd.f32 %v1046, %v1047
    %v1049 = vrcp.pop %v1030
    %v1050 = vrcp.pop %v1036
    %v1051 = vrcp.pop %v1042
    %v1052 = vrcp.pop %v1048
    %v1053 = vmul.f32 %v1018, %v1049
    %v1054 = vmul.f32 %v1020, %v1050
    %v1055 = vmul.f32 %v1022, %v1051
    %v1056 = vmul.f32 %v1024, %v1052
    %v1057 = vmul.f32 %v121, %v1053
    %v1058 = vmul.f32 %v122, %v1054
    %v1059 = vmul.f32 %v123, %v1055
    %v1060 = vmul.f32 %v124, %v1056
    %v1061 = vmax.f32 %v1057, 0.0
    %v1062 = vmax.f32 %v1058, 0.0
    %v1063 = vmax.f32 %v1059, 0.0
    %v1064 = vmax.f32 %v1060, 0.0
    %1065 = vrot.lane.b32.xlu0 %v1061, 17
    %v1066 = vpop.permute.xlu0 %1065
    %1067 = vrot.lane.b32.xlu0 %v1062, 17
    %v1068 = vpop.permute.xlu0 %1067
    %1069 = vrot.lane.b32.xlu0 %v1063, 17
    %v1070 = vpop.permute.xlu0 %1069
    %1071 = vrot.lane.b32.xlu0 %v1064, 17
    %v1072 = vpop.permute.xlu0 %1071
    %v1073 = vsel %vm139, %v1070, %v1072
    %v1074 = vsel %vm139, %v1068, %v1070
    %v1075 = vsel %vm139, %v1066, %v1068
    %v1076 = vsel %vm139, %v1072, %v1066
    %v1077 = vmul.f32 %v1076, %v147
    %v1078 = vmul.f32 %v1075, %v151
    %v1079 = vmul.f32 %v1074, %v155
    %v1080 = vmul.f32 %v1073, %v159
    %1081 = vrot.lane.b32.xlu0 %v1061, 16
    %v1082 = vpop.permute.xlu0 %1081
    %1083 = vrot.lane.b32.xlu0 %v1062, 16
    %v1084 = vpop.permute.xlu0 %1083
    %1085 = vrot.lane.b32.xlu0 %v1063, 16
    %v1086 = vpop.permute.xlu0 %1085
    %1087 = vrot.lane.b32.xlu0 %v1064, 16
    %v1088 = vpop.permute.xlu0 %1087
    %v1089 = vsel %vm172, %v1086, %v1088
    %v1090 = vsel %vm172, %v1084, %v1086
    %v1091 = vsel %vm172, %v1082, %v1084
    %v1092 = vsel %vm172, %v1088, %v1082
    %v1093 = vmul.f32 %v1092, %v180
    %v1094 = vmul.f32 %v1091, %v184
    %v1095 = vmul.f32 %v1090, %v188
    %v1096 = vmul.f32 %v1089, %v192
    %1097 = vrot.lane.b32.xlu0 %v1061, 15
    %v1098 = vpop.permute.xlu0 %1097
    %1099 = vrot.lane.b32.xlu0 %v1062, 15
    %v1100 = vpop.permute.xlu0 %1099
    %1101 = vrot.lane.b32.xlu0 %v1063, 15
    %v1102 = vpop.permute.xlu0 %1101
    %1103 = vrot.lane.b32.xlu0 %v1064, 15
    %v1104 = vpop.permute.xlu0 %1103
    %v1105 = vsel %vm205, %v1102, %v1104
    %v1106 = vsel %vm205, %v1100, %v1102
    %v1107 = vsel %vm205, %v1098, %v1100
    %v1108 = vsel %vm205, %v1104, %v1098
    %v1109 = vmul.f32 %v1108, %v213
    %v1110 = vmul.f32 %v1107, %v217
    %v1111 = vmul.f32 %v1106, %v221
    %v1112 = vmul.f32 %v1105, %v225
    %1113 = vrot.lane.b32.xlu0 %v1061, 1
    %v1114 = vpop.permute.xlu0 %1113
    %1115 = vrot.lane.b32.xlu0 %v1062, 1
    %v1116 = vpop.permute.xlu0 %1115
    %1117 = vrot.lane.b32.xlu0 %v1063, 1
    %v1118 = vpop.permute.xlu0 %1117
    %1119 = vrot.lane.b32.xlu0 %v1064, 1
    %v1120 = vpop.permute.xlu0 %1119
    %v1121 = vsel %vm238, %v1118, %v1120
    %v1122 = vsel %vm238, %v1116, %v1118
    %v1123 = vsel %vm238, %v1114, %v1116
    %v1124 = vsel %vm238, %v1120, %v1114
    %v1125 = vmul.f32 %v1124, %v246
    %v1126 = vmul.f32 %v1123, %v250
    %v1127 = vmul.f32 %v1122, %v254
    %v1128 = vmul.f32 %v1121, %v258
    %1129 = vrot.lane.b32.xlu0 %v1061, 127
    %v1130 = vpop.permute.xlu0 %1129
    %1131 = vrot.lane.b32.xlu0 %v1062, 127
    %v1132 = vpop.permute.xlu0 %1131
    %1133 = vrot.lane.b32.xlu0 %v1063, 127
    %v1134 = vpop.permute.xlu0 %1133
    %1135 = vrot.lane.b32.xlu0 %v1064, 127
    %v1136 = vpop.permute.xlu0 %1135
    %v1137 = vsel %vm271, %v1134, %v1136
    %v1138 = vsel %vm271, %v1132, %v1134
    %v1139 = vsel %vm271, %v1130, %v1132
    %v1140 = vsel %vm271, %v1136, %v1130
    %v1141 = vmul.f32 %v1139, %v279
    %v1142 = vmul.f32 %v1138, %v283
    %v1143 = vmul.f32 %v1137, %v287
    %v1144 = vmul.f32 %v1140, %v291
    %1145 = vrot.lane.b32.xlu0 %v1061, 113
    %v1146 = vpop.permute.xlu0 %1145
    %1147 = vrot.lane.b32.xlu0 %v1062, 113
    %v1148 = vpop.permute.xlu0 %1147
    %1149 = vrot.lane.b32.xlu0 %v1063, 113
    %v1150 = vpop.permute.xlu0 %1149
    %1151 = vrot.lane.b32.xlu0 %v1064, 113
    %v1152 = vpop.permute.xlu0 %1151
    %v1153 = vsel %vm304, %v1150, %v1152
    %v1154 = vsel %vm304, %v1148, %v1150
    %v1155 = vsel %vm304, %v1146, %v1148
    %v1156 = vsel %vm304, %v1152, %v1146
    %v1157 = vmul.f32 %v1155, %v312
    %v1158 = vmul.f32 %v1154, %v316
    %v1159 = vmul.f32 %v1153, %v320
    %v1160 = vmul.f32 %v1156, %v324
    %1161 = vrot.lane.b32.xlu0 %v1061, 112
    %v1162 = vpop.permute.xlu0 %1161
    %1163 = vrot.lane.b32.xlu0 %v1062, 112
    %v1164 = vpop.permute.xlu0 %1163
    %1165 = vrot.lane.b32.xlu0 %v1063, 112
    %v1166 = vpop.permute.xlu0 %1165
    %1167 = vrot.lane.b32.xlu0 %v1064, 112
    %v1168 = vpop.permute.xlu0 %1167
    %v1169 = vsel %vm337, %v1166, %v1168
    %v1170 = vsel %vm337, %v1164, %v1166
    %v1171 = vsel %vm337, %v1162, %v1164
    %v1172 = vsel %vm337, %v1168, %v1162
    %v1173 = vmul.f32 %v1171, %v345
    %v1174 = vmul.f32 %v1170, %v349
    %v1175 = vmul.f32 %v1169, %v353
    %v1176 = vmul.f32 %v1172, %v357
    %1177 = vrot.lane.b32.xlu0 %v1061, 111
    %v1178 = vpop.permute.xlu0 %1177
    %1179 = vrot.lane.b32.xlu0 %v1062, 111
    %v1180 = vpop.permute.xlu0 %1179
    %1181 = vrot.lane.b32.xlu0 %v1063, 111
    %v1182 = vpop.permute.xlu0 %1181
    %1183 = vrot.lane.b32.xlu0 %v1064, 111
    %v1184 = vpop.permute.xlu0 %1183
    %v1185 = vsel %vm370, %v1182, %v1184
    %v1186 = vsel %vm370, %v1180, %v1182
    %v1187 = vsel %vm370, %v1178, %v1180
    %v1188 = vsel %vm370, %v1184, %v1178
    %v1189 = vmul.f32 %v1187, %v378
    %v1190 = vmul.f32 %v1186, %v382
    %v1191 = vmul.f32 %v1185, %v386
    %v1192 = vmul.f32 %v1188, %v390
    %v1193 = vld [vmem:[%s10] sm:$0xff]
    %v1194 = vld [vmem:[%s11] sm:$0xff]
    %1196 = vset.pattern.permute.xlu0 0
    %1197 = vperm.xlu0 %1196, %v1194
    %v1198 = vpop.permute.xlu0 %1197
    %v1201 = vsel %vm402, %v1193, 0
    %1203 = vmatprep.subr.mxu0 0.0
    %1204 = vmatpush1.msra.mxu0 0.0
    %1205 = vmatprep.subr.mxu0 0.0
    %1206 = vmatpush1.msra.mxu0 0.0
    %1207 = vmatprep.subr.mxu0 0.0
    %1208 = vmatpush1.msra.mxu0 0.0
    %1209 = vmatprep.subr.mxu0 0.0
    %1210 = vmatpush1.msra.mxu0 0.0
    %1211 = vmatprep.subr.mxu0 0.0
    %1212 = vmatpush1.msra.mxu0 0.0
    %1213 = vmatprep.subr.mxu0 0.0
    %1214 = vmatpush1.msra.mxu0 0.0
    %1215 = vmatprep.subr.mxu0 0.0
    %1216 = vmatpush1.msra.mxu0 0.0
    %1217 = vmatprep.subr.mxu0 %v1190
    %1218 = vmatpush1.msra.mxu0 %v1189
    %1219 = vmatprep.subr.mxu0 %v1174
    %1220 = vmatpush1.msra.mxu0 %v1173
    %1221 = vmatprep.subr.mxu0 %v1158
    %1222 = vmatpush1.msra.mxu0 %v1157
    %1223 = vmatprep.subr.mxu0 %v1142
    %1224 = vmatpush1.msra.mxu0 %v1141
    %1225 = vmatprep.subr.mxu0 %v1062
    %1226 = vmatpush1.msra.mxu0 %v1061
    %1227 = vmatprep.subr.mxu0 %v1126
    %1228 = vmatpush1.msra.mxu0 %v1125
    %1229 = vmatprep.subr.mxu0 %v1110
    %1230 = vmatpush1.msra.mxu0 %v1109
    %1231 = vmatprep.subr.mxu0 %v1094
    %1232 = vmatpush1.msra.mxu0 %v1093
    %1233 = vmatprep.subr.mxu0 %v1078
    %1234 = vmatpush1.msra.mxu0 %v1077
    %1235 = vmatprep.subr.mxu0 0.0
    %1236 = vmatpush2.msra.mxu0 0.0
    %1237 = vmatprep.subr.mxu0 0.0
    %1238 = vmatpush2.msra.mxu0 0.0
    %1239 = vmatprep.subr.mxu0 0.0
    %1240 = vmatpush2.msra.mxu0 0.0
    %1241 = vmatprep.subr.mxu0 0.0
    %1242 = vmatpush2.msra.mxu0 0.0
    %1243 = vmatprep.subr.mxu0 0.0
    %1244 = vmatpush2.msra.mxu0 0.0
    %1245 = vmatprep.subr.mxu0 0.0
    %1246 = vmatpush2.msra.mxu0 0.0
    %1247 = vmatprep.subr.mxu0 0.0
    %1248 = vmatpush2.msra.mxu0 0.0
    %1249 = vmatprep.subr.mxu0 0.0
    %1250 = vmatpush2.msra.mxu0 0.0
    %1251 = vmatprep.subr.mxu0 0.0
    %1252 = vmatpush2.msra.mxu0 0.0
    %1253 = vmatprep.subr.mxu0 0.0
    %1254 = vmatpush2.msra.mxu0 0.0
    %1255 = vmatprep.subr.mxu0 0.0
    %1256 = vmatpush2.msra.mxu0 0.0
    %1257 = vmatprep.subr.mxu0 0.0
    %1258 = vmatpush2.msra.mxu0 0.0
    %1259 = vmatprep.subr.mxu0 0.0
    %1260 = vmatpush2.msra.mxu0 0.0
    %1261 = vmatprep.subr.mxu0 0.0
    %1262 = vmatpush2.msra.mxu0 0.0
    %1263 = vmatprep.subr.mxu0 0.0
    %1264 = vmatpush2.msra.mxu0 0.0
    %1265 = vmatprep.subr.mxu0 0.0
    %1266 = vmatpush2.msra.mxu0 0.0
    %1267 = vmatprep.mubr.f32.mxu0 0.0
    %1268 = vmatmul.mubr.f32.gmra.mxu0 %v1201
    %v1269 = vpop.f32.mrf.mxu0
    %v1270 = vadd.f32 %v1198, %v1269
    %v1271 = vpop.f32.mrf.mxu0
    %v1272 = vadd.f32 %v1198, %v1271
    %1273 = vdwg.mxu0
    %1274 = vmatprep.subr.mxu0 0.0
    %1275 = vmatpush1.msra.mxu0 0.0
    %1276 = vmatprep.subr.mxu0 0.0
    %1277 = vmatpush1.msra.mxu0 0.0
    %1278 = vmatprep.subr.mxu0 0.0
    %1279 = vmatpush1.msra.mxu0 0.0
    %1280 = vmatprep.subr.mxu0 0.0
    %1281 = vmatpush1.msra.mxu0 0.0
    %1282 = vmatprep.subr.mxu0 0.0
    %1283 = vmatpush1.msra.mxu0 0.0
    %1284 = vmatprep.subr.mxu0 0.0
    %1285 = vmatpush1.msra.mxu0 0.0
    %1286 = vmatprep.subr.mxu0 0.0
    %1287 = vmatpush1.msra.mxu0 0.0
    %1288 = vmatprep.subr.mxu0 %v1192
    %1289 = vmatpush1.msra.mxu0 %v1191
    %1290 = vmatprep.subr.mxu0 %v1176
    %1291 = vmatpush1.msra.mxu0 %v1175
    %1292 = vmatprep.subr.mxu0 %v1160
    %1293 = vmatpush1.msra.mxu0 %v1159
    %1294 = vmatprep.subr.mxu0 %v1144
    %1295 = vmatpush1.msra.mxu0 %v1143
    %1296 = vmatprep.subr.mxu0 %v1064
    %1297 = vmatpush1.msra.mxu0 %v1063
    %1298 = vmatprep.subr.mxu0 %v1128
    %1299 = vmatpush1.msra.mxu0 %v1127
    %1300 = vmatprep.subr.mxu0 %v1112
    %1301 = vmatpush1.msra.mxu0 %v1111
    %1302 = vmatprep.subr.mxu0 %v1096
    %1303 = vmatpush1.msra.mxu0 %v1095
    %1304 = vmatprep.subr.mxu0 %v1080
    %1305 = vmatpush1.msra.mxu0 %v1079
    %1306 = vmatprep.subr.mxu0 0.0
    %1307 = vmatpush2.msra.mxu0 0.0
    %1308 = vmatprep.subr.mxu0 0.0
    %1309 = vmatpush2.msra.mxu0 0.0
    %1310 = vmatprep.subr.mxu0 0.0
    %1311 = vmatpush2.msra.mxu0 0.0
    %1312 = vmatprep.subr.mxu0 0.0
    %1313 = vmatpush2.msra.mxu0 0.0
    %1314 = vmatprep.subr.mxu0 0.0
    %1315 = vmatpush2.msra.mxu0 0.0
    %1316 = vmatprep.subr.mxu0 0.0
    %1317 = vmatpush2.msra.mxu0 0.0
    %1318 = vmatprep.subr.mxu0 0.0
    %1319 = vmatpush2.msra.mxu0 0.0
    %1320 = vmatprep.subr.mxu0 0.0
    %1321 = vmatpush2.msra.mxu0 0.0
    %1322 = vmatprep.subr.mxu0 0.0
    %1323 = vmatpush2.msra.mxu0 0.0
    %1324 = vmatprep.subr.mxu0 0.0
    %1325 = vmatpush2.msra.mxu0 0.0
    %1326 = vmatprep.subr.mxu0 0.0
    %1327 = vmatpush2.msra.mxu0 0.0
    %1328 = vmatprep.subr.mxu0 0.0
    %1329 = vmatpush2.msra.mxu0 0.0
    %1330 = vmatprep.subr.mxu0 0.0
    %1331 = vmatpush2.msra.mxu0 0.0
    %1332 = vmatprep.subr.mxu0 0.0
    %1333 = vmatpush2.msra.mxu0 0.0
    %1334 = vmatprep.subr.mxu0 0.0
    %1335 = vmatpush2.msra.mxu0 0.0
    %1336 = vmatprep.subr.mxu0 0.0
    %1337 = vmatpush2.msra.mxu0 0.0
    %1338 = vmatprep.mubr.f32.mxu0 0.0
    %1339 = vmatmul.mubr.f32.gmra.mxu0 %v1201
    %v1340 = vpop.f32.mrf.mxu0
    %v1341 = vadd.f32 %v1198, %v1340
    %v1342 = vpop.f32.mrf.mxu0
    %v1343 = vadd.f32 %v1198, %v1342
    %1344 = vdwg.mxu0
    %v1345 = vmax.f32 %v1270, 0.0
    %v1346 = vmax.f32 %v1272, 0.0
    %v1347 = vmax.f32 %v1341, 0.0
    %v1348 = vmax.f32 %v1343, 0.0
    %1349 = vrot.lane.b32.xlu0 %v1345, 17
    %v1350 = vpop.permute.xlu0 %1349
    %1351 = vrot.lane.b32.xlu0 %v1346, 17
    %v1352 = vpop.permute.xlu0 %1351
    %1353 = vrot.lane.b32.xlu0 %v1347, 17
    %v1354 = vpop.permute.xlu0 %1353
    %1355 = vrot.lane.b32.xlu0 %v1348, 17
    %v1356 = vpop.permute.xlu0 %1355
    %v1357 = vsel %vm139, %v1354, %v1356
    %v1358 = vsel %vm139, %v1352, %v1354
    %v1359 = vsel %vm139, %v1350, %v1352
    %v1360 = vsel %vm139, %v1356, %v1350
    %v1361 = vmul.f32 %v1360, %v147
    %v1362 = vmul.f32 %v1359, %v151
    %v1363 = vmul.f32 %v1358, %v155
    %v1364 = vmul.f32 %v1357, %v159
    %1365 = vrot.lane.b32.xlu0 %v1345, 16
    %v1366 = vpop.permute.xlu0 %1365
    %1367 = vrot.lane.b32.xlu0 %v1346, 16
    %v1368 = vpop.permute.xlu0 %1367
    %1369 = vrot.lane.b32.xlu0 %v1347, 16
    %v1370 = vpop.permute.xlu0 %1369
    %1371 = vrot.lane.b32.xlu0 %v1348, 16
    %v1372 = vpop.permute.xlu0 %1371
    %v1373 = vsel %vm172, %v1370, %v1372
    %v1374 = vsel %vm172, %v1368, %v1370
    %v1375 = vsel %vm172, %v1366, %v1368
    %v1376 = vsel %vm172, %v1372, %v1366
    %v1377 = vmul.f32 %v1376, %v180
    %v1378 = vmul.f32 %v1375, %v184
    %v1379 = vmul.f32 %v1374, %v188
    %v1380 = vmul.f32 %v1373, %v192
    %1381 = vrot.lane.b32.xlu0 %v1345, 15
    %v1382 = vpop.permute.xlu0 %1381
    %1383 = vrot.lane.b32.xlu0 %v1346, 15
    %v1384 = vpop.permute.xlu0 %1383
    %1385 = vrot.lane.b32.xlu0 %v1347, 15
    %v1386 = vpop.permute.xlu0 %1385
    %1387 = vrot.lane.b32.xlu0 %v1348, 15
    %v1388 = vpop.permute.xlu0 %1387
    %v1389 = vsel %vm205, %v1386, %v1388
    %v1390 = vsel %vm205, %v1384, %v1386
    %v1391 = vsel %vm205, %v1382, %v1384
    %v1392 = vsel %vm205, %v1388, %v1382
    %v1393 = vmul.f32 %v1392, %v213
    %v1394 = vmul.f32 %v1391, %v217
    %v1395 = vmul.f32 %v1390, %v221
    %v1396 = vmul.f32 %v1389, %v225
    %1397 = vrot.lane.b32.xlu0 %v1345, 1
    %v1398 = vpop.permute.xlu0 %1397
    %1399 = vrot.lane.b32.xlu0 %v1346, 1
    %v1400 = vpop.permute.xlu0 %1399
    %1401 = vrot.lane.b32.xlu0 %v1347, 1
    %v1402 = vpop.permute.xlu0 %1401
    %1403 = vrot.lane.b32.xlu0 %v1348, 1
    %v1404 = vpop.permute.xlu0 %1403
    %v1405 = vsel %vm238, %v1402, %v1404
    %v1406 = vsel %vm238, %v1400, %v1402
    %v1407 = vsel %vm238, %v1398, %v1400
    %v1408 = vsel %vm238, %v1404, %v1398
    %v1409 = vmul.f32 %v1408, %v246
    %v1410 = vmul.f32 %v1407, %v250
    %v1411 = vmul.f32 %v1406, %v254
    %v1412 = vmul.f32 %v1405, %v258
    %1413 = vrot.lane.b32.xlu0 %v1345, 127
    %v1414 = vpop.permute.xlu0 %1413
    %1415 = vrot.lane.b32.xlu0 %v1346, 127
    %v1416 = vpop.permute.xlu0 %1415
    %1417 = vrot.lane.b32.xlu0 %v1347, 127
    %v1418 = vpop.permute.xlu0 %1417
    %1419 = vrot.lane.b32.xlu0 %v1348, 127
    %v1420 = vpop.permute.xlu0 %1419
    %v1421 = vsel %vm271, %v1418, %v1420
    %v1422 = vsel %vm271, %v1416, %v1418
    %v1423 = vsel %vm271, %v1414, %v1416
    %v1424 = vsel %vm271, %v1420, %v1414
    %v1425 = vmul.f32 %v1423, %v279
    %v1426 = vmul.f32 %v1422, %v283
    %v1427 = vmul.f32 %v1421, %v287
    %v1428 = vmul.f32 %v1424, %v291
    %1429 = vrot.lane.b32.xlu0 %v1345, 113
    %v1430 = vpop.permute.xlu0 %1429
    %1431 = vrot.lane.b32.xlu0 %v1346, 113
    %v1432 = vpop.permute.xlu0 %1431
    %1433 = vrot.lane.b32.xlu0 %v1347, 113
    %v1434 = vpop.permute.xlu0 %1433
    %1435 = vrot.lane.b32.xlu0 %v1348, 113
    %v1436 = vpop.permute.xlu0 %1435
    %v1437 = vsel %vm304, %v1434, %v1436
    %v1438 = vsel %vm304, %v1432, %v1434
    %v1439 = vsel %vm304, %v1430, %v1432
    %v1440 = vsel %vm304, %v1436, %v1430
    %v1441 = vmul.f32 %v1439, %v312
    %v1442 = vmul.f32 %v1438, %v316
    %v1443 = vmul.f32 %v1437, %v320
    %v1444 = vmul.f32 %v1440, %v324
    %1445 = vrot.lane.b32.xlu0 %v1345, 112
    %v1446 = vpop.permute.xlu0 %1445
    %1447 = vrot.lane.b32.xlu0 %v1346, 112
    %v1448 = vpop.permute.xlu0 %1447
    %1449 = vrot.lane.b32.xlu0 %v1347, 112
    %v1450 = vpop.permute.xlu0 %1449
    %1451 = vrot.lane.b32.xlu0 %v1348, 112
    %v1452 = vpop.permute.xlu0 %1451
    %v1453 = vsel %vm337, %v1450, %v1452
    %v1454 = vsel %vm337, %v1448, %v1450
    %v1455 = vsel %vm337, %v1446, %v1448
    %v1456 = vsel %vm337, %v1452, %v1446
    %v1457 = vmul.f32 %v1455, %v345
    %v1458 = vmul.f32 %v1454, %v349
    %v1459 = vmul.f32 %v1453, %v353
    %v1460 = vmul.f32 %v1456, %v357
    %1461 = vrot.lane.b32.xlu0 %v1345, 111
    %v1462 = vpop.permute.xlu0 %1461
    %1463 = vrot.lane.b32.xlu0 %v1346, 111
    %v1464 = vpop.permute.xlu0 %1463
    %1465 = vrot.lane.b32.xlu0 %v1347, 111
    %v1466 = vpop.permute.xlu0 %1465
    %1467 = vrot.lane.b32.xlu0 %v1348, 111
    %v1468 = vpop.permute.xlu0 %1467
    %v1469 = vsel %vm370, %v1466, %v1468
    %v1470 = vsel %vm370, %v1464, %v1466
    %v1471 = vsel %vm370, %v1462, %v1464
    %v1472 = vsel %vm370, %v1468, %v1462
    %v1473 = vmul.f32 %v1471, %v378
    %v1474 = vmul.f32 %v1470, %v382
    %v1475 = vmul.f32 %v1469, %v386
    %v1476 = vmul.f32 %v1472, %v390
    %v1477 = vld [vmem:[%s12] sm:$0xff]
    %v1478 = vld [vmem:[%s13] sm:$0xff]
    %1480 = vset.pattern.permute.xlu0 0
    %1481 = vperm.xlu0 %1480, %v1478
    %v1482 = vpop.permute.xlu0 %1481
    %v1485 = vsel %vm402, %v1477, 0
    %1487 = vmatprep.subr.mxu0 0.0
    %1488 = vmatpush1.msra.mxu0 0.0
    %1489 = vmatprep.subr.mxu0 0.0
    %1490 = vmatpush1.msra.mxu0 0.0
    %1491 = vmatprep.subr.mxu0 0.0
    %1492 = vmatpush1.msra.mxu0 0.0
    %1493 = vmatprep.subr.mxu0 0.0
    %1494 = vmatpush1.msra.mxu0 0.0
    %1495 = vmatprep.subr.mxu0 0.0
    %1496 = vmatpush1.msra.mxu0 0.0
    %1497 = vmatprep.subr.mxu0 0.0
    %1498 = vmatpush1.msra.mxu0 0.0
    %1499 = vmatprep.subr.mxu0 0.0
    %1500 = vmatpush1.msra.mxu0 0.0
    %1501 = vmatprep.subr.mxu0 %v1474
    %1502 = vmatpush1.msra.mxu0 %v1473
    %1503 = vmatprep.subr.mxu0 %v1458
    %1504 = vmatpush1.msra.mxu0 %v1457
    %1505 = vmatprep.subr.mxu0 %v1442
    %1506 = vmatpush1.msra.mxu0 %v1441
    %1507 = vmatprep.subr.mxu0 %v1426
    %1508 = vmatpush1.msra.mxu0 %v1425
    %1509 = vmatprep.subr.mxu0 %v1346
    %1510 = vmatpush1.msra.mxu0 %v1345
    %1511 = vmatprep.subr.mxu0 %v1410
    %1512 = vmatpush1.msra.mxu0 %v1409
    %1513 = vmatprep.subr.mxu0 %v1394
    %1514 = vmatpush1.msra.mxu0 %v1393
    %1515 = vmatprep.subr.mxu0 %v1378
    %1516 = vmatpush1.msra.mxu0 %v1377
    %1517 = vmatprep.subr.mxu0 %v1362
    %1518 = vmatpush1.msra.mxu0 %v1361
    %1519 = vmatprep.subr.mxu0 0.0
    %1520 = vmatpush2.msra.mxu0 0.0
    %1521 = vmatprep.subr.mxu0 0.0
    %1522 = vmatpush2.msra.mxu0 0.0
    %1523 = vmatprep.subr.mxu0 0.0
    %1524 = vmatpush2.msra.mxu0 0.0
    %1525 = vmatprep.subr.mxu0 0.0
    %1526 = vmatpush2.msra.mxu0 0.0
    %1527 = vmatprep.subr.mxu0 0.0
    %1528 = vmatpush2.msra.mxu0 0.0
    %1529 = vmatprep.subr.mxu0 0.0
    %1530 = vmatpush2.msra.mxu0 0.0
    %1531 = vmatprep.subr.mxu0 0.0
    %1532 = vmatpush2.msra.mxu0 0.0
    %1533 = vmatprep.subr.mxu0 0.0
    %1534 = vmatpush2.msra.mxu0 0.0
    %1535 = vmatprep.subr.mxu0 0.0
    %1536 = vmatpush2.msra.mxu0 0.0
    %1537 = vmatprep.subr.mxu0 0.0
    %1538 = vmatpush2.msra.mxu0 0.0
    %1539 = vmatprep.subr.mxu0 0.0
    %1540 = vmatpush2.msra.mxu0 0.0
    %1541 = vmatprep.subr.mxu0 0.0
    %1542 = vmatpush2.msra.mxu0 0.0
    %1543 = vmatprep.subr.mxu0 0.0
    %1544 = vmatpush2.msra.mxu0 0.0
    %1545 = vmatprep.subr.mxu0 0.0
    %1546 = vmatpush2.msra.mxu0 0.0
    %1547 = vmatprep.subr.mxu0 0.0
    %1548 = vmatpush2.msra.mxu0 0.0
    %1549 = vmatprep.subr.mxu0 0.0
    %1550 = vmatpush2.msra.mxu0 0.0
    %1551 = vmatprep.mubr.f32.mxu0 0.0
    %1552 = vmatmul.mubr.f32.gmra.mxu0 %v1485
    %v1553 = vpop.f32.mrf.mxu0
    %v1554 = vadd.f32 %v1482, %v1553
    %v1555 = vpop.f32.mrf.mxu0
    %v1556 = vadd.f32 %v1482, %v1555
    %1557 = vdwg.mxu0
    %1558 = vmatprep.subr.mxu0 0.0
    %1559 = vmatpush1.msra.mxu0 0.0
    %1560 = vmatprep.subr.mxu0 0.0
    %1561 = vmatpush1.msra.mxu0 0.0
    %1562 = vmatprep.subr.mxu0 0.0
    %1563 = vmatpush1.msra.mxu0 0.0
    %1564 = vmatprep.subr.mxu0 0.0
    %1565 = vmatpush1.msra.mxu0 0.0
    %1566 = vmatprep.subr.mxu0 0.0
    %1567 = vmatpush1.msra.mxu0 0.0
    %1568 = vmatprep.subr.mxu0 0.0
    %1569 = vmatpush1.msra.mxu0 0.0
    %1570 = vmatprep.subr.mxu0 0.0
    %1571 = vmatpush1.msra.mxu0 0.0
    %1572 = vmatprep.subr.mxu0 %v1476
    %1573 = vmatpush1.msra.mxu0 %v1475
    %1574 = vmatprep.subr.mxu0 %v1460
    %1575 = vmatpush1.msra.mxu0 %v1459
    %1576 = vmatprep.subr.mxu0 %v1444
    %1577 = vmatpush1.msra.mxu0 %v1443
    %1578 = vmatprep.subr.mxu0 %v1428
    %1579 = vmatpush1.msra.mxu0 %v1427
    %1580 = vmatprep.subr.mxu0 %v1348
    %1581 = vmatpush1.msra.mxu0 %v1347
    %1582 = vmatprep.subr.mxu0 %v1412
    %1583 = vmatpush1.msra.mxu0 %v1411
    %1584 = vmatprep.subr.mxu0 %v1396
    %1585 = vmatpush1.msra.mxu0 %v1395
    %1586 = vmatprep.subr.mxu0 %v1380
    %1587 = vmatpush1.msra.mxu0 %v1379
    %1588 = vmatprep.subr.mxu0 %v1364
    %1589 = vmatpush1.msra.mxu0 %v1363
    %1590 = vmatprep.subr.mxu0 0.0
    %1591 = vmatpush2.msra.mxu0 0.0
    %1592 = vmatprep.subr.mxu0 0.0
    %1593 = vmatpush2.msra.mxu0 0.0
    %1594 = vmatprep.subr.mxu0 0.0
    %1595 = vmatpush2.msra.mxu0 0.0
    %1596 = vmatprep.subr.mxu0 0.0
    %1597 = vmatpush2.msra.mxu0 0.0
    %1598 = vmatprep.subr.mxu0 0.0
    %1599 = vmatpush2.msra.mxu0 0.0
    %1600 = vmatprep.subr.mxu0 0.0
    %1601 = vmatpush2.msra.mxu0 0.0
    %1602 = vmatprep.subr.mxu0 0.0
    %1603 = vmatpush2.msra.mxu0 0.0
    %1604 = vmatprep.subr.mxu0 0.0
    %1605 = vmatpush2.msra.mxu0 0.0
    %1606 = vmatprep.subr.mxu0 0.0
    %1607 = vmatpush2.msra.mxu0 0.0
    %1608 = vmatprep.subr.mxu0 0.0
    %1609 = vmatpush2.msra.mxu0 0.0
    %1610 = vmatprep.subr.mxu0 0.0
    %1611 = vmatpush2.msra.mxu0 0.0
    %1612 = vmatprep.subr.mxu0 0.0
    %1613 = vmatpush2.msra.mxu0 0.0
    %1614 = vmatprep.subr.mxu0 0.0
    %1615 = vmatpush2.msra.mxu0 0.0
    %1616 = vmatprep.subr.mxu0 0.0
    %1617 = vmatpush2.msra.mxu0 0.0
    %1618 = vmatprep.subr.mxu0 0.0
    %1619 = vmatpush2.msra.mxu0 0.0
    %1620 = vmatprep.subr.mxu0 0.0
    %1621 = vmatpush2.msra.mxu0 0.0
    %1622 = vmatprep.mubr.f32.mxu0 0.0
    %1623 = vmatmul.mubr.f32.gmra.mxu0 %v1485
    %v1624 = vpop.f32.mrf.mxu0
    %v1625 = vadd.f32 %v1482, %v1624
    %v1626 = vpop.f32.mrf.mxu0
    %v1627 = vadd.f32 %v1482, %v1626
    %1628 = vdwg.mxu0
    %v1629 = vadd.f32 %v1554, %v1057
    %v1630 = vadd.f32 %v1556, %v1058
    %v1631 = vadd.f32 %v1625, %v1059
    %v1632 = vadd.f32 %v1627, %v1060
    %v1633 = vadd.f32 %v1629, %v121
    %v1634 = vadd.f32 %v1630, %v122
    %v1635 = vadd.f32 %v1631, %v123
    %v1636 = vadd.f32 %v1632, %v124
    %v1637 = vld [vmem:[#allocation8] sm:$0xff]
    %v1639 = vsel %vm843, %v1637, 0
    %1641 = vmatprep.subr.mxu0 0.0
    %1642 = vmatpush1.msra.mxu0 0.0
    %1643 = vmatprep.subr.mxu0 0.0
    %1644 = vmatpush1.msra.mxu0 0.0
    %1645 = vmatprep.subr.mxu0 0.0
    %1646 = vmatpush1.msra.mxu0 0.0
    %1647 = vmatprep.subr.mxu0 0.0
    %1648 = vmatpush1.msra.mxu0 0.0
    %1649 = vmatprep.subr.mxu0 0.0
    %1650 = vmatpush1.msra.mxu0 0.0
    %1651 = vmatprep.subr.mxu0 0.0
    %1652 = vmatpush1.msra.mxu0 0.0
    %1653 = vmatprep.subr.mxu0 0.0
    %1654 = vmatpush1.msra.mxu0 0.0
    %1655 = vmatprep.subr.mxu0 0.0
    %1656 = vmatpush1.msra.mxu0 0.0
    %1657 = vmatprep.subr.mxu0 0.0
    %1658 = vmatpush1.msra.mxu0 0.0
    %1659 = vmatprep.subr.mxu0 0.0
    %1660 = vmatpush1.msra.mxu0 0.0
    %1661 = vmatprep.subr.mxu0 0.0
    %1662 = vmatpush1.msra.mxu0 0.0
    %1663 = vmatprep.subr.mxu0 0.0
    %1664 = vmatpush1.msra.mxu0 0.0
    %1665 = vmatprep.subr.mxu0 0.0
    %1666 = vmatpush1.msra.mxu0 0.0
    %1667 = vmatprep.subr.mxu0 0.0
    %1668 = vmatpush1.msra.mxu0 0.0
    %1669 = vmatprep.subr.mxu0 0.0
    %1670 = vmatpush1.msra.mxu0 0.0
    %1671 = vmatprep.subr.mxu0 %v1634
    %1672 = vmatpush1.msra.mxu0 %v1633
    %1673 = vmatprep.subr.mxu0 0.0
    %1674 = vmatpush2.msra.mxu0 0.0
    %1675 = vmatprep.subr.mxu0 0.0
    %1676 = vmatpush2.msra.mxu0 0.0
    %1677 = vmatprep.subr.mxu0 0.0
    %1678 = vmatpush2.msra.mxu0 0.0
    %1679 = vmatprep.subr.mxu0 0.0
    %1680 = vmatpush2.msra.mxu0 0.0
    %1681 = vmatprep.subr.mxu0 0.0
    %1682 = vmatpush2.msra.mxu0 0.0
    %1683 = vmatprep.subr.mxu0 0.0
    %1684 = vmatpush2.msra.mxu0 0.0
    %1685 = vmatprep.subr.mxu0 0.0
    %1686 = vmatpush2.msra.mxu0 0.0
    %1687 = vmatprep.subr.mxu0 0.0
    %1688 = vmatpush2.msra.mxu0 0.0
    %1689 = vmatprep.subr.mxu0 0.0
    %1690 = vmatpush2.msra.mxu0 0.0
    %1691 = vmatprep.subr.mxu0 0.0
    %1692 = vmatpush2.msra.mxu0 0.0
    %1693 = vmatprep.subr.mxu0 0.0
    %1694 = vmatpush2.msra.mxu0 0.0
    %1695 = vmatprep.subr.mxu0 0.0
    %1696 = vmatpush2.msra.mxu0 0.0
    %1697 = vmatprep.subr.mxu0 0.0
    %1698 = vmatpush2.msra.mxu0 0.0
    %1699 = vmatprep.subr.mxu0 0.0
    %1700 = vmatpush2.msra.mxu0 0.0
    %1701 = vmatprep.subr.mxu0 0.0
    %1702 = vmatpush2.msra.mxu0 0.0
    %1703 = vmatprep.subr.mxu0 0.0
    %1704 = vmatpush2.msra.mxu0 0.0
    %1705 = vmatprep.mubr.f32.mxu0 0.0
    %1706 = vmatmul.mubr.f32.gmra.mxu0 %v1639
    %v1707 = vpop.f32.mrf.mxu0
    %v1708 = vadd.f32 0.0, %v1707
    %v1709 = vpop.f32.mrf.mxu0
    %v1710 = vadd.f32 0.0, %v1709
    %1711 = vdwg.mxu0
    %1712 = vmatprep.subr.mxu0 0.0
    %1713 = vmatpush1.msra.mxu0 0.0
    %1714 = vmatprep.subr.mxu0 0.0
    %1715 = vmatpush1.msra.mxu0 0.0
    %1716 = vmatprep.subr.mxu0 0.0
    %1717 = vmatpush1.msra.mxu0 0.0
    %1718 = vmatprep.subr.mxu0 0.0
    %1719 = vmatpush1.msra.mxu0 0.0
    %1720 = vmatprep.subr.mxu0 0.0
    %1721 = vmatpush1.msra.mxu0 0.0
    %1722 = vmatprep.subr.mxu0 0.0
    %1723 = vmatpush1.msra.mxu0 0.0
    %1724 = vmatprep.subr.mxu0 0.0
    %1725 = vmatpush1.msra.mxu0 0.0
    %1726 = vmatprep.subr.mxu0 0.0
    %1727 = vmatpush1.msra.mxu0 0.0
    %1728 = vmatprep.subr.mxu0 0.0
    %1729 = vmatpush1.msra.mxu0 0.0
    %1730 = vmatprep.subr.mxu0 0.0
    %1731 = vmatpush1.msra.mxu0 0.0
    %1732 = vmatprep.subr.mxu0 0.0
    %1733 = vmatpush1.msra.mxu0 0.0
    %1734 = vmatprep.subr.mxu0 0.0
    %1735 = vmatpush1.msra.mxu0 0.0
    %1736 = vmatprep.subr.mxu0 0.0
    %1737 = vmatpush1.msra.mxu0 0.0
    %1738 = vmatprep.subr.mxu0 0.0
    %1739 = vmatpush1.msra.mxu0 0.0
    %1740 = vmatprep.subr.mxu0 0.0
    %1741 = vmatpush1.msra.mxu0 0.0
    %1742 = vmatprep.subr.mxu0 %v1636
    %1743 = vmatpush1.msra.mxu0 %v1635
    %1744 = vmatprep.subr.mxu0 0.0
    %1745 = vmatpush2.msra.mxu0 0.0
    %1746 = vmatprep.subr.mxu0 0.0
    %1747 = vmatpush2.msra.mxu0 0.0
    %1748 = vmatprep.subr.mxu0 0.0
    %1749 = vmatpush2.msra.mxu0 0.0
    %1750 = vmatprep.subr.mxu0 0.0
    %1751 = vmatpush2.msra.mxu0 0.0
    %1752 = vmatprep.subr.mxu0 0.0
    %1753 = vmatpush2.msra.mxu0 0.0
    %1754 = vmatprep.subr.mxu0 0.0
    %1755 = vmatpush2.msra.mxu0 0.0
    %1756 = vmatprep.subr.mxu0 0.0
    %1757 = vmatpush2.msra.mxu0 0.0
    %1758 = vmatprep.subr.mxu0 0.0
    %1759 = vmatpush2.msra.mxu0 0.0
    %1760 = vmatprep.subr.mxu0 0.0
    %1761 = vmatpush2.msra.mxu0 0.0
    %1762 = vmatprep.subr.mxu0 0.0
    %1763 = vmatpush2.msra.mxu0 0.0
    %1764 = vmatprep.subr.mxu0 0.0
    %1765 = vmatpush2.msra.mxu0 0.0
    %1766 = vmatprep.subr.mxu0 0.0
    %1767 = vmatpush2.msra.mxu0 0.0
    %1768 = vmatprep.subr.mxu0 0.0
    %1769 = vmatpush2.msra.mxu0 0.0
    %1770 = vmatprep.subr.mxu0 0.0
    %1771 = vmatpush2.msra.mxu0 0.0
    %1772 = vmatprep.subr.mxu0 0.0
    %1773 = vmatpush2.msra.mxu0 0.0
    %1774 = vmatprep.subr.mxu0 0.0
    %1775 = vmatpush2.msra.mxu0 0.0
    %1776 = vmatprep.mubr.f32.mxu0 0.0
    %1777 = vmatmul.mubr.f32.gmra.mxu0 %v1639
    %v1778 = vpop.f32.mrf.mxu0
    %v1779 = vadd.f32 0.0, %v1778
    %v1780 = vpop.f32.mrf.mxu0
    %v1781 = vadd.f32 0.0, %v1780
    %1782 = vdwg.mxu0
    %v1783 = vld [vmem:[#allocation5] sm:$0xff]
    %v1784 = vld [vmem:[#allocation5 + $0x8] sm:$0xff]
    %v1785 = vld [vmem:[#allocation5 + $0x10] sm:$0xff]
    %v1786 = vld [vmem:[#allocation5 + $0x18] sm:$0xff]
    %v1787 = vld [vmem:[#allocation5 + $0x20] sm:$0xff]
    %v1788 = vld [vmem:[#allocation5 + $0x28] sm:$0xff]
    %v1789 = vld [vmem:[#allocation5 + $0x30] sm:$0xff]
    %v1790 = vld [vmem:[#allocation5 + $0x38] sm:$0xff]
    %v1791 = vld [vmem:[#allocation5 + $0x40] sm:$0xff]
    %v1792 = vld [vmem:[#allocation5 + $0x48] sm:$0xff]
    %v1793 = vld [vmem:[#allocation5 + $0x50] sm:$0xff]
    %v1794 = vld [vmem:[#allocation5 + $0x58] sm:$0xff]
    %v1795 = vld [vmem:[#allocation5 + $0x60] sm:$0xff]
    %v1796 = vld [vmem:[#allocation5 + $0x68] sm:$0xff]
    %v1797 = vld [vmem:[#allocation5 + $0x70] sm:$0xff]
    %v1798 = vld [vmem:[#allocation5 + $0x78] sm:$0xff]
    %v1799 = vld [vmem:[#allocation5 + $0x80] sm:$0xff]
    %v1800 = vld [vmem:[#allocation5 + $0x88] sm:$0xff]
    %v1801 = vld [vmem:[#allocation5 + $0x90] sm:$0xff]
    %v1802 = vld [vmem:[#allocation5 + $0x98] sm:$0xff]
    %v1803 = vld [vmem:[#allocation5 + $0xa0] sm:$0xff]
    %v1804 = vld [vmem:[#allocation5 + $0xa8] sm:$0xff]
    %v1805 = vld [vmem:[#allocation5 + $0xb0] sm:$0xff]
    %v1806 = vld [vmem:[#allocation5 + $0xb8] sm:$0xff]
    %v1807 = vld [vmem:[#allocation5 + $0xc0] sm:$0xff]
    %v1808 = vld [vmem:[#allocation5 + $0xc8] sm:$0xff]
    %v1809 = vld [vmem:[#allocation5 + $0xd0] sm:$0xff]
    %v1810 = vld [vmem:[#allocation5 + $0xd8] sm:$0xff]
    %v1811 = vld [vmem:[#allocation5 + $0xe0] sm:$0xff]
    %v1812 = vld [vmem:[#allocation5 + $0xe8] sm:$0xff]
    %v1813 = vld [vmem:[#allocation5 + $0xf0] sm:$0xff]
    %v1814 = vld [vmem:[#allocation5 + $0xf8] sm:$0xff]
    %v1815 = vld [vmem:[#allocation5 + $0x100] sm:$0xff]
    %v1816 = vld [vmem:[#allocation5 + $0x108] sm:$0xff]
    %v1817 = vld [vmem:[#allocation5 + $0x110] sm:$0xff]
    %v1818 = vld [vmem:[#allocation5 + $0x118] sm:$0xff]
    %v1819 = vld [vmem:[#allocation5 + $0x120] sm:$0xff]
    %v1820 = vld [vmem:[#allocation5 + $0x128] sm:$0xff]
    %v1821 = vld [vmem:[#allocation5 + $0x130] sm:$0xff]
    %v1822 = vld [vmem:[#allocation5 + $0x138] sm:$0xff]
    %v1823 = vld [vmem:[#allocation5 + $0x140] sm:$0xff]
    %v1824 = vld [vmem:[#allocation5 + $0x148] sm:$0xff]
    %v1825 = vld [vmem:[#allocation5 + $0x150] sm:$0xff]
    %v1826 = vld [vmem:[#allocation5 + $0x158] sm:$0xff]
    %v1827 = vld [vmem:[#allocation5 + $0x160] sm:$0xff]
    %v1828 = vld [vmem:[#allocation5 + $0x168] sm:$0xff]
    %v1829 = vld [vmem:[#allocation5 + $0x170] sm:$0xff]
    %v1830 = vld [vmem:[#allocation5 + $0x178] sm:$0xff]
    %v1831 = vld [vmem:[#allocation5 + $0x180] sm:$0xff]
    %v1832 = vld [vmem:[#allocation5 + $0x188] sm:$0xff]
    %v1833 = vld [vmem:[#allocation5 + $0x190] sm:$0xff]
    %v1834 = vld [vmem:[#allocation5 + $0x198] sm:$0xff]
    %v1835 = vld [vmem:[#allocation5 + $0x1a0] sm:$0xff]
    %v1836 = vld [vmem:[#allocation5 + $0x1a8] sm:$0xff]
    %v1837 = vld [vmem:[#allocation5 + $0x1b0] sm:$0xff]
    %v1838 = vld [vmem:[#allocation5 + $0x1b8] sm:$0xff]
    %v1839 = vld [vmem:[#allocation5 + $0x1c0] sm:$0xff]
    %v1840 = vld [vmem:[#allocation5 + $0x1c8] sm:$0xff]
    %v1841 = vld [vmem:[#allocation5 + $0x1d0] sm:$0xff]
    %v1842 = vld [vmem:[#allocation5 + $0x1d8] sm:$0xff]
    %v1843 = vld [vmem:[#allocation5 + $0x1e0] sm:$0xff]
    %v1844 = vld [vmem:[#allocation5 + $0x1e8] sm:$0xff]
    %v1845 = vld [vmem:[#allocation5 + $0x1f0] sm:$0xff]
    %v1846 = vld [vmem:[#allocation5 + $0x1f8] sm:$0xff]
    %v1847 = vld [vmem:[#allocation5 + $0x200] sm:$0xff]
    %v1848 = vld [vmem:[#allocation5 + $0x208] sm:$0xff]
    %v1849 = vld [vmem:[#allocation5 + $0x210] sm:$0xff]
    %v1850 = vld [vmem:[#allocation5 + $0x218] sm:$0xff]
    %v1851 = vld [vmem:[#allocation5 + $0x220] sm:$0xff]
    %v1852 = vld [vmem:[#allocation5 + $0x228] sm:$0xff]
    %v1853 = vld [vmem:[#allocation5 + $0x230] sm:$0xff]
    %v1854 = vld [vmem:[#allocation5 + $0x238] sm:$0xff]
    %v1855 = vld [vmem:[#allocation5 + $0x240] sm:$0xff]
    %v1856 = vld [vmem:[#allocation5 + $0x248] sm:$0xff]
    %v1857 = vld [vmem:[#allocation5 + $0x250] sm:$0xff]
    %v1858 = vld [vmem:[#allocation5 + $0x258] sm:$0xff]
    %v1859 = vld [vmem:[#allocation5 + $0x260] sm:$0xff]
    %v1860 = vld [vmem:[#allocation5 + $0x268] sm:$0xff]
    %v1861 = vld [vmem:[#allocation5 + $0x270] sm:$0xff]
    %v1862 = vld [vmem:[#allocation5 + $0x278] sm:$0xff]
    %v1863 = vld [vmem:[#allocation5 + $0x280] sm:$0xff]
    %v1864 = vld [vmem:[#allocation5 + $0x288] sm:$0xff]
    %v1865 = vld [vmem:[#allocation5 + $0x290] sm:$0xff]
    %v1866 = vld [vmem:[#allocation5 + $0x298] sm:$0xff]
    %v1867 = vld [vmem:[#allocation5 + $0x2a0] sm:$0xff]
    %v1868 = vld [vmem:[#allocation5 + $0x2a8] sm:$0xff]
    %v1869 = vld [vmem:[#allocation5 + $0x2b0] sm:$0xff]
    %v1870 = vld [vmem:[#allocation5 + $0x2b8] sm:$0xff]
    %v1871 = vld [vmem:[#allocation5 + $0x2c0] sm:$0xff]
    %v1872 = vld [vmem:[#allocation5 + $0x2c8] sm:$0xff]
    %v1873 = vld [vmem:[#allocation5 + $0x2d0] sm:$0xff]
    %v1874 = vld [vmem:[#allocation5 + $0x2d8] sm:$0xff]
    %v1875 = vld [vmem:[#allocation5 + $0x2e0] sm:$0xff]
    %v1876 = vld [vmem:[#allocation5 + $0x2e8] sm:$0xff]
    %v1877 = vld [vmem:[#allocation5 + $0x2f0] sm:$0xff]
    %v1878 = vld [vmem:[#allocation5 + $0x2f8] sm:$0xff]
    %v1879 = vld [vmem:[#allocation5 + $0x300] sm:$0xff]
    %v1880 = vld [vmem:[#allocation5 + $0x308] sm:$0xff]
    %v1881 = vld [vmem:[#allocation5 + $0x310] sm:$0xff]
    %v1882 = vld [vmem:[#allocation5 + $0x318] sm:$0xff]
    %v1883 = vld [vmem:[#allocation5 + $0x320] sm:$0xff]
    %v1884 = vld [vmem:[#allocation5 + $0x328] sm:$0xff]
    %v1885 = vld [vmem:[#allocation5 + $0x330] sm:$0xff]
    %v1886 = vld [vmem:[#allocation5 + $0x338] sm:$0xff]
    %v1887 = vld [vmem:[#allocation5 + $0x340] sm:$0xff]
    %v1888 = vld [vmem:[#allocation5 + $0x348] sm:$0xff]
    %v1889 = vld [vmem:[#allocation5 + $0x350] sm:$0xff]
    %v1890 = vld [vmem:[#allocation5 + $0x358] sm:$0xff]
    %v1891 = vld [vmem:[#allocation5 + $0x360] sm:$0xff]
    %v1892 = vld [vmem:[#allocation5 + $0x368] sm:$0xff]
    %v1893 = vld [vmem:[#allocation5 + $0x370] sm:$0xff]
    %v1894 = vld [vmem:[#allocation5 + $0x378] sm:$0xff]
    %v1895 = vld [vmem:[#allocation5 + $0x380] sm:$0xff]
    %v1896 = vld [vmem:[#allocation5 + $0x388] sm:$0xff]
    %v1897 = vld [vmem:[#allocation5 + $0x390] sm:$0xff]
    %v1898 = vld [vmem:[#allocation5 + $0x398] sm:$0xff]
    %v1899 = vld [vmem:[#allocation5 + $0x3a0] sm:$0xff]
    %v1900 = vld [vmem:[#allocation5 + $0x3a8] sm:$0xff]
    %v1901 = vld [vmem:[#allocation5 + $0x3b0] sm:$0xff]
    %v1902 = vld [vmem:[#allocation5 + $0x3b8] sm:$0xff]
    %v1903 = vld [vmem:[#allocation5 + $0x3c0] sm:$0xff]
    %v1904 = vld [vmem:[#allocation5 + $0x3c8] sm:$0xff]
    %v1905 = vld [vmem:[#allocation5 + $0x3d0] sm:$0xff]
    %v1906 = vld [vmem:[#allocation5 + $0x3d8] sm:$0xff]
    %v1907 = vld [vmem:[#allocation5 + $0x3e0] sm:$0xff]
    %v1908 = vld [vmem:[#allocation5 + $0x3e8] sm:$0xff]
    %v1909 = vld [vmem:[#allocation5 + $0x3f0] sm:$0xff]
    %v1910 = vld [vmem:[#allocation5 + $0x3f8] sm:$0xff]
    %v1911 = vld [vmem:[#allocation5 + $0x400] sm:$0xff]
    %v1912 = vld [vmem:[#allocation5 + $0x408] sm:$0xff]
    %v1913 = vld [vmem:[#allocation5 + $0x410] sm:$0xff]
    %v1914 = vld [vmem:[#allocation5 + $0x418] sm:$0xff]
    %v1915 = vld [vmem:[#allocation5 + $0x420] sm:$0xff]
    %v1916 = vld [vmem:[#allocation5 + $0x428] sm:$0xff]
    %v1917 = vld [vmem:[#allocation5 + $0x430] sm:$0xff]
    %v1918 = vld [vmem:[#allocation5 + $0x438] sm:$0xff]
    %v1919 = vld [vmem:[#allocation5 + $0x440] sm:$0xff]
    %v1920 = vld [vmem:[#allocation5 + $0x448] sm:$0xff]
    %v1921 = vld [vmem:[#allocation5 + $0x450] sm:$0xff]
    %v1922 = vld [vmem:[#allocation5 + $0x458] sm:$0xff]
    %v1923 = vld [vmem:[#allocation5 + $0x460] sm:$0xff]
    %v1924 = vld [vmem:[#allocation5 + $0x468] sm:$0xff]
    %v1925 = vld [vmem:[#allocation5 + $0x470] sm:$0xff]
    %v1926 = vld [vmem:[#allocation5 + $0x478] sm:$0xff]
    %v1927 = vld [vmem:[#allocation5 + $0x480] sm:$0xff]
    %v1928 = vld [vmem:[#allocation5 + $0x488] sm:$0xff]
    %v1929 = vld [vmem:[#allocation5 + $0x490] sm:$0xff]
    %v1930 = vld [vmem:[#allocation5 + $0x498] sm:$0xff]
    %v1931 = vld [vmem:[#allocation5 + $0x4a0] sm:$0xff]
    %v1932 = vld [vmem:[#allocation5 + $0x4a8] sm:$0xff]
    %v1933 = vld [vmem:[#allocation5 + $0x4b0] sm:$0xff]
    %v1934 = vld [vmem:[#allocation5 + $0x4b8] sm:$0xff]
    %v1935 = vld [vmem:[#allocation5 + $0x4c0] sm:$0xff]
    %v1936 = vld [vmem:[#allocation5 + $0x4c8] sm:$0xff]
    %v1937 = vld [vmem:[#allocation5 + $0x4d0] sm:$0xff]
    %v1938 = vld [vmem:[#allocation5 + $0x4d8] sm:$0xff]
    %v1939 = vld [vmem:[#allocation5 + $0x4e0] sm:$0xff]
    %v1940 = vld [vmem:[#allocation5 + $0x4e8] sm:$0xff]
    %v1941 = vld [vmem:[#allocation5 + $0x4f0] sm:$0xff]
    %v1942 = vld [vmem:[#allocation5 + $0x4f8] sm:$0xff]
    %v1943 = vld [vmem:[#allocation5 + $0x500] sm:$0xff]
    %v1944 = vld [vmem:[#allocation5 + $0x508] sm:$0xff]
    %v1945 = vld [vmem:[#allocation5 + $0x510] sm:$0xff]
    %v1946 = vld [vmem:[#allocation5 + $0x518] sm:$0xff]
    %v1947 = vld [vmem:[#allocation5 + $0x520] sm:$0xff]
    %v1948 = vld [vmem:[#allocation5 + $0x528] sm:$0xff]
    %v1949 = vld [vmem:[#allocation5 + $0x530] sm:$0xff]
    %v1950 = vld [vmem:[#allocation5 + $0x538] sm:$0xff]
    %v1951 = vld [vmem:[#allocation5 + $0x540] sm:$0xff]
    %v1952 = vld [vmem:[#allocation5 + $0x548] sm:$0xff]
    %v1953 = vld [vmem:[#allocation5 + $0x550] sm:$0xff]
    %v1954 = vld [vmem:[#allocation5 + $0x558] sm:$0xff]
    %v1955 = vld [vmem:[#allocation5 + $0x560] sm:$0xff]
    %v1956 = vld [vmem:[#allocation5 + $0x568] sm:$0xff]
    %v1957 = vld [vmem:[#allocation5 + $0x570] sm:$0xff]
    %v1958 = vld [vmem:[#allocation5 + $0x578] sm:$0xff]
    %v1959 = vld [vmem:[#allocation5 + $0x580] sm:$0xff]
    %v1960 = vld [vmem:[#allocation5 + $0x588] sm:$0xff]
    %v1961 = vld [vmem:[#allocation5 + $0x590] sm:$0xff]
    %v1962 = vld [vmem:[#allocation5 + $0x598] sm:$0xff]
    %v1963 = vld [vmem:[#allocation5 + $0x5a0] sm:$0xff]
    %v1964 = vld [vmem:[#allocation5 + $0x5a8] sm:$0xff]
    %v1965 = vld [vmem:[#allocation5 + $0x5b0] sm:$0xff]
    %v1966 = vld [vmem:[#allocation5 + $0x5b8] sm:$0xff]
    %v1967 = vld [vmem:[#allocation5 + $0x5c0] sm:$0xff]
    %v1968 = vld [vmem:[#allocation5 + $0x5c8] sm:$0xff]
    %v1969 = vld [vmem:[#allocation5 + $0x5d0] sm:$0xff]
    %v1970 = vld [vmem:[#allocation5 + $0x5d8] sm:$0xff]
    %v1971 = vld [vmem:[#allocation5 + $0x5e0] sm:$0xff]
    %v1972 = vld [vmem:[#allocation5 + $0x5e8] sm:$0xff]
    %v1973 = vld [vmem:[#allocation5 + $0x5f0] sm:$0xff]
    %v1974 = vld [vmem:[#allocation5 + $0x5f8] sm:$0xff]
    %v1975 = vld [vmem:[#allocation5 + $0x600] sm:$0xff]
    %v1976 = vld [vmem:[#allocation5 + $0x608] sm:$0xff]
    %v1977 = vld [vmem:[#allocation5 + $0x610] sm:$0xff]
    %v1978 = vld [vmem:[#allocation5 + $0x618] sm:$0xff]
    %v1979 = vld [vmem:[#allocation5 + $0x620] sm:$0xff]
    %v1980 = vld [vmem:[#allocation5 + $0x628] sm:$0xff]
    %v1981 = vld [vmem:[#allocation5 + $0x630] sm:$0xff]
    %v1982 = vld [vmem:[#allocation5 + $0x638] sm:$0xff]
    %v1983 = vld [vmem:[#allocation5 + $0x640] sm:$0xff]
    %v1984 = vld [vmem:[#allocation5 + $0x648] sm:$0xff]
    %v1985 = vld [vmem:[#allocation5 + $0x650] sm:$0xff]
    %v1986 = vld [vmem:[#allocation5 + $0x658] sm:$0xff]
    %v1987 = vld [vmem:[#allocation5 + $0x660] sm:$0xff]
    %v1988 = vld [vmem:[#allocation5 + $0x668] sm:$0xff]
    %v1989 = vld [vmem:[#allocation5 + $0x670] sm:$0xff]
    %v1990 = vld [vmem:[#allocation5 + $0x678] sm:$0xff]
    %v1991 = vld [vmem:[#allocation5 + $0x680] sm:$0xff]
    %v1992 = vld [vmem:[#allocation5 + $0x688] sm:$0xff]
    %v1993 = vld [vmem:[#allocation5 + $0x690] sm:$0xff]
    %v1994 = vld [vmem:[#allocation5 + $0x698] sm:$0xff]
    %v1995 = vld [vmem:[#allocation5 + $0x6a0] sm:$0xff]
    %v1996 = vld [vmem:[#allocation5 + $0x6a8] sm:$0xff]
    %v1997 = vld [vmem:[#allocation5 + $0x6b0] sm:$0xff]
    %v1998 = vld [vmem:[#allocation5 + $0x6b8] sm:$0xff]
    %v1999 = vld [vmem:[#allocation5 + $0x6c0] sm:$0xff]
    %v2000 = vld [vmem:[#allocation5 + $0x6c8] sm:$0xff]
    %v2001 = vld [vmem:[#allocation5 + $0x6d0] sm:$0xff]
    %v2002 = vld [vmem:[#allocation5 + $0x6d8] sm:$0xff]
    %v2003 = vld [vmem:[#allocation5 + $0x6e0] sm:$0xff]
    %v2004 = vld [vmem:[#allocation5 + $0x6e8] sm:$0xff]
    %v2005 = vld [vmem:[#allocation5 + $0x6f0] sm:$0xff]
    %v2006 = vld [vmem:[#allocation5 + $0x6f8] sm:$0xff]
    %v2007 = vld [vmem:[#allocation5 + $0x700] sm:$0xff]
    %v2008 = vld [vmem:[#allocation5 + $0x708] sm:$0xff]
    %v2009 = vld [vmem:[#allocation5 + $0x710] sm:$0xff]
    %v2010 = vld [vmem:[#allocation5 + $0x718] sm:$0xff]
    %v2011 = vld [vmem:[#allocation5 + $0x720] sm:$0xff]
    %v2012 = vld [vmem:[#allocation5 + $0x728] sm:$0xff]
    %v2013 = vld [vmem:[#allocation5 + $0x730] sm:$0xff]
    %v2014 = vld [vmem:[#allocation5 + $0x738] sm:$0xff]
    %v2015 = vld [vmem:[#allocation5 + $0x740] sm:$0xff]
    %v2016 = vld [vmem:[#allocation5 + $0x748] sm:$0xff]
    %v2017 = vld [vmem:[#allocation5 + $0x750] sm:$0xff]
    %v2018 = vld [vmem:[#allocation5 + $0x758] sm:$0xff]
    %v2019 = vld [vmem:[#allocation5 + $0x760] sm:$0xff]
    %v2020 = vld [vmem:[#allocation5 + $0x768] sm:$0xff]
    %v2021 = vld [vmem:[#allocation5 + $0x770] sm:$0xff]
    %v2022 = vld [vmem:[#allocation5 + $0x778] sm:$0xff]
    %v2023 = vld [vmem:[#allocation5 + $0x780] sm:$0xff]
    %v2024 = vld [vmem:[#allocation5 + $0x788] sm:$0xff]
    %v2025 = vld [vmem:[#allocation5 + $0x790] sm:$0xff]
    %v2026 = vld [vmem:[#allocation5 + $0x798] sm:$0xff]
    %v2027 = vld [vmem:[#allocation5 + $0x7a0] sm:$0xff]
    %v2028 = vld [vmem:[#allocation5 + $0x7a8] sm:$0xff]
    %v2029 = vld [vmem:[#allocation5 + $0x7b0] sm:$0xff]
    %v2030 = vld [vmem:[#allocation5 + $0x7b8] sm:$0xff]
    %v2031 = vld [vmem:[#allocation5 + $0x7c0] sm:$0xff]
    %v2032 = vld [vmem:[#allocation5 + $0x7c8] sm:$0xff]
    %v2033 = vld [vmem:[#allocation5 + $0x7d0] sm:$0xff]
    %v2034 = vld [vmem:[#allocation5 + $0x7d8] sm:$0xff]
    %v2035 = vld [vmem:[#allocation5 + $0x7e0] sm:$0xff]
    %v2036 = vld [vmem:[#allocation5 + $0x7e8] sm:$0xff]
    %v2037 = vld [vmem:[#allocation5 + $0x7f0] sm:$0xff]
    %v2038 = vld [vmem:[#allocation5 + $0x7f8] sm:$0xff]
    %v2039 = vld [vmem:[%s15] sm:$0xff]
    %2041 = vset.pattern.permute.xlu0 0
    %2042 = vperm.xlu0 %2041, %v2039
    %v2043 = vpop.permute.xlu0 %2042
    %2045 = vmatprep.subr.mxu0 %v1904
    %2046 = vmatpush1.msra.mxu0 %v1903
    %2047 = vmatprep.subr.mxu0 %v1896
    %2048 = vmatpush1.msra.mxu0 %v1895
    %2049 = vmatprep.subr.mxu0 %v1888
    %2050 = vmatpush1.msra.mxu0 %v1887
    %2051 = vmatprep.subr.mxu0 %v1880
    %2052 = vmatpush1.msra.mxu0 %v1879
    %2053 = vmatprep.subr.mxu0 %v1872
    %2054 = vmatpush1.msra.mxu0 %v1871
    %2055 = vmatprep.subr.mxu0 %v1864
    %2056 = vmatpush1.msra.mxu0 %v1863
    %2057 = vmatprep.subr.mxu0 %v1856
    %2058 = vmatpush1.msra.mxu0 %v1855
    %2059 = vmatprep.subr.mxu0 %v1848
    %2060 = vmatpush1.msra.mxu0 %v1847
    %2061 = vmatprep.subr.mxu0 %v1840
    %2062 = vmatpush1.msra.mxu0 %v1839
    %2063 = vmatprep.subr.mxu0 %v1832
    %2064 = vmatpush1.msra.mxu0 %v1831
    %2065 = vmatprep.subr.mxu0 %v1824
    %2066 = vmatpush1.msra.mxu0 %v1823
    %2067 = vmatprep.subr.mxu0 %v1816
    %2068 = vmatpush1.msra.mxu0 %v1815
    %2069 = vmatprep.subr.mxu0 %v1808
    %2070 = vmatpush1.msra.mxu0 %v1807
    %2071 = vmatprep.subr.mxu0 %v1800
    %2072 = vmatpush1.msra.mxu0 %v1799
    %2073 = vmatprep.subr.mxu0 %v1792
    %2074 = vmatpush1.msra.mxu0 %v1791
    %2075 = vmatprep.subr.mxu0 %v1784
    %2076 = vmatpush1.msra.mxu0 %v1783
    %2077 = vmatprep.subr.mxu0 %v2032
    %2078 = vmatpush2.msra.mxu0 %v2031
    %2079 = vmatprep.subr.mxu0 %v2024
    %2080 = vmatpush2.msra.mxu0 %v2023
    %2081 = vmatprep.subr.mxu0 %v2016
    %2082 = vmatpush2.msra.mxu0 %v2015
    %2083 = vmatprep.subr.mxu0 %v2008
    %2084 = vmatpush2.msra.mxu0 %v2007
    %2085 = vmatprep.subr.mxu0 %v2000
    %2086 = vmatpush2.msra.mxu0 %v1999
    %2087 = vmatprep.subr.mxu0 %v1992
    %2088 = vmatpush2.msra.mxu0 %v1991
    %2089 = vmatprep.subr.mxu0 %v1984
    %2090 = vmatpush2.msra.mxu0 %v1983
    %2091 = vmatprep.subr.mxu0 %v1976
    %2092 = vmatpush2.msra.mxu0 %v1975
    %2093 = vmatprep.subr.mxu0 %v1968
    %2094 = vmatpush2.msra.mxu0 %v1967
    %2095 = vmatprep.subr.mxu0 %v1960
    %2096 = vmatpush2.msra.mxu0 %v1959
    %2097 = vmatprep.subr.mxu0 %v1952
    %2098 = vmatpush2.msra.mxu0 %v1951
    %2099 = vmatprep.subr.mxu0 %v1944
    %2100 = vmatpush2.msra.mxu0 %v1943
    %2101 = vmatprep.subr.mxu0 %v1936
    %2102 = vmatpush2.msra.mxu0 %v1935
    %2103 = vmatprep.subr.mxu0 %v1928
    %2104 = vmatpush2.msra.mxu0 %v1927
    %2105 = vmatprep.subr.mxu0 %v1920
    %2106 = vmatpush2.msra.mxu0 %v1919
    %2107 = vmatprep.subr.mxu0 %v1912
    %2108 = vmatpush2.msra.mxu0 %v1911
    %2109 = vmatprep.mubr.f32.mxu0 %v1710
    %2110 = vmatmul.mubr.f32.gmra.mxu0 %v1708
    %v2111 = vpop.f32.mrf.mxu0
    %v2112 = vadd.f32 %v2043, %v2111
    %v2113 = vpop.f32.mrf.mxu0
    %v2114 = vadd.f32 %v2043, %v2113
    %2115 = vdwg.mxu0
    %2116 = vmatprep.subr.mxu0 %v1906
    %2117 = vmatpush1.msra.mxu0 %v1905
    %2118 = vmatprep.subr.mxu0 %v1898
    %2119 = vmatpush1.msra.mxu0 %v1897
    %2120 = vmatprep.subr.mxu0 %v1890
    %2121 = vmatpush1.msra.mxu0 %v1889
    %2122 = vmatprep.subr.mxu0 %v1882
    %2123 = vmatpush1.msra.mxu0 %v1881
    %2124 = vmatprep.subr.mxu0 %v1874
    %2125 = vmatpush1.msra.mxu0 %v1873
    %2126 = vmatprep.subr.mxu0 %v1866
    %2127 = vmatpush1.msra.mxu0 %v1865
    %2128 = vmatprep.subr.mxu0 %v1858
    %2129 = vmatpush1.msra.mxu0 %v1857
    %2130 = vmatprep.subr.mxu0 %v1850
    %2131 = vmatpush1.msra.mxu0 %v1849
    %2132 = vmatprep.subr.mxu0 %v1842
    %2133 = vmatpush1.msra.mxu0 %v1841
    %2134 = vmatprep.subr.mxu0 %v1834
    %2135 = vmatpush1.msra.mxu0 %v1833
    %2136 = vmatprep.subr.mxu0 %v1826
    %2137 = vmatpush1.msra.mxu0 %v1825
    %2138 = vmatprep.subr.mxu0 %v1818
    %2139 = vmatpush1.msra.mxu0 %v1817
    %2140 = vmatprep.subr.mxu0 %v1810
    %2141 = vmatpush1.msra.mxu0 %v1809
    %2142 = vmatprep.subr.mxu0 %v1802
    %2143 = vmatpush1.msra.mxu0 %v1801
    %2144 = vmatprep.subr.mxu0 %v1794
    %2145 = vmatpush1.msra.mxu0 %v1793
    %2146 = vmatprep.subr.mxu0 %v1786
    %2147 = vmatpush1.msra.mxu0 %v1785
    %2148 = vmatprep.subr.mxu0 %v2034
    %2149 = vmatpush2.msra.mxu0 %v2033
    %2150 = vmatprep.subr.mxu0 %v2026
    %2151 = vmatpush2.msra.mxu0 %v2025
    %2152 = vmatprep.subr.mxu0 %v2018
    %2153 = vmatpush2.msra.mxu0 %v2017
    %2154 = vmatprep.subr.mxu0 %v2010
    %2155 = vmatpush2.msra.mxu0 %v2009
    %2156 = vmatprep.subr.mxu0 %v2002
    %2157 = vmatpush2.msra.mxu0 %v2001
    %2158 = vmatprep.subr.mxu0 %v1994
    %2159 = vmatpush2.msra.mxu0 %v1993
    %2160 = vmatprep.subr.mxu0 %v1986
    %2161 = vmatpush2.msra.mxu0 %v1985
    %2162 = vmatprep.subr.mxu0 %v1978
    %2163 = vmatpush2.msra.mxu0 %v1977
    %2164 = vmatprep.subr.mxu0 %v1970
    %2165 = vmatpush2.msra.mxu0 %v1969
    %2166 = vmatprep.subr.mxu0 %v1962
    %2167 = vmatpush2.msra.mxu0 %v1961
    %2168 = vmatprep.subr.mxu0 %v1954
    %2169 = vmatpush2.msra.mxu0 %v1953
    %2170 = vmatprep.subr.mxu0 %v1946
    %2171 = vmatpush2.msra.mxu0 %v1945
    %2172 = vmatprep.subr.mxu0 %v1938
    %2173 = vmatpush2.msra.mxu0 %v1937
    %2174 = vmatprep.subr.mxu0 %v1930
    %2175 = vmatpush2.msra.mxu0 %v1929
    %2176 = vmatprep.subr.mxu0 %v1922
    %2177 = vmatpush2.msra.mxu0 %v1921
    %2178 = vmatprep.subr.mxu0 %v1914
    %2179 = vmatpush2.msra.mxu0 %v1913
    %2180 = vmatprep.mubr.f32.mxu0 %v1710
    %2181 = vmatmul.mubr.f32.gmra.mxu0 %v1708
    %v2182 = vpop.f32.mrf.mxu0
    %v2183 = vadd.f32 %v2043, %v2182
    %v2184 = vpop.f32.mrf.mxu0
    %v2185 = vadd.f32 %v2043, %v2184
    %2186 = vdwg.mxu0
    %2187 = vmatprep.subr.mxu0 %v1908
    %2188 = vmatpush1.msra.mxu0 %v1907
    %2189 = vmatprep.subr.mxu0 %v1900
    %2190 = vmatpush1.msra.mxu0 %v1899
    %2191 = vmatprep.subr.mxu0 %v1892
    %2192 = vmatpush1.msra.mxu0 %v1891
    %2193 = vmatprep.subr.mxu0 %v1884
    %2194 = vmatpush1.msra.mxu0 %v1883
    %2195 = vmatprep.subr.mxu0 %v1876
    %2196 = vmatpush1.msra.mxu0 %v1875
    %2197 = vmatprep.subr.mxu0 %v1868
    %2198 = vmatpush1.msra.mxu0 %v1867
    %2199 = vmatprep.subr.mxu0 %v1860
    %2200 = vmatpush1.msra.mxu0 %v1859
    %2201 = vmatprep.subr.mxu0 %v1852
    %2202 = vmatpush1.msra.mxu0 %v1851
    %2203 = vmatprep.subr.mxu0 %v1844
    %2204 = vmatpush1.msra.mxu0 %v1843
    %2205 = vmatprep.subr.mxu0 %v1836
    %2206 = vmatpush1.msra.mxu0 %v1835
    %2207 = vmatprep.subr.mxu0 %v1828
    %2208 = vmatpush1.msra.mxu0 %v1827
    %2209 = vmatprep.subr.mxu0 %v1820
    %2210 = vmatpush1.msra.mxu0 %v1819
    %2211 = vmatprep.subr.mxu0 %v1812
    %2212 = vmatpush1.msra.mxu0 %v1811
    %2213 = vmatprep.subr.mxu0 %v1804
    %2214 = vmatpush1.msra.mxu0 %v1803
    %2215 = vmatprep.subr.mxu0 %v1796
    %2216 = vmatpush1.msra.mxu0 %v1795
    %2217 = vmatprep.subr.mxu0 %v1788
    %2218 = vmatpush1.msra.mxu0 %v1787
    %2219 = vmatprep.subr.mxu0 %v2036
    %2220 = vmatpush2.msra.mxu0 %v2035
    %2221 = vmatprep.subr.mxu0 %v2028
    %2222 = vmatpush2.msra.mxu0 %v2027
    %2223 = vmatprep.subr.mxu0 %v2020
    %2224 = vmatpush2.msra.mxu0 %v2019
    %2225 = vmatprep.subr.mxu0 %v2012
    %2226 = vmatpush2.msra.mxu0 %v2011
    %2227 = vmatprep.subr.mxu0 %v2004
    %2228 = vmatpush2.msra.mxu0 %v2003
    %2229 = vmatprep.subr.mxu0 %v1996
    %2230 = vmatpush2.msra.mxu0 %v1995
    %2231 = vmatprep.subr.mxu0 %v1988
    %2232 = vmatpush2.msra.mxu0 %v1987
    %2233 = vmatprep.subr.mxu0 %v1980
    %2234 = vmatpush2.msra.mxu0 %v1979
    %2235 = vmatprep.subr.mxu0 %v1972
    %2236 = vmatpush2.msra.mxu0 %v1971
    %2237 = vmatprep.subr.mxu0 %v1964
    %2238 = vmatpush2.msra.mxu0 %v1963
    %2239 = vmatprep.subr.mxu0 %v1956
    %2240 = vmatpush2.msra.mxu0 %v1955
    %2241 = vmatprep.subr.mxu0 %v1948
    %2242 = vmatpush2.msra.mxu0 %v1947
    %2243 = vmatprep.subr.mxu0 %v1940
    %2244 = vmatpush2.msra.mxu0 %v1939
    %2245 = vmatprep.subr.mxu0 %v1932
    %2246 = vmatpush2.msra.mxu0 %v1931
    %2247 = vmatprep.subr.mxu0 %v1924
    %2248 = vmatpush2.msra.mxu0 %v1923
    %2249 = vmatprep.subr.mxu0 %v1916
    %2250 = vmatpush2.msra.mxu0 %v1915
    %2251 = vmatprep.mubr.f32.mxu0 %v1710
    %2252 = vmatmul.mubr.f32.gmra.mxu0 %v1708
    %v2253 = vpop.f32.mrf.mxu0
    %v2254 = vadd.f32 %v2043, %v2253
    %v2255 = vpop.f32.mrf.mxu0
    %v2256 = vadd.f32 %v2043, %v2255
    %2257 = vdwg.mxu0
    %2258 = vmatprep.subr.mxu0 %v1910
    %2259 = vmatpush1.msra.mxu0 %v1909
    %2260 = vmatprep.subr.mxu0 %v1902
    %2261 = vmatpush1.msra.mxu0 %v1901
    %2262 = vmatprep.subr.mxu0 %v1894
    %2263 = vmatpush1.msra.mxu0 %v1893
    %2264 = vmatprep.subr.mxu0 %v1886
    %2265 = vmatpush1.msra.mxu0 %v1885
    %2266 = vmatprep.subr.mxu0 %v1878
    %2267 = vmatpush1.msra.mxu0 %v1877
    %2268 = vmatprep.subr.mxu0 %v1870
    %2269 = vmatpush1.msra.mxu0 %v1869
    %2270 = vmatprep.subr.mxu0 %v1862
    %2271 = vmatpush1.msra.mxu0 %v1861
    %2272 = vmatprep.subr.mxu0 %v1854
    %2273 = vmatpush1.msra.mxu0 %v1853
    %2274 = vmatprep.subr.mxu0 %v1846
    %2275 = vmatpush1.msra.mxu0 %v1845
    %2276 = vmatprep.subr.mxu0 %v1838
    %2277 = vmatpush1.msra.mxu0 %v1837
    %2278 = vmatprep.subr.mxu0 %v1830
    %2279 = vmatpush1.msra.mxu0 %v1829
    %2280 = vmatprep.subr.mxu0 %v1822
    %2281 = vmatpush1.msra.mxu0 %v1821
    %2282 = vmatprep.subr.mxu0 %v1814
    %2283 = vmatpush1.msra.mxu0 %v1813
    %2284 = vmatprep.subr.mxu0 %v1806
    %2285 = vmatpush1.msra.mxu0 %v1805
    %2286 = vmatprep.subr.mxu0 %v1798
    %2287 = vmatpush1.msra.mxu0 %v1797
    %2288 = vmatprep.subr.mxu0 %v1790
    %2289 = vmatpush1.msra.mxu0 %v1789
    %2290 = vmatprep.subr.mxu0 %v2038
    %2291 = vmatpush2.msra.mxu0 %v2037
    %2292 = vmatprep.subr.mxu0 %v2030
    %2293 = vmatpush2.msra.mxu0 %v2029
    %2294 = vmatprep.subr.mxu0 %v2022
    %2295 = vmatpush2.msra.mxu0 %v2021
    %2296 = vmatprep.subr.mxu0 %v2014
    %2297 = vmatpush2.msra.mxu0 %v2013
    %2298 = vmatprep.subr.mxu0 %v2006
    %2299 = vmatpush2.msra.mxu0 %v2005
    %2300 = vmatprep.subr.mxu0 %v1998
    %2301 = vmatpush2.msra.mxu0 %v1997
    %2302 = vmatprep.subr.mxu0 %v1990
    %2303 = vmatpush2.msra.mxu0 %v1989
    %2304 = vmatprep.subr.mxu0 %v1982
    %2305 = vmatpush2.msra.mxu0 %v1981
    %2306 = vmatprep.subr.mxu0 %v1974
    %2307 = vmatpush2.msra.mxu0 %v1973
    %2308 = vmatprep.subr.mxu0 %v1966
    %2309 = vmatpush2.msra.mxu0 %v1965
    %2310 = vmatprep.subr.mxu0 %v1958
    %2311 = vmatpush2.msra.mxu0 %v1957
    %2312 = vmatprep.subr.mxu0 %v1950
    %2313 = vmatpush2.msra.mxu0 %v1949
    %2314 = vmatprep.subr.mxu0 %v1942
    %2315 = vmatpush2.msra.mxu0 %v1941
    %2316 = vmatprep.subr.mxu0 %v1934
    %2317 = vmatpush2.msra.mxu0 %v1933
    %2318 = vmatprep.subr.mxu0 %v1926
    %2319 = vmatpush2.msra.mxu0 %v1925
    %2320 = vmatprep.subr.mxu0 %v1918
    %2321 = vmatpush2.msra.mxu0 %v1917
    %2322 = vmatprep.mubr.f32.mxu0 %v1710
    %2323 = vmatmul.mubr.f32.gmra.mxu0 %v1708
    %v2324 = vpop.f32.mrf.mxu0
    %v2325 = vadd.f32 %v2043, %v2324
    %v2326 = vpop.f32.mrf.mxu0
    %v2327 = vadd.f32 %v2043, %v2326
    %2328 = vdwg.mxu0
    %2329 = vst [vmem:[#allocation10] sm:$0xff] %v2112
    %2330 = vst [vmem:[#allocation10 + $0x8] sm:$0xff] %v2114
    %2331 = vst [vmem:[#allocation10 + $0x10] sm:$0xff] %v2183
    %2332 = vst [vmem:[#allocation10 + $0x18] sm:$0xff] %v2185
    %2333 = vst [vmem:[#allocation10 + $0x20] sm:$0xff] %v2254
    %2334 = vst [vmem:[#allocation10 + $0x28] sm:$0xff] %v2256
    %2335 = vst [vmem:[#allocation10 + $0x30] sm:$0xff] %v2325
    %2336 = vst [vmem:[#allocation10 + $0x38] sm:$0xff] %v2327
    %2337 = vmatprep.subr.mxu0 %v1904
    %2338 = vmatpush1.msra.mxu0 %v1903
    %2339 = vmatprep.subr.mxu0 %v1896
    %2340 = vmatpush1.msra.mxu0 %v1895
    %2341 = vmatprep.subr.mxu0 %v1888
    %2342 = vmatpush1.msra.mxu0 %v1887
    %2343 = vmatprep.subr.mxu0 %v1880
    %2344 = vmatpush1.msra.mxu0 %v1879
    %2345 = vmatprep.subr.mxu0 %v1872
    %2346 = vmatpush1.msra.mxu0 %v1871
    %2347 = vmatprep.subr.mxu0 %v1864
    %2348 = vmatpush1.msra.mxu0 %v1863
    %2349 = vmatprep.subr.mxu0 %v1856
    %2350 = vmatpush1.msra.mxu0 %v1855
    %2351 = vmatprep.subr.mxu0 %v1848
    %2352 = vmatpush1.msra.mxu0 %v1847
    %2353 = vmatprep.subr.mxu0 %v1840
    %2354 = vmatpush1.msra.mxu0 %v1839
    %2355 = vmatprep.subr.mxu0 %v1832
    %2356 = vmatpush1.msra.mxu0 %v1831
    %2357 = vmatprep.subr.mxu0 %v1824
    %2358 = vmatpush1.msra.mxu0 %v1823
    %2359 = vmatprep.subr.mxu0 %v1816
    %2360 = vmatpush1.msra.mxu0 %v1815
    %2361 = vmatprep.subr.mxu0 %v1808
    %2362 = vmatpush1.msra.mxu0 %v1807
    %2363 = vmatprep.subr.mxu0 %v1800
    %2364 = vmatpush1.msra.mxu0 %v1799
    %2365 = vmatprep.subr.mxu0 %v1792
    %2366 = vmatpush1.msra.mxu0 %v1791
    %2367 = vmatprep.subr.mxu0 %v1784
    %2368 = vmatpush1.msra.mxu0 %v1783
    %2369 = vmatprep.subr.mxu0 %v2032
    %2370 = vmatpush2.msra.mxu0 %v2031
    %2371 = vmatprep.subr.mxu0 %v2024
    %2372 = vmatpush2.msra.mxu0 %v2023
    %2373 = vmatprep.subr.mxu0 %v2016
    %2374 = vmatpush2.msra.mxu0 %v2015
    %2375 = vmatprep.subr.mxu0 %v2008
    %2376 = vmatpush2.msra.mxu0 %v2007
    %2377 = vmatprep.subr.mxu0 %v2000
    %2378 = vmatpush2.msra.mxu0 %v1999
    %2379 = vmatprep.subr.mxu0 %v1992
    %2380 = vmatpush2.msra.mxu0 %v1991
    %2381 = vmatprep.subr.mxu0 %v1984
    %2382 = vmatpush2.msra.mxu0 %v1983
    %2383 = vmatprep.subr.mxu0 %v1976
    %2384 = vmatpush2.msra.mxu0 %v1975
    %2385 = vmatprep.subr.mxu0 %v1968
    %2386 = vmatpush2.msra.mxu0 %v1967
    %2387 = vmatprep.subr.mxu0 %v1960
    %2388 = vmatpush2.msra.mxu0 %v1959
    %2389 = vmatprep.subr.mxu0 %v1952
    %2390 = vmatpush2.msra.mxu0 %v1951
    %2391 = vmatprep.subr.mxu0 %v1944
    %2392 = vmatpush2.msra.mxu0 %v1943
    %2393 = vmatprep.subr.mxu0 %v1936
    %2394 = vmatpush2.msra.mxu0 %v1935
    %2395 = vmatprep.subr.mxu0 %v1928
    %2396 = vmatpush2.msra.mxu0 %v1927
    %2397 = vmatprep.subr.mxu0 %v1920
    %2398 = vmatpush2.msra.mxu0 %v1919
    %2399 = vmatprep.subr.mxu0 %v1912
    %2400 = vmatpush2.msra.mxu0 %v1911
    %2401 = vmatprep.mubr.f32.mxu0 %v1781
    %2402 = vmatmul.mubr.f32.gmra.mxu0 %v1779
    %v2403 = vpop.f32.mrf.mxu0
    %v2404 = vadd.f32 %v2043, %v2403
    %v2405 = vpop.f32.mrf.mxu0
    %v2406 = vadd.f32 %v2043, %v2405
    %2407 = vdwg.mxu0
    %2408 = vmatprep.subr.mxu0 %v1906
    %2409 = vmatpush1.msra.mxu0 %v1905
    %2410 = vmatprep.subr.mxu0 %v1898
    %2411 = vmatpush1.msra.mxu0 %v1897
    %2412 = vmatprep.subr.mxu0 %v1890
    %2413 = vmatpush1.msra.mxu0 %v1889
    %2414 = vmatprep.subr.mxu0 %v1882
    %2415 = vmatpush1.msra.mxu0 %v1881
    %2416 = vmatprep.subr.mxu0 %v1874
    %2417 = vmatpush1.msra.mxu0 %v1873
    %2418 = vmatprep.subr.mxu0 %v1866
    %2419 = vmatpush1.msra.mxu0 %v1865
    %2420 = vmatprep.subr.mxu0 %v1858
    %2421 = vmatpush1.msra.mxu0 %v1857
    %2422 = vmatprep.subr.mxu0 %v1850
    %2423 = vmatpush1.msra.mxu0 %v1849
    %2424 = vmatprep.subr.mxu0 %v1842
    %2425 = vmatpush1.msra.mxu0 %v1841
    %2426 = vmatprep.subr.mxu0 %v1834
    %2427 = vmatpush1.msra.mxu0 %v1833
    %2428 = vmatprep.subr.mxu0 %v1826
    %2429 = vmatpush1.msra.mxu0 %v1825
    %2430 = vmatprep.subr.mxu0 %v1818
    %2431 = vmatpush1.msra.mxu0 %v1817
    %2432 = vmatprep.subr.mxu0 %v1810
    %2433 = vmatpush1.msra.mxu0 %v1809
    %2434 = vmatprep.subr.mxu0 %v1802
    %2435 = vmatpush1.msra.mxu0 %v1801
    %2436 = vmatprep.subr.mxu0 %v1794
    %2437 = vmatpush1.msra.mxu0 %v1793
    %2438 = vmatprep.subr.mxu0 %v1786
    %2439 = vmatpush1.msra.mxu0 %v1785
    %2440 = vmatprep.subr.mxu0 %v2034
    %2441 = vmatpush2.msra.mxu0 %v2033
    %2442 = vmatprep.subr.mxu0 %v2026
    %2443 = vmatpush2.msra.mxu0 %v2025
    %2444 = vmatprep.subr.mxu0 %v2018
    %2445 = vmatpush2.msra.mxu0 %v2017
    %2446 = vmatprep.subr.mxu0 %v2010
    %2447 = vmatpush2.msra.mxu0 %v2009
    %2448 = vmatprep.subr.mxu0 %v2002
    %2449 = vmatpush2.msra.mxu0 %v2001
    %2450 = vmatprep.subr.mxu0 %v1994
    %2451 = vmatpush2.msra.mxu0 %v1993
    %2452 = vmatprep.subr.mxu0 %v1986
    %2453 = vmatpush2.msra.mxu0 %v1985
    %2454 = vmatprep.subr.mxu0 %v1978
    %2455 = vmatpush2.msra.mxu0 %v1977
    %2456 = vmatprep.subr.mxu0 %v1970
    %2457 = vmatpush2.msra.mxu0 %v1969
    %2458 = vmatprep.subr.mxu0 %v1962
    %2459 = vmatpush2.msra.mxu0 %v1961
    %2460 = vmatprep.subr.mxu0 %v1954
    %2461 = vmatpush2.msra.mxu0 %v1953
    %2462 = vmatprep.subr.mxu0 %v1946
    %2463 = vmatpush2.msra.mxu0 %v1945
    %2464 = vmatprep.subr.mxu0 %v1938
    %2465 = vmatpush2.msra.mxu0 %v1937
    %2466 = vmatprep.subr.mxu0 %v1930
    %2467 = vmatpush2.msra.mxu0 %v1929
    %2468 = vmatprep.subr.mxu0 %v1922
    %2469 = vmatpush2.msra.mxu0 %v1921
    %2470 = vmatprep.subr.mxu0 %v1914
    %2471 = vmatpush2.msra.mxu0 %v1913
    %2472 = vmatprep.mubr.f32.mxu0 %v1781
    %2473 = vmatmul.mubr.f32.gmra.mxu0 %v1779
    %v2474 = vpop.f32.mrf.mxu0
    %v2475 = vadd.f32 %v2043, %v2474
    %v2476 = vpop.f32.mrf.mxu0
    %v2477 = vadd.f32 %v2043, %v2476
    %2478 = vdwg.mxu0
    %2479 = vmatprep.subr.mxu0 %v1908
    %2480 = vmatpush1.msra.mxu0 %v1907
    %2481 = vmatprep.subr.mxu0 %v1900
    %2482 = vmatpush1.msra.mxu0 %v1899
    %2483 = vmatprep.subr.mxu0 %v1892
    %2484 = vmatpush1.msra.mxu0 %v1891
    %2485 = vmatprep.subr.mxu0 %v1884
    %2486 = vmatpush1.msra.mxu0 %v1883
    %2487 = vmatprep.subr.mxu0 %v1876
    %2488 = vmatpush1.msra.mxu0 %v1875
    %2489 = vmatprep.subr.mxu0 %v1868
    %2490 = vmatpush1.msra.mxu0 %v1867
    %2491 = vmatprep.subr.mxu0 %v1860
    %2492 = vmatpush1.msra.mxu0 %v1859
    %2493 = vmatprep.subr.mxu0 %v1852
    %2494 = vmatpush1.msra.mxu0 %v1851
    %2495 = vmatprep.subr.mxu0 %v1844
    %2496 = vmatpush1.msra.mxu0 %v1843
    %2497 = vmatprep.subr.mxu0 %v1836
    %2498 = vmatpush1.msra.mxu0 %v1835
    %2499 = vmatprep.subr.mxu0 %v1828
    %2500 = vmatpush1.msra.mxu0 %v1827
    %2501 = vmatprep.subr.mxu0 %v1820
    %2502 = vmatpush1.msra.mxu0 %v1819
    %2503 = vmatprep.subr.mxu0 %v1812
    %2504 = vmatpush1.msra.mxu0 %v1811
    %2505 = vmatprep.subr.mxu0 %v1804
    %2506 = vmatpush1.msra.mxu0 %v1803
    %2507 = vmatprep.subr.mxu0 %v1796
    %2508 = vmatpush1.msra.mxu0 %v1795
    %2509 = vmatprep.subr.mxu0 %v1788
    %2510 = vmatpush1.msra.mxu0 %v1787
    %2511 = vmatprep.subr.mxu0 %v2036
    %2512 = vmatpush2.msra.mxu0 %v2035
    %2513 = vmatprep.subr.mxu0 %v2028
    %2514 = vmatpush2.msra.mxu0 %v2027
    %2515 = vmatprep.subr.mxu0 %v2020
    %2516 = vmatpush2.msra.mxu0 %v2019
    %2517 = vmatprep.subr.mxu0 %v2012
    %2518 = vmatpush2.msra.mxu0 %v2011
    %2519 = vmatprep.subr.mxu0 %v2004
    %2520 = vmatpush2.msra.mxu0 %v2003
    %2521 = vmatprep.subr.mxu0 %v1996
    %2522 = vmatpush2.msra.mxu0 %v1995
    %2523 = vmatprep.subr.mxu0 %v1988
    %2524 = vmatpush2.msra.mxu0 %v1987
    %2525 = vmatprep.subr.mxu0 %v1980
    %2526 = vmatpush2.msra.mxu0 %v1979
    %2527 = vmatprep.subr.mxu0 %v1972
    %2528 = vmatpush2.msra.mxu0 %v1971
    %2529 = vmatprep.subr.mxu0 %v1964
    %2530 = vmatpush2.msra.mxu0 %v1963
    %2531 = vmatprep.subr.mxu0 %v1956
    %2532 = vmatpush2.msra.mxu0 %v1955
    %2533 = vmatprep.subr.mxu0 %v1948
    %2534 = vmatpush2.msra.mxu0 %v1947
    %2535 = vmatprep.subr.mxu0 %v1940
    %2536 = vmatpush2.msra.mxu0 %v1939
    %2537 = vmatprep.subr.mxu0 %v1932
    %2538 = vmatpush2.msra.mxu0 %v1931
    %2539 = vmatprep.subr.mxu0 %v1924
    %2540 = vmatpush2.msra.mxu0 %v1923
    %2541 = vmatprep.subr.mxu0 %v1916
    %2542 = vmatpush2.msra.mxu0 %v1915
    %2543 = vmatprep.mubr.f32.mxu0 %v1781
    %2544 = vmatmul.mubr.f32.gmra.mxu0 %v1779
    %v2545 = vpop.f32.mrf.mxu0
    %v2546 = vadd.f32 %v2043, %v2545
    %v2547 = vpop.f32.mrf.mxu0
    %v2548 = vadd.f32 %v2043, %v2547
    %2549 = vdwg.mxu0
    %2550 = vmatprep.subr.mxu0 %v1910
    %2551 = vmatpush1.msra.mxu0 %v1909
    %2552 = vmatprep.subr.mxu0 %v1902
    %2553 = vmatpush1.msra.mxu0 %v1901
    %2554 = vmatprep.subr.mxu0 %v1894
    %2555 = vmatpush1.msra.mxu0 %v1893
    %2556 = vmatprep.subr.mxu0 %v1886
    %2557 = vmatpush1.msra.mxu0 %v1885
    %2558 = vmatprep.subr.mxu0 %v1878
    %2559 = vmatpush1.msra.mxu0 %v1877
    %2560 = vmatprep.subr.mxu0 %v1870
    %2561 = vmatpush1.msra.mxu0 %v1869
    %2562 = vmatprep.subr.mxu0 %v1862
    %2563 = vmatpush1.msra.mxu0 %v1861
    %2564 = vmatprep.subr.mxu0 %v1854
    %2565 = vmatpush1.msra.mxu0 %v1853
    %2566 = vmatprep.subr.mxu0 %v1846
    %2567 = vmatpush1.msra.mxu0 %v1845
    %2568 = vmatprep.subr.mxu0 %v1838
    %2569 = vmatpush1.msra.mxu0 %v1837
    %2570 = vmatprep.subr.mxu0 %v1830
    %2571 = vmatpush1.msra.mxu0 %v1829
    %2572 = vmatprep.subr.mxu0 %v1822
    %2573 = vmatpush1.msra.mxu0 %v1821
    %2574 = vmatprep.subr.mxu0 %v1814
    %2575 = vmatpush1.msra.mxu0 %v1813
    %2576 = vmatprep.subr.mxu0 %v1806
    %2577 = vmatpush1.msra.mxu0 %v1805
    %2578 = vmatprep.subr.mxu0 %v1798
    %2579 = vmatpush1.msra.mxu0 %v1797
    %2580 = vmatprep.subr.mxu0 %v1790
    %2581 = vmatpush1.msra.mxu0 %v1789
    %2582 = vmatprep.subr.mxu0 %v2038
    %2583 = vmatpush2.msra.mxu0 %v2037
    %2584 = vmatprep.subr.mxu0 %v2030
    %2585 = vmatpush2.msra.mxu0 %v2029
    %2586 = vmatprep.subr.mxu0 %v2022
    %2587 = vmatpush2.msra.mxu0 %v2021
    %2588 = vmatprep.subr.mxu0 %v2014
    %2589 = vmatpush2.msra.mxu0 %v2013
    %2590 = vmatprep.subr.mxu0 %v2006
    %2591 = vmatpush2.msra.mxu0 %v2005
    %2592 = vmatprep.subr.mxu0 %v1998
    %2593 = vmatpush2.msra.mxu0 %v1997
    %2594 = vmatprep.subr.mxu0 %v1990
    %2595 = vmatpush2.msra.mxu0 %v1989
    %2596 = vmatprep.subr.mxu0 %v1982
    %2597 = vmatpush2.msra.mxu0 %v1981
    %2598 = vmatprep.subr.mxu0 %v1974
    %2599 = vmatpush2.msra.mxu0 %v1973
    %2600 = vmatprep.subr.mxu0 %v1966
    %2601 = vmatpush2.msra.mxu0 %v1965
    %2602 = vmatprep.subr.mxu0 %v1958
    %2603 = vmatpush2.msra.mxu0 %v1957
    %2604 = vmatprep.subr.mxu0 %v1950
    %2605 = vmatpush2.msra.mxu0 %v1949
    %2606 = vmatprep.subr.mxu0 %v1942
    %2607 = vmatpush2.msra.mxu0 %v1941
    %2608 = vmatprep.subr.mxu0 %v1934
    %2609 = vmatpush2.msra.mxu0 %v1933
    %2610 = vmatprep.subr.mxu0 %v1926
    %2611 = vmatpush2.msra.mxu0 %v1925
    %2612 = vmatprep.subr.mxu0 %v1918
    %2613 = vmatpush2.msra.mxu0 %v1917
    %2614 = vmatprep.mubr.f32.mxu0 %v1781
    %2615 = vmatmul.mubr.f32.gmra.mxu0 %v1779
    %v2616 = vpop.f32.mrf.mxu0
    %v2617 = vadd.f32 %v2043, %v2616
    %v2618 = vpop.f32.mrf.mxu0
    %v2619 = vadd.f32 %v2043, %v2618
    %2620 = vdwg.mxu0
    %2621 = vst [vmem:[#allocation10 + $0x40] sm:$0xff] %v2404
    %2622 = vst [vmem:[#allocation10 + $0x48] sm:$0xff] %v2406
    %2623 = vst [vmem:[#allocation10 + $0x50] sm:$0xff] %v2475
    %2624 = vst [vmem:[#allocation10 + $0x58] sm:$0xff] %v2477
    %2625 = vst [vmem:[#allocation10 + $0x60] sm:$0xff] %v2546
    %2626 = vst [vmem:[#allocation10 + $0x68] sm:$0xff] %v2548
    %2627 = vst [vmem:[#allocation10 + $0x70] sm:$0xff] %v2617
    %2628 = vst [vmem:[#allocation10 + $0x78] sm:$0xff] %v2619
    // Predicated region
    $region82: #{tpu_custom_call.1} parent=1 // pred_check
      _
    $region83: #{tpu_custom_call.1} parent=1 // pred_check_branch
      %2630 = sbr.rel (0) target = $region85
    $region84: #{tpu_custom_call.1} parent=1 // pred_region
      %s2632 = ssub.s32 2048, 2048
      %2633 = vsyncadd [#allocation4], %s2632
      %s2635 = sshll.u32 [#allocation10], 4
      %s2636 = int_to_ptr.vmem [resolvable:$true] %s2635
      %2638 = dma.vmem_to_hbm [thread:$0]  %s2636, 2048, %s16, [#allocation4]
    $region85: #{tpu_custom_call.1} parent=1 // pred_fallthru
      _
    // Predicated region
    $region86: #{tpu_custom_call.1} parent=1 // pred_check
      _
    $region87: #{tpu_custom_call.1} parent=1 // pred_check_branch
      %2640 = sbr.rel (0) target = $region89
    $region88: #{tpu_custom_call.1} parent=1 // pred_region
      %2641 = dma.done [#allocation4], 2048
    $region89: #{tpu_custom_call.1} parent=1 // pred_fallthru
      _
    %2642 = vsyncpa [#allocation3], 1
    %2643 = vsyncpa [#allocation6], 1
    %2644 = vsyncpa [#allocation9], 1
    %2645 = vsyncpa [#allocation4], 1

</llo_original>
